<compile_context>
chip_gen: v7x
topology: tpu7x:2x2x1
jax: 0.10.0
libtpu: 0.0.40
codegen_flags: <defaults>
</compile_context>

<pallas_src>
import jax
import jax.numpy as jnp
from jax.experimental import pallas as pl
from jax.experimental.pallas import tpu as pltpu

_VMEM_LIMIT = 32 * 1024 * 1024     # safe on v5e/v6e (128 MiB) and v7x (64 MiB)
_BLOCK_BUDGET = 2 * 1024 * 1024    # target bytes per input block (Pallas double-buffers)


def _round_up(x, n):
    return ((x + n - 1) // n) * n


def _col_tile(m, per_col_bytes):
    """Lane-dim tile: fits the VMEM budget, multiple of 128, >=2 grid steps."""
    if m <= 128:
        return m                                        # single block == full dim
    tm = max(128, (_BLOCK_BUDGET // per_col_bytes) // 128 * 128)
    tm = min(tm, _round_up(pl.cdiv(m, 2), 128))          # >=2 steps: v7x megacore
    return min(tm, _round_up(m, 128))


def _row_tile(n, cap=1024):
    """Sublane-dim tile for the MLP kernel (multiple of 8, >=2 grid steps)."""
    if n <= 8:
        return n
    tn = min(cap, _round_up(pl.cdiv(n, 2), 8))
    return max(8, (tn // 8) * 8)


def _compiler_params():
    return pltpu.CompilerParams(
        dimension_semantics=("parallel",),
        vmem_limit_bytes=_VMEM_LIMIT,
    )


# ----------------------------- Pallas kernels ------------------------------

def _conv_pool_abs_kernel(p_ref, w_ref, b_ref, o_ref):
    """conv1 (4 pool-position matmuls), 2x2 max-pool, bias after max, |x|.

    p_ref: (4, 25, TM) bf16, w_ref: (10, 25) bf16, b_ref: (10, 1) f32,
    o_ref: (10, TM) bf16.  M (= N*12*12) lives in the 128-lane dim.
    """
    w = w_ref[...]
    acc = jnp.dot(w, p_ref[0], preferred_element_type=jnp.float32)
    for g in range(1, 4):
        acc = jnp.maximum(acc, jnp.dot(w, p_ref[g],
                                       preferred_element_type=jnp.float32))
    acc = acc + b_ref[...]
    o_ref[...] = jnp.abs(acc).astype(o_ref.dtype)       # relu(x)+relu(-x) == |x|


def _conv_pool_relu_bn_kernel(p_ref, w_ref, b_ref, scale_ref, shift_ref, o_ref):
    """conv2, Dropout2d(eval)=identity, 2x2 max-pool, bias, relu, BN(eval).

    p_ref: (4, 250, TM) bf16, w_ref: (20, 250) bf16,
    b/scale/shift: (20, 1) f32, o_ref: (20, TM) bf16.
    """
    w = w_ref[...]
    acc = jnp.dot(w, p_ref[0], preferred_element_type=jnp.float32)
    for g in range(1, 4):
        acc = jnp.maximum(acc, jnp.dot(w, p_ref[g],
                                       preferred_element_type=jnp.float32))
    acc = jnp.maximum(acc + b_ref[...], 0.0)
    o_ref[...] = (acc * scale_ref[...] + shift_ref[...]).astype(o_ref.dtype)


def _mlp_softmax_kernel(x_ref, w1_ref, b1_ref, w2_ref, b2_ref, o_ref):
    """fc1 + relu, Dropout(eval)=identity, fc2, softmax along dim=1.

    x_ref: (TN, 320) bf16, w1_ref: (320, 50) bf16, w2_ref: (50, 10) bf16,
    b1/b2 f32, o_ref: (TN, 10) f32.
    """
    h = jnp.dot(x_ref[...], w1_ref[...],
                preferred_element_type=jnp.float32) + b1_ref[...]
    h = jnp.maximum(h, 0.0)
    logits = jnp.dot(h.astype(w2_ref.dtype), w2_ref[...],
                     preferred_element_type=jnp.float32) + b2_ref[...]
    m = jnp.max(logits, axis=-1, keepdims=True)
    e = jnp.exp(logits - m)
    s = jnp.sum(e, axis=-1, keepdims=True)
    o_ref[...] = e * pl.reciprocal(s, approx=True)


# ------------------------------ pallas wrappers -----------------------------

def conv_pool_abs(p, w, b):
    ng, k, m = p.shape
    c_out = w.shape[0]
    tm = _col_tile(m, per_col_bytes=ng * _round_up(k, 8) * 2)
    return pl.pallas_call(
        _conv_pool_abs_kernel,
        out_shape=jax.ShapeDtypeStruct((c_out, m), jnp.bfloat16),
        grid=(pl.cdiv(m, tm),),
        in_specs=[
            pl.BlockSpec((ng, k, tm), lambda i: (0, 0, i)),
            pl.BlockSpec((c_out, k), lambda i: (0, 0)),
            pl.BlockSpec((c_out, 1), lambda i: (0, 0)),
        ],
        out_specs=pl.BlockSpec((c_out, tm), lambda i: (0, i)),
        compiler_params=_compiler_params(),
    )(p, w, b)


def conv_pool_relu_bn(p, w, b, scale, shift):
    ng, k, m = p.shape
    c_out = w.shape[0]
    tm = _col_tile(m, per_col_bytes=ng * _round_up(k, 8) * 2)
    return pl.pallas_call(
        _conv_pool_relu_bn_kernel,
        out_shape=jax.ShapeDtypeStruct((c_out, m), jnp.bfloat16),
        grid=(pl.cdiv(m, tm),),
        in_specs=[
            pl.BlockSpec((ng, k, tm), lambda i: (0, 0, i)),
            pl.BlockSpec((c_out, k), lambda i: (0, 0)),
            pl.BlockSpec((c_out, 1), lambda i: (0, 0)),
            pl.BlockSpec((c_out, 1), lambda i: (0, 0)),
            pl.BlockSpec((c_out, 1), lambda i: (0, 0)),
        ],
        out_specs=pl.BlockSpec((c_out, tm), lambda i: (0, i)),
        compiler_params=_compiler_params(),
    )(p, w, b, scale, shift)


def mlp_softmax(x, w1t, b1, w2t, b2):
    n, f = x.shape
    h = w1t.shape[1]
    c = w2t.shape[1]
    tn = _row_tile(n)
    return pl.pallas_call(
        _mlp_softmax_kernel,
        out_shape=jax.ShapeDtypeStruct((n, c), jnp.float32),
        grid=(pl.cdiv(n, tn),),
        in_specs=[
            pl.BlockSpec((tn, f), lambda i: (i, 0)),
            pl.BlockSpec((f, h), lambda i: (0, 0)),
            pl.BlockSpec((1, h), lambda i: (0, 0)),
            pl.BlockSpec((h, c), lambda i: (0, 0)),
            pl.BlockSpec((1, c), lambda i: (0, 0)),
        ],
        out_specs=pl.BlockSpec((tn, c), lambda i: (i, 0)),
        compiler_params=_compiler_params(),
    )(x, w1t, b1, w2t, b2)


# --------------------------------- JAX glue ---------------------------------

def _pooled_patches(x_nhwc, k):
    """(N, H, W, C) -> (4, C*k*k, N*PH*PW): the 4 positions of each 2x2 pool
    window, built in a single pass as a lane-major patch matrix
    (K in sublanes, N*spatial in lanes).  K order is torch's (c, ky, kx);
    column order is (b, py, px)."""
    n, h, w, c = x_nhwc.shape
    ph, pw = (h - k + 1) // 2, (w - k + 1) // 2
    m = n * ph * pw
    groups = []
    for dy in range(2):
        for dx in range(2):
            taps = [x_nhwc[:, dy + ky: dy + ky + 2 * ph: 2,
                           dx + kx: dx + kx + 2 * pw: 2, :]
                    for ky in range(k) for kx in range(k)]   # each (n, ph, pw, c)
            t = jnp.stack(taps, axis=0)                      # (k*k, n, ph, pw, c)
            t = jnp.transpose(t, (4, 0, 1, 2, 3))            # (c, k*k, n, ph, pw)
            groups.append(t.reshape(c * k * k, m))
    return jnp.stack(groups, axis=0)                         # (4, C*k*k, m)


def init_params(key):
    ks = jax.random.split(key, 8)
    conv1_w = 0.1 * jax.random.normal(ks[0], (10, 1, 5, 5), jnp.float32)
    conv1_b = 0.1 * jax.random.normal(ks[1], (10,), jnp.float32)
    conv2_w = 0.1 * jax.random.normal(ks[2], (20, 10, 5, 5), jnp.float32)
    conv2_b = 0.1 * jax.random.normal(ks[3], (20,), jnp.float32)
    fc1_w = 0.1 * jax.random.normal(ks[4], (50, 320), jnp.float32)
    fc1_b = 0.1 * jax.random.normal(ks[5], (50,), jnp.float32)
    fc2_w = 0.1 * jax.random.normal(ks[6], (10, 50), jnp.float32)
    fc2_b = 0.1 * jax.random.normal(ks[7], (10,), jnp.float32)
    # BatchNorm2d(20), eval mode with fresh stats: gamma=1, beta=0, mean=0, var=1
    gamma = jnp.ones((20,), jnp.float32)
    beta = jnp.zeros((20,), jnp.float32)
    r_mean = jnp.zeros((20,), jnp.float32)
    r_var = jnp.ones((20,), jnp.float32)
    eps = 1e-5
    bn_scale = gamma / jnp.sqrt(r_var + eps)
    bn_shift = beta - r_mean * bn_scale
    bf16 = jnp.bfloat16
    return dict(
        w1=conv1_w.reshape(10, 25).astype(bf16), b1=conv1_b.reshape(10, 1),
        w2=conv2_w.reshape(20, 250).astype(bf16), b2=conv2_b.reshape(20, 1),
        bn_scale=bn_scale.reshape(20, 1), bn_shift=bn_shift.reshape(20, 1),
        fw1t=fc1_w.T.astype(bf16), fb1=fc1_b.reshape(1, 50),
        fw2t=fc2_w.T.astype(bf16), fb2=fc2_b.reshape(1, 10),
    )


@jax.jit
def cnn_forward(x_nchw, params):
    n = x_nchw.shape[0]
    x = jnp.transpose(x_nchw, (0, 2, 3, 1)).astype(jnp.bfloat16)      # (N,28,28,1)
    # conv1: 1->10, k=5 (28 -> 24), pool -> 12, |x|
    p1 = _pooled_patches(x, 5)                                        # (4, 25, N*144)
    y1 = conv_pool_abs(p1, params['w1'], params['b1'])                # (10, N*144)
    y1_nhwc = jnp.transpose(y1.reshape(10, n, 12, 12), (1, 2, 3, 0))  # (N,12,12,10)
    # conv2: 10->20, k=5 (12 -> 8), pool -> 4, relu, BN(eval)
    p2 = _pooled_patches(y1_nhwc, 5)                                  # (4, 250, N*16)
    y2 = conv_pool_relu_bn(p2, params['w2'], params['b2'],
                           params['bn_scale'], params['bn_shift'])    # (20, N*16)
    # flatten to torch's (c, h, w) feature order -> fc1 weights need no permutation
    z = jnp.transpose(y2.reshape(20, n, 16), (1, 0, 2)).reshape(n, 320)
    return mlp_softmax(z, params['fw1t'], params['fb1'],
                       params['fw2t'], params['fb2'])                 # (N, 10) f32


if __name__ == "__main__":
    key = jax.random.PRNGKey(0)
    k_x, k_p = jax.random.split(key)
    x = jax.random.normal(k_x, (2, 1, 28, 28), jnp.float32)   # batch=2, MNIST-sized
    params = init_params(k_p)

    out = jax.block_until_ready(cnn_forward(x, params))

    assert out.shape == (2, 10), out.shape
    assert bool(jnp.all(jnp.isfinite(out)))
    row_sums = jnp.sum(out, axis=1)
    # approx reciprocal + bf16 operands: rows sum to 1 within ~1e-3
    assert bool(jnp.all(jnp.abs(row_sums - 1.0) < 3e-3)), row_sums
    print("KERNEL_OK")
</pallas_src>

<mosaic_0001>
module attributes {stable_mosaic.version = 11 : i64} {
  func.func @_conv_pool_abs_kernel(%arg0: i32, %arg1: memref<4x25x256xbf16, #tpu.memory_space<vmem>>, %arg2: memref<10x25xbf16, #tpu.memory_space<vmem>>, %arg3: memref<10x1xf32, #tpu.memory_space<vmem>>, %arg4: memref<10x256xbf16, #tpu.memory_space<vmem>>) attributes {dimension_semantics = [#tpu.dimension_semantics<parallel>], iteration_bounds = array<i64: 2>, scalar_prefetch = 0 : i64, scratch_operands = 0 : i64, tpu.core_type = #tpu.core_type<tc>, window_params = [{transform_indices = @transform_0, window_bounds = array<i64: 4, 25, 256>}, {pipeline_mode = #tpu.pipeline_mode<synchronous>, transform_indices = @transform_1, window_bounds = array<i64: 10, 25>}, {pipeline_mode = #tpu.pipeline_mode<synchronous>, transform_indices = @transform_2, window_bounds = array<i64: 10, 1>}, {transform_indices = @transform_3, window_bounds = array<i64: 10, 256>}]} {
    %c0 = arith.constant 0 : index
    %c0_0 = arith.constant 0 : index
    %0 = vector.load %arg2[%c0, %c0_0] : memref<10x25xbf16, #tpu.memory_space<vmem>>, vector<10x25xbf16>
    %c0_1 = arith.constant 0 : index
    %c0_2 = arith.constant 0 : index
    %c0_3 = arith.constant 0 : index
    %1 = vector.load %arg1[%c0_1, %c0_2, %c0_3] : memref<4x25x256xbf16, #tpu.memory_space<vmem>>, vector<1x25x256xbf16>
    %2 = vector.shape_cast %1 : vector<1x25x256xbf16> to vector<25x256xbf16>
    %cst = arith.constant dense<0.000000e+00> : vector<10x256xf32>
    %3 = tpu.matmul %0, %2, %cst {dimension_numbers = #tpu.dot_dimension_numbers<[1], [0], [0], [1], [0, 0, 1, 1], [], []>} : vector<10x25xbf16>, vector<25x256xbf16>, vector<10x256xf32> -> vector<10x256xf32>
    %c1 = arith.constant 1 : index
    %c0_4 = arith.constant 0 : index
    %c0_5 = arith.constant 0 : index
    %4 = vector.load %arg1[%c1, %c0_4, %c0_5] : memref<4x25x256xbf16, #tpu.memory_space<vmem>>, vector<1x25x256xbf16>
    %5 = vector.shape_cast %4 : vector<1x25x256xbf16> to vector<25x256xbf16>
    %cst_6 = arith.constant dense<0.000000e+00> : vector<10x256xf32>
    %6 = tpu.matmul %0, %5, %cst_6 {dimension_numbers = #tpu.dot_dimension_numbers<[1], [0], [0], [1], [0, 0, 1, 1], [], []>} : vector<10x25xbf16>, vector<25x256xbf16>, vector<10x256xf32> -> vector<10x256xf32>
    %7 = arith.maximumf %3, %6 : vector<10x256xf32>
    %c2 = arith.constant 2 : index
    %c0_7 = arith.constant 0 : index
    %c0_8 = arith.constant 0 : index
    %8 = vector.load %arg1[%c2, %c0_7, %c0_8] : memref<4x25x256xbf16, #tpu.memory_space<vmem>>, vector<1x25x256xbf16>
    %9 = vector.shape_cast %8 : vector<1x25x256xbf16> to vector<25x256xbf16>
    %cst_9 = arith.constant dense<0.000000e+00> : vector<10x256xf32>
    %10 = tpu.matmul %0, %9, %cst_9 {dimension_numbers = #tpu.dot_dimension_numbers<[1], [0], [0], [1], [0, 0, 1, 1], [], []>} : vector<10x25xbf16>, vector<25x256xbf16>, vector<10x256xf32> -> vector<10x256xf32>
    %11 = arith.maximumf %7, %10 : vector<10x256xf32>
    %c3 = arith.constant 3 : index
    %c0_10 = arith.constant 0 : index
    %c0_11 = arith.constant 0 : index
    %12 = vector.load %arg1[%c3, %c0_10, %c0_11] : memref<4x25x256xbf16, #tpu.memory_space<vmem>>, vector<1x25x256xbf16>
    %13 = vector.shape_cast %12 : vector<1x25x256xbf16> to vector<25x256xbf16>
    %cst_12 = arith.constant dense<0.000000e+00> : vector<10x256xf32>
    %14 = tpu.matmul %0, %13, %cst_12 {dimension_numbers = #tpu.dot_dimension_numbers<[1], [0], [0], [1], [0, 0, 1, 1], [], []>} : vector<10x25xbf16>, vector<25x256xbf16>, vector<10x256xf32> -> vector<10x256xf32>
    %15 = arith.maximumf %11, %14 : vector<10x256xf32>
    %c0_13 = arith.constant 0 : index
    %c0_14 = arith.constant 0 : index
    %16 = vector.load %arg3[%c0_13, %c0_14] : memref<10x1xf32, #tpu.memory_space<vmem>>, vector<10x1xf32>
    %17 = vector.broadcast %16 : vector<10x1xf32> to vector<10x256xf32>
    %18 = arith.addf %15, %17 : vector<10x256xf32>
    %19 = math.absf %18 : vector<10x256xf32>
    %20 = arith.truncf %19 : vector<10x256xf32> to vector<10x256xbf16>
    %c0_15 = arith.constant 0 : index
    %c0_16 = arith.constant 0 : index
    %21 = vector.load %arg4[%c0_15, %c0_16] : memref<10x256xbf16, #tpu.memory_space<vmem>>, vector<10x256xbf16>
    tpu.vector_store %arg4[%c0_15, %c0_16], %20 {strides = array<i32>} : memref<10x256xbf16, #tpu.memory_space<vmem>>, vector<10x256xbf16>,
    return
  }
  func.func @transform_0(%arg0: i32) -> (i32, i32, i32) {
    %c0_i32 = arith.constant 0 : i32
    %c0_i32_0 = arith.constant 0 : i32
    %c0_i32_1 = arith.constant 0 : i32
    return %c0_i32, %c0_i32_0, %arg0 : i32, i32, i32
  }
  func.func @transform_1(%arg0: i32) -> (i32, i32) {
    %c0_i32 = arith.constant 0 : i32
    %c0_i32_0 = arith.constant 0 : i32
    %c0_i32_1 = arith.constant 0 : i32
    return %c0_i32, %c0_i32_0 : i32, i32
  }
  func.func @transform_2(%arg0: i32) -> (i32, i32) {
    %c0_i32 = arith.constant 0 : i32
    %c0_i32_0 = arith.constant 0 : i32
    %c0_i32_1 = arith.constant 0 : i32
    return %c0_i32, %c0_i32_0 : i32, i32
  }
  func.func @transform_3(%arg0: i32) -> (i32, i32) {
    %c0_i32 = arith.constant 0 : i32
    %c0_i32_0 = arith.constant 0 : i32
    return %c0_i32, %arg0 : i32, i32
  }
}

module attributes {stable_mosaic.version = 11 : i64} {
  func.func @_conv_pool_relu_bn_kernel(%arg0: i32, %arg1: memref<4x250x32xbf16, #tpu.memory_space<vmem>>, %arg2: memref<20x250xbf16, #tpu.memory_space<vmem>>, %arg3: memref<20x1xf32, #tpu.memory_space<vmem>>, %arg4: memref<20x1xf32, #tpu.memory_space<vmem>>, %arg5: memref<20x1xf32, #tpu.memory_space<vmem>>, %arg6: memref<20x32xbf16, #tpu.memory_space<vmem>>) attributes {dimension_semantics = [#tpu.dimension_semantics<parallel>], iteration_bounds = array<i64: 1>, scalar_prefetch = 0 : i64, scratch_operands = 0 : i64, tpu.core_type = #tpu.core_type<tc>, window_params = [{transform_indices = @transform_0, window_bounds = array<i64: 4, 250, 32>}, {pipeline_mode = #tpu.pipeline_mode<synchronous>, transform_indices = @transform_1, window_bounds = array<i64: 20, 250>}, {pipeline_mode = #tpu.pipeline_mode<synchronous>, transform_indices = @transform_2, window_bounds = array<i64: 20, 1>}, {pipeline_mode = #tpu.pipeline_mode<synchronous>, transform_indices = @transform_3, window_bounds = array<i64: 20, 1>}, {pipeline_mode = #tpu.pipeline_mode<synchronous>, transform_indices = @transform_4, window_bounds = array<i64: 20, 1>}, {transform_indices = @transform_5, window_bounds = array<i64: 20, 32>}]} {
    %c0 = arith.constant 0 : index
    %c0_0 = arith.constant 0 : index
    %0 = vector.load %arg2[%c0, %c0_0] : memref<20x250xbf16, #tpu.memory_space<vmem>>, vector<20x250xbf16>
    %c0_1 = arith.constant 0 : index
    %c0_2 = arith.constant 0 : index
    %c0_3 = arith.constant 0 : index
    %1 = vector.load %arg1[%c0_1, %c0_2, %c0_3] : memref<4x250x32xbf16, #tpu.memory_space<vmem>>, vector<1x250x32xbf16>
    %2 = vector.shape_cast %1 : vector<1x250x32xbf16> to vector<250x32xbf16>
    %cst = arith.constant dense<0.000000e+00> : vector<20x32xf32>
    %3 = tpu.matmul %0, %2, %cst {dimension_numbers = #tpu.dot_dimension_numbers<[1], [0], [0], [1], [0, 0, 1, 1], [], []>} : vector<20x250xbf16>, vector<250x32xbf16>, vector<20x32xf32> -> vector<20x32xf32>
    %c1 = arith.constant 1 : index
    %c0_4 = arith.constant 0 : index
    %c0_5 = arith.constant 0 : index
    %4 = vector.load %arg1[%c1, %c0_4, %c0_5] : memref<4x250x32xbf16, #tpu.memory_space<vmem>>, vector<1x250x32xbf16>
    %5 = vector.shape_cast %4 : vector<1x250x32xbf16> to vector<250x32xbf16>
    %cst_6 = arith.constant dense<0.000000e+00> : vector<20x32xf32>
    %6 = tpu.matmul %0, %5, %cst_6 {dimension_numbers = #tpu.dot_dimension_numbers<[1], [0], [0], [1], [0, 0, 1, 1], [], []>} : vector<20x250xbf16>, vector<250x32xbf16>, vector<20x32xf32> -> vector<20x32xf32>
    %7 = arith.maximumf %3, %6 : vector<20x32xf32>
    %c2 = arith.constant 2 : index
    %c0_7 = arith.constant 0 : index
    %c0_8 = arith.constant 0 : index
    %8 = vector.load %arg1[%c2, %c0_7, %c0_8] : memref<4x250x32xbf16, #tpu.memory_space<vmem>>, vector<1x250x32xbf16>
    %9 = vector.shape_cast %8 : vector<1x250x32xbf16> to vector<250x32xbf16>
    %cst_9 = arith.constant dense<0.000000e+00> : vector<20x32xf32>
    %10 = tpu.matmul %0, %9, %cst_9 {dimension_numbers = #tpu.dot_dimension_numbers<[1], [0], [0], [1], [0, 0, 1, 1], [], []>} : vector<20x250xbf16>, vector<250x32xbf16>, vector<20x32xf32> -> vector<20x32xf32>
    %11 = arith.maximumf %7, %10 : vector<20x32xf32>
    %c3 = arith.constant 3 : index
    %c0_10 = arith.constant 0 : index
    %c0_11 = arith.constant 0 : index
    %12 = vector.load %arg1[%c3, %c0_10, %c0_11] : memref<4x250x32xbf16, #tpu.memory_space<vmem>>, vector<1x250x32xbf16>
    %13 = vector.shape_cast %12 : vector<1x250x32xbf16> to vector<250x32xbf16>
    %cst_12 = arith.constant dense<0.000000e+00> : vector<20x32xf32>
    %14 = tpu.matmul %0, %13, %cst_12 {dimension_numbers = #tpu.dot_dimension_numbers<[1], [0], [0], [1], [0, 0, 1, 1], [], []>} : vector<20x250xbf16>, vector<250x32xbf16>, vector<20x32xf32> -> vector<20x32xf32>
    %15 = arith.maximumf %11, %14 : vector<20x32xf32>
    %c0_13 = arith.constant 0 : index
    %c0_14 = arith.constant 0 : index
    %16 = vector.load %arg3[%c0_13, %c0_14] : memref<20x1xf32, #tpu.memory_space<vmem>>, vector<20x1xf32>
    %17 = vector.broadcast %16 : vector<20x1xf32> to vector<20x32xf32>
    %18 = arith.addf %15, %17 : vector<20x32xf32>
    %cst_15 = arith.constant 0.000000e+00 : f32
    %19 = vector.broadcast %cst_15 : f32 to vector<20x32xf32>
    %20 = arith.maximumf %18, %19 : vector<20x32xf32>
    %c0_16 = arith.constant 0 : index
    %c0_17 = arith.constant 0 : index
    %21 = vector.load %arg4[%c0_16, %c0_17] : memref<20x1xf32, #tpu.memory_space<vmem>>, vector<20x1xf32>
    %22 = vector.broadcast %21 : vector<20x1xf32> to vector<20x32xf32>
    %23 = arith.mulf %20, %22 : vector<20x32xf32>
    %c0_18 = arith.constant 0 : index
    %c0_19 = arith.constant 0 : index
    %24 = vector.load %arg5[%c0_18, %c0_19] : memref<20x1xf32, #tpu.memory_space<vmem>>, vector<20x1xf32>
    %25 = vector.broadcast %24 : vector<20x1xf32> to vector<20x32xf32>
    %26 = arith.addf %23, %25 : vector<20x32xf32>
    %27 = arith.truncf %26 : vector<20x32xf32> to vector<20x32xbf16>
    %c0_20 = arith.constant 0 : index
    %c0_21 = arith.constant 0 : index
    %28 = vector.load %arg6[%c0_20, %c0_21] : memref<20x32xbf16, #tpu.memory_space<vmem>>, vector<20x32xbf16>
    tpu.vector_store %arg6[%c0_20, %c0_21], %27 {strides = array<i32>} : memref<20x32xbf16, #tpu.memory_space<vmem>>, vector<20x32xbf16>,
    return
  }
  func.func @transform_0(%arg0: i32) -> (i32, i32, i32) {
    %c0_i32 = arith.constant 0 : i32
    %c0_i32_0 = arith.constant 0 : i32
    %c0_i32_1 = arith.constant 0 : i32
    return %c0_i32, %c0_i32_0, %arg0 : i32, i32, i32
  }
  func.func @transform_1(%arg0: i32) -> (i32, i32) {
    %c0_i32 = arith.constant 0 : i32
    %c0_i32_0 = arith.constant 0 : i32
    %c0_i32_1 = arith.constant 0 : i32
    return %c0_i32, %c0_i32_0 : i32, i32
  }
  func.func @transform_2(%arg0: i32) -> (i32, i32) {
    %c0_i32 = arith.constant 0 : i32
    %c0_i32_0 = arith.constant 0 : i32
    %c0_i32_1 = arith.constant 0 : i32
    return %c0_i32, %c0_i32_0 : i32, i32
  }
  func.func @transform_3(%arg0: i32) -> (i32, i32) {
    %c0_i32 = arith.constant 0 : i32
    %c0_i32_0 = arith.constant 0 : i32
    %c0_i32_1 = arith.constant 0 : i32
    return %c0_i32, %c0_i32_0 : i32, i32
  }
  func.func @transform_4(%arg0: i32) -> (i32, i32) {
    %c0_i32 = arith.constant 0 : i32
    %c0_i32_0 = arith.constant 0 : i32
    %c0_i32_1 = arith.constant 0 : i32
    return %c0_i32, %c0_i32_0 : i32, i32
  }
  func.func @transform_5(%arg0: i32) -> (i32, i32) {
    %c0_i32 = arith.constant 0 : i32
    %c0_i32_0 = arith.constant 0 : i32
    return %c0_i32, %arg0 : i32, i32
  }
}

module attributes {stable_mosaic.version = 11 : i64} {
  func.func @_mlp_softmax_kernel(%arg0: i32, %arg1: memref<2x320xbf16, #tpu.memory_space<vmem>>, %arg2: memref<320x50xbf16, #tpu.memory_space<vmem>>, %arg3: memref<1x50xf32, #tpu.memory_space<vmem>>, %arg4: memref<50x10xbf16, #tpu.memory_space<vmem>>, %arg5: memref<1x10xf32, #tpu.memory_space<vmem>>, %arg6: memref<2x10xf32, #tpu.memory_space<vmem>>) attributes {dimension_semantics = [#tpu.dimension_semantics<parallel>], iteration_bounds = array<i64: 1>, scalar_prefetch = 0 : i64, scratch_operands = 0 : i64, tpu.core_type = #tpu.core_type<tc>, window_params = [{transform_indices = @transform_0, window_bounds = array<i64: 2, 320>}, {pipeline_mode = #tpu.pipeline_mode<synchronous>, transform_indices = @transform_1, window_bounds = array<i64: 320, 50>}, {pipeline_mode = #tpu.pipeline_mode<synchronous>, transform_indices = @transform_2, window_bounds = array<i64: 1, 50>}, {pipeline_mode = #tpu.pipeline_mode<synchronous>, transform_indices = @transform_3, window_bounds = array<i64: 50, 10>}, {pipeline_mode = #tpu.pipeline_mode<synchronous>, transform_indices = @transform_4, window_bounds = array<i64: 1, 10>}, {transform_indices = @transform_5, window_bounds = array<i64: 2, 10>}]} {
    %c0 = arith.constant 0 : index
    %c0_0 = arith.constant 0 : index
    %0 = vector.load %arg1[%c0, %c0_0] : memref<2x320xbf16, #tpu.memory_space<vmem>>, vector<2x320xbf16>
    %c0_1 = arith.constant 0 : index
    %c0_2 = arith.constant 0 : index
    %1 = vector.load %arg2[%c0_1, %c0_2] : memref<320x50xbf16, #tpu.memory_space<vmem>>, vector<320x50xbf16>
    %cst = arith.constant dense<0.000000e+00> : vector<2x50xf32>
    %2 = tpu.matmul %0, %1, %cst {dimension_numbers = #tpu.dot_dimension_numbers<[1], [0], [0], [1], [0, 0, 1, 1], [], []>} : vector<2x320xbf16>, vector<320x50xbf16>, vector<2x50xf32> -> vector<2x50xf32>
    %c0_3 = arith.constant 0 : index
    %c0_4 = arith.constant 0 : index
    %3 = vector.load %arg3[%c0_3, %c0_4] : memref<1x50xf32, #tpu.memory_space<vmem>>, vector<1x50xf32>
    %4 = vector.broadcast %3 : vector<1x50xf32> to vector<2x50xf32>
    %5 = arith.addf %2, %4 : vector<2x50xf32>
    %cst_5 = arith.constant 0.000000e+00 : f32
    %6 = vector.broadcast %cst_5 : f32 to vector<2x50xf32>
    %7 = arith.maximumf %5, %6 : vector<2x50xf32>
    %8 = arith.truncf %7 : vector<2x50xf32> to vector<2x50xbf16>
    %c0_6 = arith.constant 0 : index
    %c0_7 = arith.constant 0 : index
    %9 = vector.load %arg4[%c0_6, %c0_7] : memref<50x10xbf16, #tpu.memory_space<vmem>>, vector<50x10xbf16>
    %cst_8 = arith.constant dense<0.000000e+00> : vector<2x10xf32>
    %10 = tpu.matmul %8, %9, %cst_8 {dimension_numbers = #tpu.dot_dimension_numbers<[1], [0], [0], [1], [0, 0, 1, 1], [], []>} : vector<2x50xbf16>, vector<50x10xbf16>, vector<2x10xf32> -> vector<2x10xf32>
    %c0_9 = arith.constant 0 : index
    %c0_10 = arith.constant 0 : index
    %11 = vector.load %arg5[%c0_9, %c0_10] : memref<1x10xf32, #tpu.memory_space<vmem>>, vector<1x10xf32>
    %12 = vector.broadcast %11 : vector<1x10xf32> to vector<2x10xf32>
    %13 = arith.addf %10, %12 : vector<2x10xf32>
    %cst_11 = arith.constant dense<0xFF800000> : vector<2xf32>
    %14 = vector.multi_reduction <maximumf>, %13, %cst_11 [1] : vector<2x10xf32> to vector<2xf32>
    %15 = vector.shape_cast %14 : vector<2xf32> to vector<2x1xf32>
    %16 = vector.broadcast %15 : vector<2x1xf32> to vector<2x10xf32>
    %17 = arith.subf %13, %16 : vector<2x10xf32>
    %18 = math.exp %17 : vector<2x10xf32>
    %cst_12 = arith.constant dense<0.000000e+00> : vector<2xf32>
    %19 = vector.multi_reduction <add>, %18, %cst_12 [1] : vector<2x10xf32> to vector<2xf32>
    %20 = vector.shape_cast %19 : vector<2xf32> to vector<2x1xf32>
    %21 = tpu.reciprocal %20 {approx = true} : vector<2x1xf32> -> vector<2x1xf32>
    %22 = vector.broadcast %21 : vector<2x1xf32> to vector<2x10xf32>
    %23 = arith.mulf %18, %22 : vector<2x10xf32>
    %c0_13 = arith.constant 0 : index
    %c0_14 = arith.constant 0 : index
    %24 = vector.load %arg6[%c0_13, %c0_14] : memref<2x10xf32, #tpu.memory_space<vmem>>, vector<2x10xf32>
    tpu.vector_store %arg6[%c0_13, %c0_14], %23 {strides = array<i32>} : memref<2x10xf32, #tpu.memory_space<vmem>>, vector<2x10xf32>,
    return
  }
  func.func @transform_0(%arg0: i32) -> (i32, i32) {
    %c0_i32 = arith.constant 0 : i32
    %c0_i32_0 = arith.constant 0 : i32
    return %arg0, %c0_i32 : i32, i32
  }
  func.func @transform_1(%arg0: i32) -> (i32, i32) {
    %c0_i32 = arith.constant 0 : i32
    %c0_i32_0 = arith.constant 0 : i32
    %c0_i32_1 = arith.constant 0 : i32
    return %c0_i32, %c0_i32_0 : i32, i32
  }
  func.func @transform_2(%arg0: i32) -> (i32, i32) {
    %c0_i32 = arith.constant 0 : i32
    %c0_i32_0 = arith.constant 0 : i32
    %c0_i32_1 = arith.constant 0 : i32
    return %c0_i32, %c0_i32_0 : i32, i32
  }
  func.func @transform_3(%arg0: i32) -> (i32, i32) {
    %c0_i32 = arith.constant 0 : i32
    %c0_i32_0 = arith.constant 0 : i32
    %c0_i32_1 = arith.constant 0 : i32
    return %c0_i32, %c0_i32_0 : i32, i32
  }
  func.func @transform_4(%arg0: i32) -> (i32, i32) {
    %c0_i32 = arith.constant 0 : i32
    %c0_i32_0 = arith.constant 0 : i32
    %c0_i32_1 = arith.constant 0 : i32
    return %c0_i32, %c0_i32_0 : i32, i32
  }
  func.func @transform_5(%arg0: i32) -> (i32, i32) {
    %c0_i32 = arith.constant 0 : i32
    %c0_i32_0 = arith.constant 0 : i32
    return %arg0, %c0_i32 : i32, i32
  }
}

</mosaic_0001>

<llo_original>
// kernel: cnn_forward.3
$region0: #{cnn_forward.3}
  #allocation0 [shape = 'u32[]', space=smem, size = 0x4, offset = 0x4, fixed_abs, tag = 'smem constant byte address 0x4 - core index']
  #allocation1 [shape = 'u32[144,128]{1,0:T(1,128)}', space=vmem, size = 0x12000, scoped, tag = 'internal scratch']
  %s0 = inlined_call_operand.vmem [shape: bf16[4,25,288], index: 0, kind: input, shape index: {}]
  %s1 = inlined_call_operand.vmem [shape: bf16[10,25], index: 1, kind: input, shape index: {}]
  %s2 = inlined_call_operand.vmem [shape: f32[10,1], index: 2, kind: input, shape index: {}]
  %s3 = inlined_call_operand.vmem [shape: bf16[10,288], index: 3, kind: output, shape index: {}]
  %s4 = sld [smem:[#allocation0]]
  $region173: #{cnn_forward.3} parent=0
    _
  %s6 = ssub.s32 1, %s4
  %s7 = scalar_select 0, %s6, %s4
  $region1: #{cnn_forward.3} parent=0
    #allocation2 [shape = 'u8[131072]{0}', space=vmem, size = 0x20000, scoped, tag = 'input window, operand 0']
    #allocation3 [shape = 'u8[16384]{0}', space=vmem, size = 0x4000, scoped, tag = 'output window, operand 0']
    loop: start=0, step=1, limit=4
    $region2: #{cnn_forward.3} parent=1 // loop_pre_header
      _
    $region3: #{cnn_forward.3} parent=1 // loop_header
      %s9 = sphi 0, %s13
      %p10 = scmp.ge.s32.totalorder %s9, 4
      %s19 = sphi 0, %s21
      %s22 = sphi 0, %s19
      %s23 = sphi 0, %s22
      %s39 = sphi 0, %s23
      %s43 = sphi 0, %s43
      %s45 = sphi 0, %s43
      %s46 = sphi 0, %s45
      %s60 = sphi 0, %s46
      %s64 = sphi 0, %s64
      %s66 = sphi 0, %s64
      %s67 = sphi 0, %s66
      %s81 = sphi 0, %s67
      %s87 = sphi 0, %s89
      %s90 = sphi 0, %s87
      %s91 = sphi 0, %s90
      %s107 = sphi 0, %s91
    $region4: #{cnn_forward.3} parent=1 // loop_header_branch
      %12 = sbr.rel (%p10) target = $region8
    $region5: #{cnn_forward.3} parent=1 // loop_body
      %s14 = ssub.s32 %s9, 1
      %s15 = ssub.s32 %s9, 2
      %s16 = sadd.s32 %s9, 1
      %s17 = ssub.s32 %s9, %s16
      %p18 = scmp.eq.s32.totalorder %s17, 0
      %s20 = sadd.s32 %s19, 1
      %s21 = scalar_select %p18, %s19, %s20
      %p24 = pneg %p18
      %p25 = scmp.eq.s32.totalorder %s9, 1
      %p26 = por %p24, %p25
      %p27 = scmp.ne.s32.totalorder %s19, %s22
      %p28 = scmp.eq.s32.totalorder %s9, 0
      %p29 = por %p27, %p28
      %p30 = scmp.ne.s32.totalorder %s19, %s22
      %p31 = scmp.eq.s32.totalorder %s14, 1
      %p32 = por %p30, %p31
      %p33 = scmp.ne.s32.totalorder %s22, %s23
      %p34 = scmp.eq.s32.totalorder %s14, 0
      %p35 = por %p33, %p34
      %p36 = scmp.ne.s32.totalorder %s22, %s23
      %p37 = scmp.eq.s32.totalorder %s15, 1
      %p38 = por %p36, %p37
      %p40 = scmp.ne.s32.totalorder %s23, %s39
      %p41 = scmp.eq.s32.totalorder %s15, 0
      %p42 = por %p40, %p41
      %s44 = sadd.s32 %s43, 1
      %p47 = scmp.eq.s32.totalorder %s9, 1
      %p48 = scmp.ne.s32.totalorder %s43, %s45
      %p49 = scmp.eq.s32.totalorder %s9, 0
      %p50 = por %p48, %p49
      %p51 = scmp.ne.s32.totalorder %s43, %s45
      %p52 = scmp.eq.s32.totalorder %s14, 1
      %p53 = por %p51, %p52
      %p54 = scmp.ne.s32.totalorder %s45, %s46
      %p55 = scmp.eq.s32.totalorder %s14, 0
      %p56 = por %p54, %p55
      %p57 = scmp.ne.s32.totalorder %s45, %s46
      %p58 = scmp.eq.s32.totalorder %s15, 1
      %p59 = por %p57, %p58
      %p61 = scmp.ne.s32.totalorder %s46, %s60
      %p62 = scmp.eq.s32.totalorder %s15, 0
      %p63 = por %p61, %p62
      %s65 = sadd.s32 %s64, 1
      %p68 = scmp.eq.s32.totalorder %s9, 1
      %p69 = scmp.ne.s32.totalorder %s64, %s66
      %p70 = scmp.eq.s32.totalorder %s9, 0
      %p71 = por %p69, %p70
      %p72 = scmp.ne.s32.totalorder %s64, %s66
      %p73 = scmp.eq.s32.totalorder %s14, 1
      %p74 = por %p72, %p73
      %p75 = scmp.ne.s32.totalorder %s66, %s67
      %p76 = scmp.eq.s32.totalorder %s14, 0
      %p77 = por %p75, %p76
      %p78 = scmp.ne.s32.totalorder %s66, %s67
      %p79 = scmp.eq.s32.totalorder %s15, 1
      %p80 = por %p78, %p79
      %p82 = scmp.ne.s32.totalorder %s67, %s81
      %p83 = scmp.eq.s32.totalorder %s15, 0
      %p84 = por %p82, %p83
      %s85 = ssub.s32 %s9, %s16
      %p86 = scmp.eq.s32.totalorder %s85, 0
      %s88 = sadd.s32 %s87, 1
      %s89 = scalar_select %p86, %s87, %s88
      %p92 = pneg %p86
      %p93 = scmp.eq.s32.totalorder %s9, 1
      %p94 = por %p92, %p93
      %p95 = scmp.ne.s32.totalorder %s87, %s90
      %p96 = scmp.eq.s32.totalorder %s9, 0
      %p97 = por %p95, %p96
      %p98 = scmp.ne.s32.totalorder %s87, %s90
      %p99 = scmp.eq.s32.totalorder %s14, 1
      %p100 = por %p98, %p99
      %p101 = scmp.ne.s32.totalorder %s90, %s91
      %p102 = scmp.eq.s32.totalorder %s14, 0
      %p103 = por %p101, %p102
      %p104 = scmp.ne.s32.totalorder %s90, %s91
      %p105 = scmp.eq.s32.totalorder %s15, 1
      %p106 = por %p104, %p105
      %p108 = scmp.ne.s32.totalorder %s91, %s107
      %p109 = scmp.eq.s32.totalorder %s15, 0
      %p110 = por %p108, %p109
      %p111 = scmp.le.s32.totalorder 1, %s9
      %p112 = scmp.lt.s32.totalorder %s9, 3
      %p113 = pnand %p111, %p112
      %p114 = pneg %p113
      // Predicated region
      $region9: #{cnn_forward.3} parent=5 // pred_check
        _
      $region10: #{cnn_forward.3} parent=5 // pred_check_branch
        %116 = sbr.rel (%p113) target = $region12
      $region11: #{cnn_forward.3} parent=5 // pred_region
        %s117 = ssub.s32 %s9, 1
        // Predicated region
        $region13: #{cnn_forward.3} parent=11 // pred_check
          %p118 = pneg %p56
        $region14: #{cnn_forward.3} parent=11 // pred_check_branch
          %120 = sbr.rel (%p118) target = $region16
        $region15: #{cnn_forward.3} parent=11 // pred_region
          _
        $region16: #{cnn_forward.3} parent=11 // pred_fallthru
          _
        // Predicated region
        $region17: #{cnn_forward.3} parent=11 // pred_check
          %p121 = pneg %p77
        $region18: #{cnn_forward.3} parent=11 // pred_check_branch
          %123 = sbr.rel (%p121) target = $region20
        $region19: #{cnn_forward.3} parent=11 // pred_region
          _
        $region20: #{cnn_forward.3} parent=11 // pred_fallthru
          _
      $region12: #{cnn_forward.3} parent=5 // pred_fallthru
        _
      %p124 = scmp.lt.s32.totalorder %s9, 2
      // Predicated region
      $region21: #{cnn_forward.3} parent=5 // pred_check
        %p125 = pneg %p124
      $region22: #{cnn_forward.3} parent=5 // pred_check_branch
        %127 = sbr.rel (%p125) target = $region24
      $region23: #{cnn_forward.3} parent=5 // pred_region
        // Predicated region
        $region25: #{cnn_forward.3} parent=23 // pred_check
          %p128 = pneg %p29
        $region26: #{cnn_forward.3} parent=23 // pred_check_branch
          %130 = sbr.rel (%p128) target = $region28
        $region27: #{cnn_forward.3} parent=23 // pred_region
          %s131 = sand.u32 %s19, 1
          %s132 = sand.u32 %s19, 1
          %s133 = smul.addr %s132, 128
          %s134 = scalar_lea.vmem [#allocation2], %s133
          %s135 = smul.u32 2, %s9
          %s136 = ssub.s32 3, %s135
          %p137 = scmp.lt.s32.totalorder %s136, 2
          %s138 = scalar_select %p137, %s136, 2
          %s139 = smul.u32 1024, %s138
          %p140 = scmp.ne.s32.totalorder 0, %s139
          %s141 = smul.addr %s135, 4
          %s142 = scalar_lea.vmem %s0, %s141
          %s143 = smul.u32 %s138, 4
          // Predicated region
          $region29: #{cnn_forward.3} parent=27 // pred_check
            %p144 = pneg %p140
          $region30: #{cnn_forward.3} parent=27 // pred_check_branch
            %146 = sbr.rel (%p144) target = $region32
          $region31: #{cnn_forward.3} parent=27 // pred_region
            %p147 = scmp.lt.u32.totalorder %s143, 8
            %p148 = pneg %p147
            // Predicated region
            $region33: #{cnn_forward.3} parent=31 // pred_check
              _
            $region34: #{cnn_forward.3} parent=31 // pred_check_branch
              %150 = sbr.rel (%p147) target = $region36
            $region35: #{cnn_forward.3} parent=31 // pred_region
              %s195 = sand.u32 %s143, 7
              %p196 = scmp.eq.s32.totalorder %s195, 0
              // Predicated region
              $region48: #{cnn_forward.3} parent=35 // pred_check
                %p197 = pneg %p196
              $region49: #{cnn_forward.3} parent=35 // pred_check_branch
                %199 = sbr.rel (%p197) target = $region51
              $region50: #{cnn_forward.3} parent=35 // pred_region
                %s200 = sshrl.u32 %s143, 3
                %s201 = sshrl.u32 %s200, 2
                // While loop
                $region52: #{cnn_forward.3} parent=50 // loop_pre_header
                  _
                $region53: #{cnn_forward.3} parent=50 // loop_header
                  %s205 = sphi 0, %s207
                  %p206 = scmp.ge.s32.totalorder %s205, %s201
                  %s210 = sphi 0, %s343
                  %s211 = sphi %s142, %s346
                  %s212 = sphi %s134, %s347
                $region54: #{cnn_forward.3} parent=50 // loop_header_branch
                  %209 = sbr.rel (%p206) target = $region58
                $region55: #{cnn_forward.3} parent=50 // loop_body
                  %v213 = vld [vmem:[%s211] sm:$0xff]
                  %214 = vst [vmem:[%s212] sm:$0xff] %v213
                  %v215 = vld [vmem:[%s211 + $0x8] sm:$0xff]
                  %216 = vst [vmem:[%s212 + $0x8] sm:$0xff] %v215
                  %v217 = vld [vmem:[%s211 + $0x10] sm:$0xff]
                  %218 = vst [vmem:[%s212 + $0x10] sm:$0xff] %v217
                  %v219 = vld [vmem:[%s211 + $0x18] sm:$0xff]
                  %220 = vst [vmem:[%s212 + $0x18] sm:$0xff] %v219
                  %v221 = vld [vmem:[%s211 + $0xc] sm:$0xff]
                  %222 = vst [vmem:[%s212 + $0x8] sm:$0xff] %v221
                  %v223 = vld [vmem:[%s211 + $0x14] sm:$0xff]
                  %224 = vst [vmem:[%s212 + $0x10] sm:$0xff] %v223
                  %v225 = vld [vmem:[%s211 + $0x1c] sm:$0xff]
                  %226 = vst [vmem:[%s212 + $0x18] sm:$0xff] %v225
                  %v227 = vld [vmem:[%s211 + $0x24] sm:$0xff]
                  %228 = vst [vmem:[%s212 + $0x20] sm:$0xff] %v227
                  %v229 = vld [vmem:[%s211 + $0x18] sm:$0xff]
                  %230 = vst [vmem:[%s212 + $0x10] sm:$0xff] %v229
                  %v231 = vld [vmem:[%s211 + $0x20] sm:$0xff]
                  %232 = vst [vmem:[%s212 + $0x18] sm:$0xff] %v231
                  %v233 = vld [vmem:[%s211 + $0x28] sm:$0xff]
                  %234 = vst [vmem:[%s212 + $0x20] sm:$0xff] %v233
                  %v235 = vld [vmem:[%s211 + $0x30] sm:$0xff]
                  %236 = vst [vmem:[%s212 + $0x28] sm:$0xff] %v235
                  %v237 = vld [vmem:[%s211 + $0x24] sm:$0xff]
                  %238 = vst [vmem:[%s212 + $0x18] sm:$0xff] %v237
                  %v239 = vld [vmem:[%s211 + $0x2c] sm:$0xff]
                  %240 = vst [vmem:[%s212 + $0x20] sm:$0xff] %v239
                  %v241 = vld [vmem:[%s211 + $0x34] sm:$0xff]
                  %242 = vst [vmem:[%s212 + $0x28] sm:$0xff] %v241
                  %v243 = vld [vmem:[%s211 + $0x3c] sm:$0xff]
                  %244 = vst [vmem:[%s212 + $0x30] sm:$0xff] %v243
                  %v245 = vld [vmem:[%s211 + $0x30] sm:$0xff]
                  %246 = vst [vmem:[%s212 + $0x20] sm:$0xff] %v245
                  %v247 = vld [vmem:[%s211 + $0x38] sm:$0xff]
                  %248 = vst [vmem:[%s212 + $0x28] sm:$0xff] %v247
                  %v249 = vld [vmem:[%s211 + $0x40] sm:$0xff]
                  %250 = vst [vmem:[%s212 + $0x30] sm:$0xff] %v249
                  %v251 = vld [vmem:[%s211 + $0x48] sm:$0xff]
                  %252 = vst [vmem:[%s212 + $0x38] sm:$0xff] %v251
                  %v253 = vld [vmem:[%s211 + $0x3c] sm:$0xff]
                  %254 = vst [vmem:[%s212 + $0x28] sm:$0xff] %v253
                  %v255 = vld [vmem:[%s211 + $0x44] sm:$0xff]
                  %256 = vst [vmem:[%s212 + $0x30] sm:$0xff] %v255
                  %v257 = vld [vmem:[%s211 + $0x4c] sm:$0xff]
                  %258 = vst [vmem:[%s212 + $0x38] sm:$0xff] %v257
                  %v259 = vld [vmem:[%s211 + $0x54] sm:$0xff]
                  %260 = vst [vmem:[%s212 + $0x40] sm:$0xff] %v259
                  %v261 = vld [vmem:[%s211 + $0x48] sm:$0xff]
                  %262 = vst [vmem:[%s212 + $0x30] sm:$0xff] %v261
                  %v263 = vld [vmem:[%s211 + $0x50] sm:$0xff]
                  %264 = vst [vmem:[%s212 + $0x38] sm:$0xff] %v263
                  %v265 = vld [vmem:[%s211 + $0x58] sm:$0xff]
                  %266 = vst [vmem:[%s212 + $0x40] sm:$0xff] %v265
                  %v267 = vld [vmem:[%s211 + $0x60] sm:$0xff]
                  %268 = vst [vmem:[%s212 + $0x48] sm:$0xff] %v267
                  %v269 = vld [vmem:[%s211 + $0x54] sm:$0xff]
                  %270 = vst [vmem:[%s212 + $0x38] sm:$0xff] %v269
                  %v271 = vld [vmem:[%s211 + $0x5c] sm:$0xff]
                  %272 = vst [vmem:[%s212 + $0x40] sm:$0xff] %v271
                  %v273 = vld [vmem:[%s211 + $0x64] sm:$0xff]
                  %274 = vst [vmem:[%s212 + $0x48] sm:$0xff] %v273
                  %v275 = vld [vmem:[%s211 + $0x6c] sm:$0xff]
                  %276 = vst [vmem:[%s212 + $0x50] sm:$0xff] %v275
                  %v277 = vld [vmem:[%s211 + $0x60] sm:$0xff]
                  %278 = vst [vmem:[%s212 + $0x40] sm:$0xff] %v277
                  %v279 = vld [vmem:[%s211 + $0x68] sm:$0xff]
                  %280 = vst [vmem:[%s212 + $0x48] sm:$0xff] %v279
                  %v281 = vld [vmem:[%s211 + $0x70] sm:$0xff]
                  %282 = vst [vmem:[%s212 + $0x50] sm:$0xff] %v281
                  %v283 = vld [vmem:[%s211 + $0x78] sm:$0xff]
                  %284 = vst [vmem:[%s212 + $0x58] sm:$0xff] %v283
                  %v285 = vld [vmem:[%s211 + $0x6c] sm:$0xff]
                  %286 = vst [vmem:[%s212 + $0x48] sm:$0xff] %v285
                  %v287 = vld [vmem:[%s211 + $0x74] sm:$0xff]
                  %288 = vst [vmem:[%s212 + $0x50] sm:$0xff] %v287
                  %v289 = vld [vmem:[%s211 + $0x7c] sm:$0xff]
                  %290 = vst [vmem:[%s212 + $0x58] sm:$0xff] %v289
                  %v291 = vld [vmem:[%s211 + $0x84] sm:$0xff]
                  %292 = vst [vmem:[%s212 + $0x60] sm:$0xff] %v291
                  %v293 = vld [vmem:[%s211 + $0x78] sm:$0xff]
                  %294 = vst [vmem:[%s212 + $0x50] sm:$0xff] %v293
                  %v295 = vld [vmem:[%s211 + $0x80] sm:$0xff]
                  %296 = vst [vmem:[%s212 + $0x58] sm:$0xff] %v295
                  %v297 = vld [vmem:[%s211 + $0x88] sm:$0xff]
                  %298 = vst [vmem:[%s212 + $0x60] sm:$0xff] %v297
                  %v299 = vld [vmem:[%s211 + $0x90] sm:$0xff]
                  %300 = vst [vmem:[%s212 + $0x68] sm:$0xff] %v299
                  %v301 = vld [vmem:[%s211 + $0x84] sm:$0xff]
                  %302 = vst [vmem:[%s212 + $0x58] sm:$0xff] %v301
                  %v303 = vld [vmem:[%s211 + $0x8c] sm:$0xff]
                  %304 = vst [vmem:[%s212 + $0x60] sm:$0xff] %v303
                  %v305 = vld [vmem:[%s211 + $0x94] sm:$0xff]
                  %306 = vst [vmem:[%s212 + $0x68] sm:$0xff] %v305
                  %v307 = vld [vmem:[%s211 + $0x9c] sm:$0xff]
                  %308 = vst [vmem:[%s212 + $0x70] sm:$0xff] %v307
                  %v309 = vld [vmem:[%s211 + $0x90] sm:$0xff]
                  %310 = vst [vmem:[%s212 + $0x60] sm:$0xff] %v309
                  %v311 = vld [vmem:[%s211 + $0x98] sm:$0xff]
                  %312 = vst [vmem:[%s212 + $0x68] sm:$0xff] %v311
                  %v313 = vld [vmem:[%s211 + $0xa0] sm:$0xff]
                  %314 = vst [vmem:[%s212 + $0x70] sm:$0xff] %v313
                  %v315 = vld [vmem:[%s211 + $0xa8] sm:$0xff]
                  %316 = vst [vmem:[%s212 + $0x78] sm:$0xff] %v315
                  %v317 = vld [vmem:[%s211 + $0x9c] sm:$0xff]
                  %318 = vst [vmem:[%s212 + $0x68] sm:$0xff] %v317
                  %v319 = vld [vmem:[%s211 + $0xa4] sm:$0xff]
                  %320 = vst [vmem:[%s212 + $0x70] sm:$0xff] %v319
                  %v321 = vld [vmem:[%s211 + $0xac] sm:$0xff]
                  %322 = vst [vmem:[%s212 + $0x78] sm:$0xff] %v321
                  %v323 = vld [vmem:[%s211 + $0xb4] sm:$0xff]
                  %324 = vst [vmem:[%s212 + $0x80] sm:$0xff] %v323
                  %v325 = vld [vmem:[%s211 + $0xa8] sm:$0xff]
                  %326 = vst [vmem:[%s212 + $0x70] sm:$0xff] %v325
                  %v327 = vld [vmem:[%s211 + $0xb0] sm:$0xff]
                  %328 = vst [vmem:[%s212 + $0x78] sm:$0xff] %v327
                  %v329 = vld [vmem:[%s211 + $0xb8] sm:$0xff]
                  %330 = vst [vmem:[%s212 + $0x80] sm:$0xff] %v329
                  %v331 = vld [vmem:[%s211 + $0xc0] sm:$0xff]
                  %332 = vst [vmem:[%s212 + $0x88] sm:$0xff] %v331
                  %v333 = vld [vmem:[%s211 + $0xb4] sm:$0xff]
                  %334 = vst [vmem:[%s212 + $0x78] sm:$0xff] %v333
                  %v335 = vld [vmem:[%s211 + $0xbc] sm:$0xff]
                  %336 = vst [vmem:[%s212 + $0x80] sm:$0xff] %v335
                  %v337 = vld [vmem:[%s211 + $0xc4] sm:$0xff]
                  %338 = vst [vmem:[%s212 + $0x88] sm:$0xff] %v337
                  %v339 = vld [vmem:[%s211 + $0xcc] sm:$0xff]
                  %340 = vst [vmem:[%s212 + $0x90] sm:$0xff] %v339
                  %s341 = sadd.s32 1, %s210
                  %p342 = scmp.ge.s32.totalorder %s341, %s201
                  %s343 = scalar_select %p342, 0, %s341
                  %s344 = smul.u32 %s343, 32
                  %s345 = smul.u32 %s343, 32
                  %s346 = scalar_lea.vmem %s142, %s344
                  %s347 = scalar_lea.vmem %s134, %s345 [#allocation2]
                $region56: #{cnn_forward.3} parent=50 // loop_footer
                  %s207 = sadd.s32 %s205, 1
                $region57: #{cnn_forward.3} parent=50 // loop_footer_branch
                  %204 = sbr.rel target = $region53
                $region58: #{cnn_forward.3} parent=50 // loop_exit
                  _
                %s348 = sshrl.u32 %s200, 2
                %s349 = sand.u32 %s200, 3
                %s350 = smul.u32 %s348, 4
                %s351 = smul.u32 128, %s350
                %s352 = sshra.s32 %s351, 4
                %s353 = scalar_lea.vmem %s142, %s352
                %s354 = smul.u32 128, %s350
                %s355 = sshra.s32 %s354, 4
                %s356 = scalar_lea.vmem %s134, %s355 [#allocation2]
                // While loop
                $region59: #{cnn_forward.3} parent=50 // loop_pre_header
                  _
                $region60: #{cnn_forward.3} parent=50 // loop_header
                  %s360 = sphi 0, %s362
                  %p361 = scmp.ge.s32.totalorder %s360, %s349
                  %s365 = sphi 0, %s402
                  %s366 = sphi %s353, %s405
                  %s367 = sphi %s356, %s406
                $region61: #{cnn_forward.3} parent=50 // loop_header_branch
                  %364 = sbr.rel (%p361) target = $region65
                $region62: #{cnn_forward.3} parent=50 // loop_body
                  %v368 = vld [vmem:[%s366] sm:$0xff]
                  %369 = vst [vmem:[%s367] sm:$0xff] %v368
                  %v370 = vld [vmem:[%s366 + $0xc] sm:$0xff]
                  %371 = vst [vmem:[%s367 + $0x8] sm:$0xff] %v370
                  %v372 = vld [vmem:[%s366 + $0x18] sm:$0xff]
                  %373 = vst [vmem:[%s367 + $0x10] sm:$0xff] %v372
                  %v374 = vld [vmem:[%s366 + $0x24] sm:$0xff]
                  %375 = vst [vmem:[%s367 + $0x18] sm:$0xff] %v374
                  %v376 = vld [vmem:[%s366 + $0x30] sm:$0xff]
                  %377 = vst [vmem:[%s367 + $0x20] sm:$0xff] %v376
                  %v378 = vld [vmem:[%s366 + $0x3c] sm:$0xff]
                  %379 = vst [vmem:[%s367 + $0x28] sm:$0xff] %v378
                  %v380 = vld [vmem:[%s366 + $0x48] sm:$0xff]
                  %381 = vst [vmem:[%s367 + $0x30] sm:$0xff] %v380
                  %v382 = vld [vmem:[%s366 + $0x54] sm:$0xff]
                  %383 = vst [vmem:[%s367 + $0x38] sm:$0xff] %v382
                  %v384 = vld [vmem:[%s366 + $0x60] sm:$0xff]
                  %385 = vst [vmem:[%s367 + $0x40] sm:$0xff] %v384
                  %v386 = vld [vmem:[%s366 + $0x6c] sm:$0xff]
                  %387 = vst [vmem:[%s367 + $0x48] sm:$0xff] %v386
                  %v388 = vld [vmem:[%s366 + $0x78] sm:$0xff]
                  %389 = vst [vmem:[%s367 + $0x50] sm:$0xff] %v388
                  %v390 = vld [vmem:[%s366 + $0x84] sm:$0xff]
                  %391 = vst [vmem:[%s367 + $0x58] sm:$0xff] %v390
                  %v392 = vld [vmem:[%s366 + $0x90] sm:$0xff]
                  %393 = vst [vmem:[%s367 + $0x60] sm:$0xff] %v392
                  %v394 = vld [vmem:[%s366 + $0x9c] sm:$0xff]
                  %395 = vst [vmem:[%s367 + $0x68] sm:$0xff] %v394
                  %v396 = vld [vmem:[%s366 + $0xa8] sm:$0xff]
                  %397 = vst [vmem:[%s367 + $0x70] sm:$0xff] %v396
                  %v398 = vld [vmem:[%s366 + $0xb4] sm:$0xff]
                  %399 = vst [vmem:[%s367 + $0x78] sm:$0xff] %v398
                  %s400 = sadd.s32 1, %s365
                  %p401 = scmp.ge.s32.totalorder %s400, %s349
                  %s402 = scalar_select %p401, 0, %s400
                  %s403 = smul.u32 %s402, 8
                  %s404 = smul.u32 %s402, 8
                  %s405 = scalar_lea.vmem %s353, %s403
                  %s406 = scalar_lea.vmem %s356, %s404 [#allocation2]
                $region63: #{cnn_forward.3} parent=50 // loop_footer
                  %s362 = sadd.s32 %s360, 1
                $region64: #{cnn_forward.3} parent=50 // loop_footer_branch
                  %359 = sbr.rel target = $region60
                $region65: #{cnn_forward.3} parent=50 // loop_exit
                  _
              $region51: #{cnn_forward.3} parent=35 // pred_fallthru
                _
              %p407 = pneg %p196
              // Predicated region
              $region66: #{cnn_forward.3} parent=35 // pred_check
                _
              $region67: #{cnn_forward.3} parent=35 // pred_check_branch
                %409 = sbr.rel (%p196) target = $region69
              $region68: #{cnn_forward.3} parent=35 // pred_region
                %s410 = sand.u32 %s143, 7
                %s411 = ssub.s32 %s143, %s410
                %s412 = scalar_lea.vmem %s142, %s411
                %s413 = ssub.s32 %s143, %s410
                %s414 = scalar_lea.vmem %s134, %s413 [#allocation2]
                %s415 = sshrl.u32 %s143, 3
                %s416 = sshrl.u32 %s415, 2
                // While loop
                $region70: #{cnn_forward.3} parent=68 // loop_pre_header
                  _
                $region71: #{cnn_forward.3} parent=68 // loop_header
                  %s420 = sphi 0, %s422
                  %p421 = scmp.ge.s32.totalorder %s420, %s416
                  %s425 = sphi 0, %s558
                  %s426 = sphi %s142, %s561
                  %s427 = sphi %s134, %s562
                $region72: #{cnn_forward.3} parent=68 // loop_header_branch
                  %424 = sbr.rel (%p421) target = $region76
                $region73: #{cnn_forward.3} parent=68 // loop_body
                  %v428 = vld [vmem:[%s426] sm:$0xff]
                  %429 = vst [vmem:[%s427] sm:$0xff] %v428
                  %v430 = vld [vmem:[%s426 + $0x8] sm:$0xff]
                  %431 = vst [vmem:[%s427 + $0x8] sm:$0xff] %v430
                  %v432 = vld [vmem:[%s426 + $0x10] sm:$0xff]
                  %433 = vst [vmem:[%s427 + $0x10] sm:$0xff] %v432
                  %v434 = vld [vmem:[%s426 + $0x18] sm:$0xff]
                  %435 = vst [vmem:[%s427 + $0x18] sm:$0xff] %v434
                  %v436 = vld [vmem:[%s426 + $0xc] sm:$0xff]
                  %437 = vst [vmem:[%s427 + $0x8] sm:$0xff] %v436
                  %v438 = vld [vmem:[%s426 + $0x14] sm:$0xff]
                  %439 = vst [vmem:[%s427 + $0x10] sm:$0xff] %v438
                  %v440 = vld [vmem:[%s426 + $0x1c] sm:$0xff]
                  %441 = vst [vmem:[%s427 + $0x18] sm:$0xff] %v440
                  %v442 = vld [vmem:[%s426 + $0x24] sm:$0xff]
                  %443 = vst [vmem:[%s427 + $0x20] sm:$0xff] %v442
                  %v444 = vld [vmem:[%s426 + $0x18] sm:$0xff]
                  %445 = vst [vmem:[%s427 + $0x10] sm:$0xff] %v444
                  %v446 = vld [vmem:[%s426 + $0x20] sm:$0xff]
                  %447 = vst [vmem:[%s427 + $0x18] sm:$0xff] %v446
                  %v448 = vld [vmem:[%s426 + $0x28] sm:$0xff]
                  %449 = vst [vmem:[%s427 + $0x20] sm:$0xff] %v448
                  %v450 = vld [vmem:[%s426 + $0x30] sm:$0xff]
                  %451 = vst [vmem:[%s427 + $0x28] sm:$0xff] %v450
                  %v452 = vld [vmem:[%s426 + $0x24] sm:$0xff]
                  %453 = vst [vmem:[%s427 + $0x18] sm:$0xff] %v452
                  %v454 = vld [vmem:[%s426 + $0x2c] sm:$0xff]
                  %455 = vst [vmem:[%s427 + $0x20] sm:$0xff] %v454
                  %v456 = vld [vmem:[%s426 + $0x34] sm:$0xff]
                  %457 = vst [vmem:[%s427 + $0x28] sm:$0xff] %v456
                  %v458 = vld [vmem:[%s426 + $0x3c] sm:$0xff]
                  %459 = vst [vmem:[%s427 + $0x30] sm:$0xff] %v458
                  %v460 = vld [vmem:[%s426 + $0x30] sm:$0xff]
                  %461 = vst [vmem:[%s427 + $0x20] sm:$0xff] %v460
                  %v462 = vld [vmem:[%s426 + $0x38] sm:$0xff]
                  %463 = vst [vmem:[%s427 + $0x28] sm:$0xff] %v462
                  %v464 = vld [vmem:[%s426 + $0x40] sm:$0xff]
                  %465 = vst [vmem:[%s427 + $0x30] sm:$0xff] %v464
                  %v466 = vld [vmem:[%s426 + $0x48] sm:$0xff]
                  %467 = vst [vmem:[%s427 + $0x38] sm:$0xff] %v466
                  %v468 = vld [vmem:[%s426 + $0x3c] sm:$0xff]
                  %469 = vst [vmem:[%s427 + $0x28] sm:$0xff] %v468
                  %v470 = vld [vmem:[%s426 + $0x44] sm:$0xff]
                  %471 = vst [vmem:[%s427 + $0x30] sm:$0xff] %v470
                  %v472 = vld [vmem:[%s426 + $0x4c] sm:$0xff]
                  %473 = vst [vmem:[%s427 + $0x38] sm:$0xff] %v472
                  %v474 = vld [vmem:[%s426 + $0x54] sm:$0xff]
                  %475 = vst [vmem:[%s427 + $0x40] sm:$0xff] %v474
                  %v476 = vld [vmem:[%s426 + $0x48] sm:$0xff]
                  %477 = vst [vmem:[%s427 + $0x30] sm:$0xff] %v476
                  %v478 = vld [vmem:[%s426 + $0x50] sm:$0xff]
                  %479 = vst [vmem:[%s427 + $0x38] sm:$0xff] %v478
                  %v480 = vld [vmem:[%s426 + $0x58] sm:$0xff]
                  %481 = vst [vmem:[%s427 + $0x40] sm:$0xff] %v480
                  %v482 = vld [vmem:[%s426 + $0x60] sm:$0xff]
                  %483 = vst [vmem:[%s427 + $0x48] sm:$0xff] %v482
                  %v484 = vld [vmem:[%s426 + $0x54] sm:$0xff]
                  %485 = vst [vmem:[%s427 + $0x38] sm:$0xff] %v484
                  %v486 = vld [vmem:[%s426 + $0x5c] sm:$0xff]
                  %487 = vst [vmem:[%s427 + $0x40] sm:$0xff] %v486
                  %v488 = vld [vmem:[%s426 + $0x64] sm:$0xff]
                  %489 = vst [vmem:[%s427 + $0x48] sm:$0xff] %v488
                  %v490 = vld [vmem:[%s426 + $0x6c] sm:$0xff]
                  %491 = vst [vmem:[%s427 + $0x50] sm:$0xff] %v490
                  %v492 = vld [vmem:[%s426 + $0x60] sm:$0xff]
                  %493 = vst [vmem:[%s427 + $0x40] sm:$0xff] %v492
                  %v494 = vld [vmem:[%s426 + $0x68] sm:$0xff]
                  %495 = vst [vmem:[%s427 + $0x48] sm:$0xff] %v494
                  %v496 = vld [vmem:[%s426 + $0x70] sm:$0xff]
                  %497 = vst [vmem:[%s427 + $0x50] sm:$0xff] %v496
                  %v498 = vld [vmem:[%s426 + $0x78] sm:$0xff]
                  %499 = vst [vmem:[%s427 + $0x58] sm:$0xff] %v498
                  %v500 = vld [vmem:[%s426 + $0x6c] sm:$0xff]
                  %501 = vst [vmem:[%s427 + $0x48] sm:$0xff] %v500
                  %v502 = vld [vmem:[%s426 + $0x74] sm:$0xff]
                  %503 = vst [vmem:[%s427 + $0x50] sm:$0xff] %v502
                  %v504 = vld [vmem:[%s426 + $0x7c] sm:$0xff]
                  %505 = vst [vmem:[%s427 + $0x58] sm:$0xff] %v504
                  %v506 = vld [vmem:[%s426 + $0x84] sm:$0xff]
                  %507 = vst [vmem:[%s427 + $0x60] sm:$0xff] %v506
                  %v508 = vld [vmem:[%s426 + $0x78] sm:$0xff]
                  %509 = vst [vmem:[%s427 + $0x50] sm:$0xff] %v508
                  %v510 = vld [vmem:[%s426 + $0x80] sm:$0xff]
                  %511 = vst [vmem:[%s427 + $0x58] sm:$0xff] %v510
                  %v512 = vld [vmem:[%s426 + $0x88] sm:$0xff]
                  %513 = vst [vmem:[%s427 + $0x60] sm:$0xff] %v512
                  %v514 = vld [vmem:[%s426 + $0x90] sm:$0xff]
                  %515 = vst [vmem:[%s427 + $0x68] sm:$0xff] %v514
                  %v516 = vld [vmem:[%s426 + $0x84] sm:$0xff]
                  %517 = vst [vmem:[%s427 + $0x58] sm:$0xff] %v516
                  %v518 = vld [vmem:[%s426 + $0x8c] sm:$0xff]
                  %519 = vst [vmem:[%s427 + $0x60] sm:$0xff] %v518
                  %v520 = vld [vmem:[%s426 + $0x94] sm:$0xff]
                  %521 = vst [vmem:[%s427 + $0x68] sm:$0xff] %v520
                  %v522 = vld [vmem:[%s426 + $0x9c] sm:$0xff]
                  %523 = vst [vmem:[%s427 + $0x70] sm:$0xff] %v522
                  %v524 = vld [vmem:[%s426 + $0x90] sm:$0xff]
                  %525 = vst [vmem:[%s427 + $0x60] sm:$0xff] %v524
                  %v526 = vld [vmem:[%s426 + $0x98] sm:$0xff]
                  %527 = vst [vmem:[%s427 + $0x68] sm:$0xff] %v526
                  %v528 = vld [vmem:[%s426 + $0xa0] sm:$0xff]
                  %529 = vst [vmem:[%s427 + $0x70] sm:$0xff] %v528
                  %v530 = vld [vmem:[%s426 + $0xa8] sm:$0xff]
                  %531 = vst [vmem:[%s427 + $0x78] sm:$0xff] %v530
                  %v532 = vld [vmem:[%s426 + $0x9c] sm:$0xff]
                  %533 = vst [vmem:[%s427 + $0x68] sm:$0xff] %v532
                  %v534 = vld [vmem:[%s426 + $0xa4] sm:$0xff]
                  %535 = vst [vmem:[%s427 + $0x70] sm:$0xff] %v534
                  %v536 = vld [vmem:[%s426 + $0xac] sm:$0xff]
                  %537 = vst [vmem:[%s427 + $0x78] sm:$0xff] %v536
                  %v538 = vld [vmem:[%s426 + $0xb4] sm:$0xff]
                  %539 = vst [vmem:[%s427 + $0x80] sm:$0xff] %v538
                  %v540 = vld [vmem:[%s426 + $0xa8] sm:$0xff]
                  %541 = vst [vmem:[%s427 + $0x70] sm:$0xff] %v540
                  %v542 = vld [vmem:[%s426 + $0xb0] sm:$0xff]
                  %543 = vst [vmem:[%s427 + $0x78] sm:$0xff] %v542
                  %v544 = vld [vmem:[%s426 + $0xb8] sm:$0xff]
                  %545 = vst [vmem:[%s427 + $0x80] sm:$0xff] %v544
                  %v546 = vld [vmem:[%s426 + $0xc0] sm:$0xff]
                  %547 = vst [vmem:[%s427 + $0x88] sm:$0xff] %v546
                  %v548 = vld [vmem:[%s426 + $0xb4] sm:$0xff]
                  %549 = vst [vmem:[%s427 + $0x78] sm:$0xff] %v548
                  %v550 = vld [vmem:[%s426 + $0xbc] sm:$0xff]
                  %551 = vst [vmem:[%s427 + $0x80] sm:$0xff] %v550
                  %v552 = vld [vmem:[%s426 + $0xc4] sm:$0xff]
                  %553 = vst [vmem:[%s427 + $0x88] sm:$0xff] %v552
                  %v554 = vld [vmem:[%s426 + $0xcc] sm:$0xff]
                  %555 = vst [vmem:[%s427 + $0x90] sm:$0xff] %v554
                  %s556 = sadd.s32 1, %s425
                  %p557 = scmp.ge.s32.totalorder %s556, %s416
                  %s558 = scalar_select %p557, 0, %s556
                  %s559 = smul.u32 %s558, 32
                  %s560 = smul.u32 %s558, 32
                  %s561 = scalar_lea.vmem %s142, %s559
                  %s562 = scalar_lea.vmem %s134, %s560 [#allocation2]
                $region74: #{cnn_forward.3} parent=68 // loop_footer
                  %s422 = sadd.s32 %s420, 1
                $region75: #{cnn_forward.3} parent=68 // loop_footer_branch
                  %419 = sbr.rel target = $region71
                $region76: #{cnn_forward.3} parent=68 // loop_exit
                  _
                %s563 = sshrl.u32 %s415, 2
                %s564 = sand.u32 %s415, 3
                %s565 = smul.u32 %s563, 4
                %s566 = smul.u32 128, %s565
                %s567 = sshra.s32 %s566, 4
                %s568 = scalar_lea.vmem %s142, %s567
                %s569 = smul.u32 128, %s565
                %s570 = sshra.s32 %s569, 4
                %s571 = scalar_lea.vmem %s134, %s570 [#allocation2]
                // While loop
                $region77: #{cnn_forward.3} parent=68 // loop_pre_header
                  _
                $region78: #{cnn_forward.3} parent=68 // loop_header
                  %s575 = sphi 0, %s577
                  %p576 = scmp.ge.s32.totalorder %s575, %s564
                  %s580 = sphi 0, %s617
                  %s581 = sphi %s568, %s620
                  %s582 = sphi %s571, %s621
                $region79: #{cnn_forward.3} parent=68 // loop_header_branch
                  %579 = sbr.rel (%p576) target = $region83
                $region80: #{cnn_forward.3} parent=68 // loop_body
                  %v583 = vld [vmem:[%s581] sm:$0xff]
                  %584 = vst [vmem:[%s582] sm:$0xff] %v583
                  %v585 = vld [vmem:[%s581 + $0xc] sm:$0xff]
                  %586 = vst [vmem:[%s582 + $0x8] sm:$0xff] %v585
                  %v587 = vld [vmem:[%s581 + $0x18] sm:$0xff]
                  %588 = vst [vmem:[%s582 + $0x10] sm:$0xff] %v587
                  %v589 = vld [vmem:[%s581 + $0x24] sm:$0xff]
                  %590 = vst [vmem:[%s582 + $0x18] sm:$0xff] %v589
                  %v591 = vld [vmem:[%s581 + $0x30] sm:$0xff]
                  %592 = vst [vmem:[%s582 + $0x20] sm:$0xff] %v591
                  %v593 = vld [vmem:[%s581 + $0x3c] sm:$0xff]
                  %594 = vst [vmem:[%s582 + $0x28] sm:$0xff] %v593
                  %v595 = vld [vmem:[%s581 + $0x48] sm:$0xff]
                  %596 = vst [vmem:[%s582 + $0x30] sm:$0xff] %v595
                  %v597 = vld [vmem:[%s581 + $0x54] sm:$0xff]
                  %598 = vst [vmem:[%s582 + $0x38] sm:$0xff] %v597
                  %v599 = vld [vmem:[%s581 + $0x60] sm:$0xff]
                  %600 = vst [vmem:[%s582 + $0x40] sm:$0xff] %v599
                  %v601 = vld [vmem:[%s581 + $0x6c] sm:$0xff]
                  %602 = vst [vmem:[%s582 + $0x48] sm:$0xff] %v601
                  %v603 = vld [vmem:[%s581 + $0x78] sm:$0xff]
                  %604 = vst [vmem:[%s582 + $0x50] sm:$0xff] %v603
                  %v605 = vld [vmem:[%s581 + $0x84] sm:$0xff]
                  %606 = vst [vmem:[%s582 + $0x58] sm:$0xff] %v605
                  %v607 = vld [vmem:[%s581 + $0x90] sm:$0xff]
                  %608 = vst [vmem:[%s582 + $0x60] sm:$0xff] %v607
                  %v609 = vld [vmem:[%s581 + $0x9c] sm:$0xff]
                  %610 = vst [vmem:[%s582 + $0x68] sm:$0xff] %v609
                  %v611 = vld [vmem:[%s581 + $0xa8] sm:$0xff]
                  %612 = vst [vmem:[%s582 + $0x70] sm:$0xff] %v611
                  %v613 = vld [vmem:[%s581 + $0xb4] sm:$0xff]
                  %614 = vst [vmem:[%s582 + $0x78] sm:$0xff] %v613
                  %s615 = sadd.s32 1, %s580
                  %p616 = scmp.ge.s32.totalorder %s615, %s564
                  %s617 = scalar_select %p616, 0, %s615
                  %s618 = smul.u32 %s617, 8
                  %s619 = smul.u32 %s617, 8
                  %s620 = scalar_lea.vmem %s568, %s618
                  %s621 = scalar_lea.vmem %s571, %s619 [#allocation2]
                $region81: #{cnn_forward.3} parent=68 // loop_footer
                  %s577 = sadd.s32 %s575, 1
                $region82: #{cnn_forward.3} parent=68 // loop_footer_branch
                  %574 = sbr.rel target = $region78
                $region83: #{cnn_forward.3} parent=68 // loop_exit
                  _
                %s622 = sshllo.u32 0, %s410
                loop: start=0, step=1, limit=1
                $region84: #{cnn_forward.3} parent=68 // loop_pre_header
                  _
                $region85: #{cnn_forward.3} parent=68 // loop_header
                  %s624 = sphi 0, %s628
                  %p625 = scmp.ge.s32.totalorder %s624, 1
                  %s629 = sphi %s412, %s412
                  %s630 = sphi %s414, %s414
                $region86: #{cnn_forward.3} parent=68 // loop_header_branch
                  %627 = sbr.rel (%p625) target = $region90
                $region87: #{cnn_forward.3} parent=68 // loop_body
                  %v631 = vld [vmem:[%s629] sm:%s622]
                  %632 = vst [vmem:[%s630] sm:%s622] %v631
                  %v633 = vld [vmem:[%s629 + $0xc] sm:%s622]
                  %634 = vst [vmem:[%s630 + $0x8] sm:%s622] %v633
                  %v635 = vld [vmem:[%s629 + $0x18] sm:%s622]
                  %636 = vst [vmem:[%s630 + $0x10] sm:%s622] %v635
                  %v637 = vld [vmem:[%s629 + $0x24] sm:%s622]
                  %638 = vst [vmem:[%s630 + $0x18] sm:%s622] %v637
                  %v639 = vld [vmem:[%s629 + $0x30] sm:%s622]
                  %640 = vst [vmem:[%s630 + $0x20] sm:%s622] %v639
                  %v641 = vld [vmem:[%s629 + $0x3c] sm:%s622]
                  %642 = vst [vmem:[%s630 + $0x28] sm:%s622] %v641
                  %v643 = vld [vmem:[%s629 + $0x48] sm:%s622]
                  %644 = vst [vmem:[%s630 + $0x30] sm:%s622] %v643
                  %v645 = vld [vmem:[%s629 + $0x54] sm:%s622]
                  %646 = vst [vmem:[%s630 + $0x38] sm:%s622] %v645
                  %v647 = vld [vmem:[%s629 + $0x60] sm:%s622]
                  %648 = vst [vmem:[%s630 + $0x40] sm:%s622] %v647
                  %v649 = vld [vmem:[%s629 + $0x6c] sm:%s622]
                  %650 = vst [vmem:[%s630 + $0x48] sm:%s622] %v649
                  %v651 = vld [vmem:[%s629 + $0x78] sm:%s622]
                  %652 = vst [vmem:[%s630 + $0x50] sm:%s622] %v651
                  %v653 = vld [vmem:[%s629 + $0x84] sm:%s622]
                  %654 = vst [vmem:[%s630 + $0x58] sm:%s622] %v653
                  %v655 = vld [vmem:[%s629 + $0x90] sm:%s622]
                  %656 = vst [vmem:[%s630 + $0x60] sm:%s622] %v655
                  %v657 = vld [vmem:[%s629 + $0x9c] sm:%s622]
                  %658 = vst [vmem:[%s630 + $0x68] sm:%s622] %v657
                  %v659 = vld [vmem:[%s629 + $0xa8] sm:%s622]
                  %660 = vst [vmem:[%s630 + $0x70] sm:%s622] %v659
                  %v661 = vld [vmem:[%s629 + $0xb4] sm:%s622]
                  %662 = vst [vmem:[%s630 + $0x78] sm:%s622] %v661
                $region88: #{cnn_forward.3} parent=68 // loop_footer
                  %s628 = sadd.s32 1, %s624
                $region89: #{cnn_forward.3} parent=68 // loop_footer_branch
                  %623 = sbr.rel target = $region85
                $region90: #{cnn_forward.3} parent=68 // loop_exit
                  _
              $region69: #{cnn_forward.3} parent=35 // pred_fallthru
                _
            $region36: #{cnn_forward.3} parent=31 // pred_fallthru
              _
            // Predicated region
            $region37: #{cnn_forward.3} parent=31 // pred_check
              %p151 = pneg %p147
            $region38: #{cnn_forward.3} parent=31 // pred_check_branch
              %153 = sbr.rel (%p151) target = $region40
            $region39: #{cnn_forward.3} parent=31 // pred_region
              %s154 = sshllo.u32 0, %s143
              loop: start=0, step=1, limit=1
              $region41: #{cnn_forward.3} parent=39 // loop_pre_header
                _
              $region42: #{cnn_forward.3} parent=39 // loop_header
                %s156 = sphi 0, %s160
                %p157 = scmp.ge.s32.totalorder %s156, 1
                %s161 = sphi %s142, %s142
                %s162 = sphi %s134, %s134
              $region43: #{cnn_forward.3} parent=39 // loop_header_branch
                %159 = sbr.rel (%p157) target = $region47
              $region44: #{cnn_forward.3} parent=39 // loop_body
                %v163 = vld [vmem:[%s161] sm:%s154]
                %164 = vst [vmem:[%s162] sm:%s154] %v163
                %v165 = vld [vmem:[%s161 + $0xc] sm:%s154]
                %166 = vst [vmem:[%s162 + $0x8] sm:%s154] %v165
                %v167 = vld [vmem:[%s161 + $0x18] sm:%s154]
                %168 = vst [vmem:[%s162 + $0x10] sm:%s154] %v167
                %v169 = vld [vmem:[%s161 + $0x24] sm:%s154]
                %170 = vst [vmem:[%s162 + $0x18] sm:%s154] %v169
                %v171 = vld [vmem:[%s161 + $0x30] sm:%s154]
                %172 = vst [vmem:[%s162 + $0x20] sm:%s154] %v171
                %v173 = vld [vmem:[%s161 + $0x3c] sm:%s154]
                %174 = vst [vmem:[%s162 + $0x28] sm:%s154] %v173
                %v175 = vld [vmem:[%s161 + $0x48] sm:%s154]
                %176 = vst [vmem:[%s162 + $0x30] sm:%s154] %v175
                %v177 = vld [vmem:[%s161 + $0x54] sm:%s154]
                %178 = vst [vmem:[%s162 + $0x38] sm:%s154] %v177
                %v179 = vld [vmem:[%s161 + $0x60] sm:%s154]
                %180 = vst [vmem:[%s162 + $0x40] sm:%s154] %v179
                %v181 = vld [vmem:[%s161 + $0x6c] sm:%s154]
                %182 = vst [vmem:[%s162 + $0x48] sm:%s154] %v181
                %v183 = vld [vmem:[%s161 + $0x78] sm:%s154]
                %184 = vst [vmem:[%s162 + $0x50] sm:%s154] %v183
                %v185 = vld [vmem:[%s161 + $0x84] sm:%s154]
                %186 = vst [vmem:[%s162 + $0x58] sm:%s154] %v185
                %v187 = vld [vmem:[%s161 + $0x90] sm:%s154]
                %188 = vst [vmem:[%s162 + $0x60] sm:%s154] %v187
                %v189 = vld [vmem:[%s161 + $0x9c] sm:%s154]
                %190 = vst [vmem:[%s162 + $0x68] sm:%s154] %v189
                %v191 = vld [vmem:[%s161 + $0xa8] sm:%s154]
                %192 = vst [vmem:[%s162 + $0x70] sm:%s154] %v191
                %v193 = vld [vmem:[%s161 + $0xb4] sm:%s154]
                %194 = vst [vmem:[%s162 + $0x78] sm:%s154] %v193
              $region45: #{cnn_forward.3} parent=39 // loop_footer
                %s160 = sadd.s32 1, %s156
              $region46: #{cnn_forward.3} parent=39 // loop_footer_branch
                %155 = sbr.rel target = $region42
              $region47: #{cnn_forward.3} parent=39 // loop_exit
                _
            $region40: #{cnn_forward.3} parent=31 // pred_fallthru
              _
          $region32: #{cnn_forward.3} parent=27 // pred_fallthru
            _
          %663 = vnop
        $region28: #{cnn_forward.3} parent=23 // pred_fallthru
          _
      $region24: #{cnn_forward.3} parent=5 // pred_fallthru
        _
      %p664 = scmp.le.s32.totalorder 1, %s9
      %p665 = scmp.lt.s32.totalorder %s9, 3
      %p666 = pnand %p664, %p665
      %p667 = pneg %p666
      // Predicated region
      $region91: #{cnn_forward.3} parent=5 // pred_check
        _
      $region92: #{cnn_forward.3} parent=5 // pred_check_branch
        %669 = sbr.rel (%p666) target = $region94
      $region93: #{cnn_forward.3} parent=5 // pred_region
        %s670 = ssub.s32 %s9, 1
        %s671 = sand.u32 %s22, 1
        %s672 = sand.u32 %s22, 1
        %s673 = smul.addr %s672, 128
        %s674 = scalar_lea.vmem [#allocation2], %s673
        // Predicated region
        $region95: #{cnn_forward.3} parent=93 // pred_check
          %p675 = pneg %p35
        $region96: #{cnn_forward.3} parent=93 // pred_check_branch
          %677 = sbr.rel (%p675) target = $region98
        $region97: #{cnn_forward.3} parent=93 // pred_region
          _
        $region98: #{cnn_forward.3} parent=93 // pred_fallthru
          _
        %s678 = sand.u32 %s22, 1
        %s679 = sand.u32 %s22, 1
        %s680 = smul.addr %s679, 128
        %s681 = scalar_lea.vmem [#allocation2], %s680
        %p682 = pneg %p35
        %p683 = pneg %p32
        %p684 = pneg %p56
        %p685 = pneg %p53
        %p686 = pneg %p77
        %p687 = pneg %p74
        %p688 = pneg %p103
        %p689 = pneg %p100
        %s690 = sand.u32 %s90, 1
        %s691 = sand.u32 %s90, 1
        %s692 = smul.addr %s691, 16
        %s693 = scalar_lea.vmem [#allocation3], %s692
        %s694 = smul.u32 2, %s14
        %s695 = ssub.s32 3, %s694
        %p696 = scmp.lt.s32.totalorder %s695, 2
        %s697 = scalar_select %p696, %s695, 2
        %s698 = smul.u32 1024, %s697
        %s699 = smul.u32 2, %s14
        %s700 = ssub.s32 3, %s699
        %p701 = scmp.lt.s32.totalorder %s700, 2
        %s702 = scalar_select %p701, %s700, 2
        %s703 = smul.u32 128, %s702
        %v705 = vld [vmem:[%s1] sm:$0xf]
        %v706 = vld [vmem:[%s1 + $0x4] sm:$0x1]
        %v707 = vld [vmem:[%s674] sm:$0xff]
        %v708 = vld [vmem:[%s674 + $0x8] sm:$0xff]
        %v709 = vld [vmem:[%s674 + $0x10] sm:$0xff]
        %v710 = vld [vmem:[%s674 + $0x18] sm:$0x11]
        %v713 = vunpack.c.l.b16 %v705
        %v714 = vunpack.c.l.b16 %v706
        %v715 = vpack.c.b16 %v714, %v713
        %v720 = vunpack.c.l.b16 %v707
        %v721 = vunpack.c.h.b16 %v707
        %v722 = vunpack.c.l.b16 %v708
        %v723 = vunpack.c.h.b16 %v708
        %v724 = vunpack.c.l.b16 %v709
        %v725 = vunpack.c.h.b16 %v709
        %v726 = vunpack.c.l.b16 %v710
        %v727 = vunpack.c.h.b16 %v710
        %v728 = vpack.c.b16 %v722, %v720
        %v729 = vpack.c.b16 %v723, %v721
        %v730 = vpack.c.b16 %v726, %v724
        %v731 = vpack.c.b16 %v727, %v725
        %vm734 = vcmask 203776
        %v736 = vsel %vm734, %v715, 0
        %vm738 = vcmask 1043456
        %vm739 = vcmask 1044480
        %v740 = vsel %vm738, 4294967295, 65535
        %v741 = vsel %vm739, %v740, 0
        %v743 = vand.u32 %v730, %v741
        %v746 = vand.u32 %v731, %v741
        %748 = vmatprep.subr.bf16.mxu0 %v729
        %749 = vmatpush1.bf16.msra.mxu0 %v728
        %750 = vmatprep.subr.bf16.mxu0 %v746
        %751 = vmatpush1.bf16.msra.mxu0 %v743
        %752 = vmatprep.subr.bf16.mxu0 0
        %753 = vmatpush1.bf16.msra.mxu0 0
        %754 = vmatprep.subr.bf16.mxu0 0
        %755 = vmatpush1.bf16.msra.mxu0 0
        %756 = vmatprep.subr.bf16.mxu0 0
        %757 = vmatpush1.bf16.msra.mxu0 0
        %758 = vmatprep.subr.bf16.mxu0 0
        %759 = vmatpush1.bf16.msra.mxu0 0
        %760 = vmatprep.subr.bf16.mxu0 0
        %761 = vmatpush1.bf16.msra.mxu0 0
        %762 = vmatprep.subr.bf16.mxu0 0
        %763 = vmatpush1.bf16.msra.mxu0 0
        %764 = vmatprep.subr.bf16.mxu0 0
        %765 = vmatpush1.bf16.msra.mxu0 0
        %766 = vmatprep.subr.bf16.mxu0 0
        %767 = vmatpush1.bf16.msra.mxu0 0
        %768 = vmatprep.subr.bf16.mxu0 0
        %769 = vmatpush1.bf16.msra.mxu0 0
        %770 = vmatprep.subr.bf16.mxu0 0
        %771 = vmatpush1.bf16.msra.mxu0 0
        %772 = vmatprep.subr.bf16.mxu0 0
        %773 = vmatpush1.bf16.msra.mxu0 0
        %774 = vmatprep.subr.bf16.mxu0 0
        %775 = vmatpush1.bf16.msra.mxu0 0
        %776 = vmatprep.subr.bf16.mxu0 0
        %777 = vmatpush1.bf16.msra.mxu0 0
        %778 = vmatprep.subr.bf16.mxu0 0
        %779 = vmatpush1.bf16.msra.mxu0 0
        %780 = vmatprep.mubr.bf16.mxu0 0
        %781 = vmatmul.mubr.bf16.gmra.mrb[0].mxu0 %v736
        %v782 = vpop.f32.mrb[0].mxu0
        %v783 = vadd.f32 0.0, %v782
        %v784 = vpop.f32.mrb[0].mxu0
        %v785 = vadd.f32 0.0, %v784
        %v786 = vpop.f32.mrb[0].mxu0
        %v787 = vadd.f32 0.0, %v786
        %v788 = vpop.f32.mrb[0].mxu0
        %v789 = vadd.f32 0.0, %v788
        %790 = vdwg.mxu0
        %s791 = scalar_lea.vmem %s674, 32 [#allocation2]
        %v792 = vld [vmem:[%s791] sm:$0xff]
        %v793 = vld [vmem:[%s791 + $0x8] sm:$0xff]
        %v794 = vld [vmem:[%s791 + $0x10] sm:$0xff]
        %v795 = vld [vmem:[%s791 + $0x18] sm:$0x11]
        %v800 = vunpack.c.l.b16 %v792
        %v801 = vunpack.c.h.b16 %v792
        %v802 = vunpack.c.l.b16 %v793
        %v803 = vunpack.c.h.b16 %v793
        %v804 = vunpack.c.l.b16 %v794
        %v805 = vunpack.c.h.b16 %v794
        %v806 = vunpack.c.l.b16 %v795
        %v807 = vunpack.c.h.b16 %v795
        %v808 = vpack.c.b16 %v802, %v800
        %v809 = vpack.c.b16 %v803, %v801
        %v810 = vpack.c.b16 %v806, %v804
        %v811 = vpack.c.b16 %v807, %v805
        %v815 = vand.u32 %v810, %v741
        %v818 = vand.u32 %v811, %v741
        %820 = vmatprep.subr.bf16.mxu0 %v809
        %821 = vmatpush1.bf16.msra.mxu0 %v808
        %822 = vmatprep.subr.bf16.mxu0 %v818
        %823 = vmatpush1.bf16.msra.mxu0 %v815
        %824 = vmatprep.subr.bf16.mxu0 0
        %825 = vmatpush1.bf16.msra.mxu0 0
        %826 = vmatprep.subr.bf16.mxu0 0
        %827 = vmatpush1.bf16.msra.mxu0 0
        %828 = vmatprep.subr.bf16.mxu0 0
        %829 = vmatpush1.bf16.msra.mxu0 0
        %830 = vmatprep.subr.bf16.mxu0 0
        %831 = vmatpush1.bf16.msra.mxu0 0
        %832 = vmatprep.subr.bf16.mxu0 0
        %833 = vmatpush1.bf16.msra.mxu0 0
        %834 = vmatprep.subr.bf16.mxu0 0
        %835 = vmatpush1.bf16.msra.mxu0 0
        %836 = vmatprep.subr.bf16.mxu0 0
        %837 = vmatpush1.bf16.msra.mxu0 0
        %838 = vmatprep.subr.bf16.mxu0 0
        %839 = vmatpush1.bf16.msra.mxu0 0
        %840 = vmatprep.subr.bf16.mxu0 0
        %841 = vmatpush1.bf16.msra.mxu0 0
        %842 = vmatprep.subr.bf16.mxu0 0
        %843 = vmatpush1.bf16.msra.mxu0 0
        %844 = vmatprep.subr.bf16.mxu0 0
        %845 = vmatpush1.bf16.msra.mxu0 0
        %846 = vmatprep.subr.bf16.mxu0 0
        %847 = vmatpush1.bf16.msra.mxu0 0
        %848 = vmatprep.subr.bf16.mxu0 0
        %849 = vmatpush1.bf16.msra.mxu0 0
        %850 = vmatprep.subr.bf16.mxu0 0
        %851 = vmatpush1.bf16.msra.mxu0 0
        %852 = vmatprep.mubr.bf16.mxu0 0
        %853 = vmatmul.mubr.bf16.gmra.mrb[0].mxu0 %v736
        %v854 = vpop.f32.mrb[0].mxu0
        %v855 = vadd.f32 0.0, %v854
        %v856 = vpop.f32.mrb[0].mxu0
        %v857 = vadd.f32 0.0, %v856
        %v858 = vpop.f32.mrb[0].mxu0
        %v859 = vadd.f32 0.0, %v858
        %v860 = vpop.f32.mrb[0].mxu0
        %v861 = vadd.f32 0.0, %v860
        %862 = vdwg.mxu0
        %v863 = vmax.f32 %v783, %v855
        %v864 = vmax.f32 %v785, %v857
        %v865 = vmax.f32 %v787, %v859
        %v866 = vmax.f32 %v789, %v861
        %s867 = scalar_lea.vmem %s674, 64 [#allocation2]
        %v868 = vld [vmem:[%s867] sm:$0xff]
        %v869 = vld [vmem:[%s867 + $0x8] sm:$0xff]
        %v870 = vld [vmem:[%s867 + $0x10] sm:$0xff]
        %v871 = vld [vmem:[%s867 + $0x18] sm:$0x11]
        %v876 = vunpack.c.l.b16 %v868
        %v877 = vunpack.c.h.b16 %v868
        %v878 = vunpack.c.l.b16 %v869
        %v879 = vunpack.c.h.b16 %v869
        %v880 = vunpack.c.l.b16 %v870
        %v881 = vunpack.c.h.b16 %v870
        %v882 = vunpack.c.l.b16 %v871
        %v883 = vunpack.c.h.b16 %v871
        %v884 = vpack.c.b16 %v878, %v876
        %v885 = vpack.c.b16 %v879, %v877
        %v886 = vpack.c.b16 %v882, %v880
        %v887 = vpack.c.b16 %v883, %v881
        %v891 = vand.u32 %v886, %v741
        %v894 = vand.u32 %v887, %v741
        %896 = vmatprep.subr.bf16.mxu0 %v885
        %897 = vmatpush1.bf16.msra.mxu0 %v884
        %898 = vmatprep.subr.bf16.mxu0 %v894
        %899 = vmatpush1.bf16.msra.mxu0 %v891
        %900 = vmatprep.subr.bf16.mxu0 0
        %901 = vmatpush1.bf16.msra.mxu0 0
        %902 = vmatprep.subr.bf16.mxu0 0
        %903 = vmatpush1.bf16.msra.mxu0 0
        %904 = vmatprep.subr.bf16.mxu0 0
        %905 = vmatpush1.bf16.msra.mxu0 0
        %906 = vmatprep.subr.bf16.mxu0 0
        %907 = vmatpush1.bf16.msra.mxu0 0
        %908 = vmatprep.subr.bf16.mxu0 0
        %909 = vmatpush1.bf16.msra.mxu0 0
        %910 = vmatprep.subr.bf16.mxu0 0
        %911 = vmatpush1.bf16.msra.mxu0 0
        %912 = vmatprep.subr.bf16.mxu0 0
        %913 = vmatpush1.bf16.msra.mxu0 0
        %914 = vmatprep.subr.bf16.mxu0 0
        %915 = vmatpush1.bf16.msra.mxu0 0
        %916 = vmatprep.subr.bf16.mxu0 0
        %917 = vmatpush1.bf16.msra.mxu0 0
        %918 = vmatprep.subr.bf16.mxu0 0
        %919 = vmatpush1.bf16.msra.mxu0 0
        %920 = vmatprep.subr.bf16.mxu0 0
        %921 = vmatpush1.bf16.msra.mxu0 0
        %922 = vmatprep.subr.bf16.mxu0 0
        %923 = vmatpush1.bf16.msra.mxu0 0
        %924 = vmatprep.subr.bf16.mxu0 0
        %925 = vmatpush1.bf16.msra.mxu0 0
        %926 = vmatprep.subr.bf16.mxu0 0
        %927 = vmatpush1.bf16.msra.mxu0 0
        %928 = vmatprep.mubr.bf16.mxu0 0
        %929 = vmatmul.mubr.bf16.gmra.mrb[0].mxu0 %v736
        %v930 = vpop.f32.mrb[0].mxu0
        %v931 = vadd.f32 0.0, %v930
        %v932 = vpop.f32.mrb[0].mxu0
        %v933 = vadd.f32 0.0, %v932
        %v934 = vpop.f32.mrb[0].mxu0
        %v935 = vadd.f32 0.0, %v934
        %v936 = vpop.f32.mrb[0].mxu0
        %v937 = vadd.f32 0.0, %v936
        %938 = vdwg.mxu0
        %v939 = vmax.f32 %v863, %v931
        %v940 = vmax.f32 %v864, %v933
        %v941 = vmax.f32 %v865, %v935
        %v942 = vmax.f32 %v866, %v937
        %s943 = scalar_lea.vmem %s674, 96 [#allocation2]
        %v944 = vld [vmem:[%s943] sm:$0xff]
        %v945 = vld [vmem:[%s943 + $0x8] sm:$0xff]
        %v946 = vld [vmem:[%s943 + $0x10] sm:$0xff]
        %v947 = vld [vmem:[%s943 + $0x18] sm:$0x11]
        %v952 = vunpack.c.l.b16 %v944
        %v953 = vunpack.c.h.b16 %v944
        %v954 = vunpack.c.l.b16 %v945
        %v955 = vunpack.c.h.b16 %v945
        %v956 = vunpack.c.l.b16 %v946
        %v957 = vunpack.c.h.b16 %v946
        %v958 = vunpack.c.l.b16 %v947
        %v959 = vunpack.c.h.b16 %v947
        %v960 = vpack.c.b16 %v954, %v952
        %v961 = vpack.c.b16 %v955, %v953
        %v962 = vpack.c.b16 %v958, %v956
        %v963 = vpack.c.b16 %v959, %v957
        %v967 = vand.u32 %v962, %v741
        %v970 = vand.u32 %v963, %v741
        %972 = vmatprep.subr.bf16.mxu0 %v961
        %973 = vmatpush1.bf16.msra.mxu0 %v960
        %974 = vmatprep.subr.bf16.mxu0 %v970
        %975 = vmatpush1.bf16.msra.mxu0 %v967
        %976 = vmatprep.subr.bf16.mxu0 0
        %977 = vmatpush1.bf16.msra.mxu0 0
        %978 = vmatprep.subr.bf16.mxu0 0
        %979 = vmatpush1.bf16.msra.mxu0 0
        %980 = vmatprep.subr.bf16.mxu0 0
        %981 = vmatpush1.bf16.msra.mxu0 0
        %982 = vmatprep.subr.bf16.mxu0 0
        %983 = vmatpush1.bf16.msra.mxu0 0
        %984 = vmatprep.subr.bf16.mxu0 0
        %985 = vmatpush1.bf16.msra.mxu0 0
        %986 = vmatprep.subr.bf16.mxu0 0
        %987 = vmatpush1.bf16.msra.mxu0 0
        %988 = vmatprep.subr.bf16.mxu0 0
        %989 = vmatpush1.bf16.msra.mxu0 0
        %990 = vmatprep.subr.bf16.mxu0 0
        %991 = vmatpush1.bf16.msra.mxu0 0
        %992 = vmatprep.subr.bf16.mxu0 0
        %993 = vmatpush1.bf16.msra.mxu0 0
        %994 = vmatprep.subr.bf16.mxu0 0
        %995 = vmatpush1.bf16.msra.mxu0 0
        %996 = vmatprep.subr.bf16.mxu0 0
        %997 = vmatpush1.bf16.msra.mxu0 0
        %998 = vmatprep.subr.bf16.mxu0 0
        %999 = vmatpush1.bf16.msra.mxu0 0
        %1000 = vmatprep.subr.bf16.mxu0 0
        %1001 = vmatpush1.bf16.msra.mxu0 0
        %1002 = vmatprep.subr.bf16.mxu0 0
        %1003 = vmatpush1.bf16.msra.mxu0 0
        %1004 = vmatprep.mubr.bf16.mxu0 0
        %1005 = vmatmul.mubr.bf16.gmra.mrb[0].mxu0 %v736
        %v1006 = vpop.f32.mrb[0].mxu0
        %v1007 = vadd.f32 0.0, %v1006
        %v1008 = vpop.f32.mrb[0].mxu0
        %v1009 = vadd.f32 0.0, %v1008
        %v1010 = vpop.f32.mrb[0].mxu0
        %v1011 = vadd.f32 0.0, %v1010
        %v1012 = vpop.f32.mrb[0].mxu0
        %v1013 = vadd.f32 0.0, %v1012
        %1014 = vdwg.mxu0
        %v1015 = vmax.f32 %v939, %v1007
        %v1016 = vmax.f32 %v940, %v1009
        %v1017 = vmax.f32 %v941, %v1011
        %v1018 = vmax.f32 %v942, %v1013
        %v1019 = vld [vmem:[%s2] sm:$0xff]
        %v1020 = vld [vmem:[%s2 + $0x8] sm:$0x3]
        %1022 = vset.pattern.permute.xlu0 0
        %1023 = vperm.xlu0 %1022, %v1019
        %v1024 = vpop.permute.xlu0 %1023
        %1027 = vset.pattern.permute.xlu0 0
        %1028 = vperm.xlu0 %1027, %v1020
        %v1029 = vpop.permute.xlu0 %1028
        %v1031 = vadd.f32 %v1015, %v1024
        %v1032 = vadd.f32 %v1016, %v1024
        %v1033 = vadd.f32 %v1017, %v1029
        %v1034 = vadd.f32 %v1018, %v1029
        %v1035 = vand.u32 2147483647, %v1031
        %v1036 = vand.u32 2147483647, %v1032
        %v1037 = vand.u32 2147483647, %v1033
        %v1038 = vand.u32 2147483647, %v1034
        %v1039 = vpack.c.bf16 %v1037, %v1035
        %v1040 = vpack.c.bf16 %v1038, %v1036
        %v1043 = vunpack.c.l.b16 %v1039
        %v1044 = vunpack.c.l.b16 %v1040
        %v1045 = vunpack.c.h.b16 %v1039
        %v1046 = vunpack.c.h.b16 %v1040
        %v1047 = vpack.c.b16 %v1044, %v1043
        %v1048 = vpack.c.b16 %v1046, %v1045
        %1051 = vst [vmem:[%s693] sm:$0xff] %v1047
        %1052 = vst [vmem:[%s693 + $0x8] sm:$0x11] %v1048
        %s1053 = sand.u32 %s90, 1
        %s1054 = sand.u32 %s90, 1
        %s1055 = smul.addr %s1054, 16
        %s1056 = scalar_lea.vmem [#allocation3], %s1055
        // Predicated region
        $region99: #{cnn_forward.3} parent=93 // pred_check
          %p1057 = pneg %p100
        $region100: #{cnn_forward.3} parent=93 // pred_check_branch
          %1059 = sbr.rel (%p1057) target = $region102
        $region101: #{cnn_forward.3} parent=93 // pred_region
          %s1060 = smul.u32 2, %s14
          %s1061 = ssub.s32 3, %s1060
          %p1062 = scmp.lt.s32.totalorder %s1061, 2
          %s1063 = scalar_select %p1062, %s1061, 2
          %s1064 = smul.u32 128, %s1063
          %p1065 = scmp.ne.s32.totalorder 0, %s1064
          %s1066 = smul.addr %s1060, 4
          %s1067 = scalar_lea.vmem %s3, %s1066
          %s1068 = smul.u32 %s1063, 4
          // Predicated region
          $region103: #{cnn_forward.3} parent=101 // pred_check
            %p1069 = pneg %p1065
          $region104: #{cnn_forward.3} parent=101 // pred_check_branch
            %1071 = sbr.rel (%p1069) target = $region106
          $region105: #{cnn_forward.3} parent=101 // pred_region
            %p1072 = scmp.lt.u32.totalorder %s1068, 8
            %p1073 = pneg %p1072
            // Predicated region
            $region107: #{cnn_forward.3} parent=105 // pred_check
              _
            $region108: #{cnn_forward.3} parent=105 // pred_check_branch
              %1075 = sbr.rel (%p1072) target = $region110
            $region109: #{cnn_forward.3} parent=105 // pred_region
              %s1092 = sand.u32 %s1068, 7
              %p1093 = scmp.eq.s32.totalorder %s1092, 0
              // Predicated region
              $region122: #{cnn_forward.3} parent=109 // pred_check
                %p1094 = pneg %p1093
              $region123: #{cnn_forward.3} parent=109 // pred_check_branch
                %1096 = sbr.rel (%p1094) target = $region125
              $region124: #{cnn_forward.3} parent=109 // pred_region
                %s1097 = sshrl.u32 %s1068, 3
                %s1098 = sshrl.u32 %s1097, 5
                // While loop
                $region126: #{cnn_forward.3} parent=124 // loop_pre_header
                  _
                $region127: #{cnn_forward.3} parent=124 // loop_header
                  %s1102 = sphi 0, %s1104
                  %p1103 = scmp.ge.s32.totalorder %s1102, %s1098
                  %s1107 = sphi 0, %s1240
                  %s1108 = sphi %s1056, %s1243
                  %s1109 = sphi %s1067, %s1244
                $region128: #{cnn_forward.3} parent=124 // loop_header_branch
                  %1106 = sbr.rel (%p1103) target = $region132
                $region129: #{cnn_forward.3} parent=124 // loop_body
                  %v1110 = vld [vmem:[%s1108] sm:$0xff]
                  %1111 = vst [vmem:[%s1109] sm:$0xff] %v1110
                  %v1112 = vld [vmem:[%s1108 + $0x8] sm:$0xff]
                  %1113 = vst [vmem:[%s1109 + $0x8] sm:$0xff] %v1112
                  %v1114 = vld [vmem:[%s1108 + $0x10] sm:$0xff]
                  %1115 = vst [vmem:[%s1109 + $0x10] sm:$0xff] %v1114
                  %v1116 = vld [vmem:[%s1108 + $0x18] sm:$0xff]
                  %1117 = vst [vmem:[%s1109 + $0x18] sm:$0xff] %v1116
                  %v1118 = vld [vmem:[%s1108 + $0x20] sm:$0xff]
                  %1119 = vst [vmem:[%s1109 + $0x20] sm:$0xff] %v1118
                  %v1120 = vld [vmem:[%s1108 + $0x28] sm:$0xff]
                  %1121 = vst [vmem:[%s1109 + $0x28] sm:$0xff] %v1120
                  %v1122 = vld [vmem:[%s1108 + $0x30] sm:$0xff]
                  %1123 = vst [vmem:[%s1109 + $0x30] sm:$0xff] %v1122
                  %v1124 = vld [vmem:[%s1108 + $0x38] sm:$0xff]
                  %1125 = vst [vmem:[%s1109 + $0x38] sm:$0xff] %v1124
                  %v1126 = vld [vmem:[%s1108 + $0x40] sm:$0xff]
                  %1127 = vst [vmem:[%s1109 + $0x40] sm:$0xff] %v1126
                  %v1128 = vld [vmem:[%s1108 + $0x48] sm:$0xff]
                  %1129 = vst [vmem:[%s1109 + $0x48] sm:$0xff] %v1128
                  %v1130 = vld [vmem:[%s1108 + $0x50] sm:$0xff]
                  %1131 = vst [vmem:[%s1109 + $0x50] sm:$0xff] %v1130
                  %v1132 = vld [vmem:[%s1108 + $0x58] sm:$0xff]
                  %1133 = vst [vmem:[%s1109 + $0x58] sm:$0xff] %v1132
                  %v1134 = vld [vmem:[%s1108 + $0x60] sm:$0xff]
                  %1135 = vst [vmem:[%s1109 + $0x60] sm:$0xff] %v1134
                  %v1136 = vld [vmem:[%s1108 + $0x68] sm:$0xff]
                  %1137 = vst [vmem:[%s1109 + $0x68] sm:$0xff] %v1136
                  %v1138 = vld [vmem:[%s1108 + $0x70] sm:$0xff]
                  %1139 = vst [vmem:[%s1109 + $0x70] sm:$0xff] %v1138
                  %v1140 = vld [vmem:[%s1108 + $0x78] sm:$0xff]
                  %1141 = vst [vmem:[%s1109 + $0x78] sm:$0xff] %v1140
                  %v1142 = vld [vmem:[%s1108 + $0x80] sm:$0xff]
                  %1143 = vst [vmem:[%s1109 + $0x80] sm:$0xff] %v1142
                  %v1144 = vld [vmem:[%s1108 + $0x88] sm:$0xff]
                  %1145 = vst [vmem:[%s1109 + $0x88] sm:$0xff] %v1144
                  %v1146 = vld [vmem:[%s1108 + $0x90] sm:$0xff]
                  %1147 = vst [vmem:[%s1109 + $0x90] sm:$0xff] %v1146
                  %v1148 = vld [vmem:[%s1108 + $0x98] sm:$0xff]
                  %1149 = vst [vmem:[%s1109 + $0x98] sm:$0xff] %v1148
                  %v1150 = vld [vmem:[%s1108 + $0xa0] sm:$0xff]
                  %1151 = vst [vmem:[%s1109 + $0xa0] sm:$0xff] %v1150
                  %v1152 = vld [vmem:[%s1108 + $0xa8] sm:$0xff]
                  %1153 = vst [vmem:[%s1109 + $0xa8] sm:$0xff] %v1152
                  %v1154 = vld [vmem:[%s1108 + $0xb0] sm:$0xff]
                  %1155 = vst [vmem:[%s1109 + $0xb0] sm:$0xff] %v1154
                  %v1156 = vld [vmem:[%s1108 + $0xb8] sm:$0xff]
                  %1157 = vst [vmem:[%s1109 + $0xb8] sm:$0xff] %v1156
                  %v1158 = vld [vmem:[%s1108 + $0xc0] sm:$0xff]
                  %1159 = vst [vmem:[%s1109 + $0xc0] sm:$0xff] %v1158
                  %v1160 = vld [vmem:[%s1108 + $0xc8] sm:$0xff]
                  %1161 = vst [vmem:[%s1109 + $0xc8] sm:$0xff] %v1160
                  %v1162 = vld [vmem:[%s1108 + $0xd0] sm:$0xff]
                  %1163 = vst [vmem:[%s1109 + $0xd0] sm:$0xff] %v1162
                  %v1164 = vld [vmem:[%s1108 + $0xd8] sm:$0xff]
                  %1165 = vst [vmem:[%s1109 + $0xd8] sm:$0xff] %v1164
                  %v1166 = vld [vmem:[%s1108 + $0xe0] sm:$0xff]
                  %1167 = vst [vmem:[%s1109 + $0xe0] sm:$0xff] %v1166
                  %v1168 = vld [vmem:[%s1108 + $0xe8] sm:$0xff]
                  %1169 = vst [vmem:[%s1109 + $0xe8] sm:$0xff] %v1168
                  %v1170 = vld [vmem:[%s1108 + $0xf0] sm:$0xff]
                  %1171 = vst [vmem:[%s1109 + $0xf0] sm:$0xff] %v1170
                  %v1172 = vld [vmem:[%s1108 + $0xf8] sm:$0xff]
                  %1173 = vst [vmem:[%s1109 + $0xf8] sm:$0xff] %v1172
                  %v1174 = vld [vmem:[%s1108 + $0x8] sm:$0xff]
                  %1175 = vst [vmem:[%s1109 + $0xc] sm:$0xff] %v1174
                  %v1176 = vld [vmem:[%s1108 + $0x10] sm:$0xff]
                  %1177 = vst [vmem:[%s1109 + $0x14] sm:$0xff] %v1176
                  %v1178 = vld [vmem:[%s1108 + $0x18] sm:$0xff]
                  %1179 = vst [vmem:[%s1109 + $0x1c] sm:$0xff] %v1178
                  %v1180 = vld [vmem:[%s1108 + $0x20] sm:$0xff]
                  %1181 = vst [vmem:[%s1109 + $0x24] sm:$0xff] %v1180
                  %v1182 = vld [vmem:[%s1108 + $0x28] sm:$0xff]
                  %1183 = vst [vmem:[%s1109 + $0x2c] sm:$0xff] %v1182
                  %v1184 = vld [vmem:[%s1108 + $0x30] sm:$0xff]
                  %1185 = vst [vmem:[%s1109 + $0x34] sm:$0xff] %v1184
                  %v1186 = vld [vmem:[%s1108 + $0x38] sm:$0xff]
                  %1187 = vst [vmem:[%s1109 + $0x3c] sm:$0xff] %v1186
                  %v1188 = vld [vmem:[%s1108 + $0x40] sm:$0xff]
                  %1189 = vst [vmem:[%s1109 + $0x44] sm:$0xff] %v1188
                  %v1190 = vld [vmem:[%s1108 + $0x48] sm:$0xff]
                  %1191 = vst [vmem:[%s1109 + $0x4c] sm:$0xff] %v1190
                  %v1192 = vld [vmem:[%s1108 + $0x50] sm:$0xff]
                  %1193 = vst [vmem:[%s1109 + $0x54] sm:$0xff] %v1192
                  %v1194 = vld [vmem:[%s1108 + $0x58] sm:$0xff]
                  %1195 = vst [vmem:[%s1109 + $0x5c] sm:$0xff] %v1194
                  %v1196 = vld [vmem:[%s1108 + $0x60] sm:$0xff]
                  %1197 = vst [vmem:[%s1109 + $0x64] sm:$0xff] %v1196
                  %v1198 = vld [vmem:[%s1108 + $0x68] sm:$0xff]
                  %1199 = vst [vmem:[%s1109 + $0x6c] sm:$0xff] %v1198
                  %v1200 = vld [vmem:[%s1108 + $0x70] sm:$0xff]
                  %1201 = vst [vmem:[%s1109 + $0x74] sm:$0xff] %v1200
                  %v1202 = vld [vmem:[%s1108 + $0x78] sm:$0xff]
                  %1203 = vst [vmem:[%s1109 + $0x7c] sm:$0xff] %v1202
                  %v1204 = vld [vmem:[%s1108 + $0x80] sm:$0xff]
                  %1205 = vst [vmem:[%s1109 + $0x84] sm:$0xff] %v1204
                  %v1206 = vld [vmem:[%s1108 + $0x88] sm:$0xff]
                  %1207 = vst [vmem:[%s1109 + $0x8c] sm:$0xff] %v1206
                  %v1208 = vld [vmem:[%s1108 + $0x90] sm:$0xff]
                  %1209 = vst [vmem:[%s1109 + $0x94] sm:$0xff] %v1208
                  %v1210 = vld [vmem:[%s1108 + $0x98] sm:$0xff]
                  %1211 = vst [vmem:[%s1109 + $0x9c] sm:$0xff] %v1210
                  %v1212 = vld [vmem:[%s1108 + $0xa0] sm:$0xff]
                  %1213 = vst [vmem:[%s1109 + $0xa4] sm:$0xff] %v1212
                  %v1214 = vld [vmem:[%s1108 + $0xa8] sm:$0xff]
                  %1215 = vst [vmem:[%s1109 + $0xac] sm:$0xff] %v1214
                  %v1216 = vld [vmem:[%s1108 + $0xb0] sm:$0xff]
                  %1217 = vst [vmem:[%s1109 + $0xb4] sm:$0xff] %v1216
                  %v1218 = vld [vmem:[%s1108 + $0xb8] sm:$0xff]
                  %1219 = vst [vmem:[%s1109 + $0xbc] sm:$0xff] %v1218
                  %v1220 = vld [vmem:[%s1108 + $0xc0] sm:$0xff]
                  %1221 = vst [vmem:[%s1109 + $0xc4] sm:$0xff] %v1220
                  %v1222 = vld [vmem:[%s1108 + $0xc8] sm:$0xff]
                  %1223 = vst [vmem:[%s1109 + $0xcc] sm:$0xff] %v1222
                  %v1224 = vld [vmem:[%s1108 + $0xd0] sm:$0xff]
                  %1225 = vst [vmem:[%s1109 + $0xd4] sm:$0xff] %v1224
                  %v1226 = vld [vmem:[%s1108 + $0xd8] sm:$0xff]
                  %1227 = vst [vmem:[%s1109 + $0xdc] sm:$0xff] %v1226
                  %v1228 = vld [vmem:[%s1108 + $0xe0] sm:$0xff]
                  %1229 = vst [vmem:[%s1109 + $0xe4] sm:$0xff] %v1228
                  %v1230 = vld [vmem:[%s1108 + $0xe8] sm:$0xff]
                  %1231 = vst [vmem:[%s1109 + $0xec] sm:$0xff] %v1230
                  %v1232 = vld [vmem:[%s1108 + $0xf0] sm:$0xff]
                  %1233 = vst [vmem:[%s1109 + $0xf4] sm:$0xff] %v1232
                  %v1234 = vld [vmem:[%s1108 + $0xf8] sm:$0xff]
                  %1235 = vst [vmem:[%s1109 + $0xfc] sm:$0xff] %v1234
                  %v1236 = vld [vmem:[%s1108 + $0x100] sm:$0xff]
                  %1237 = vst [vmem:[%s1109 + $0x104] sm:$0xff] %v1236
                  %s1238 = sadd.s32 1, %s1107
                  %p1239 = scmp.ge.s32.totalorder %s1238, %s1098
                  %s1240 = scalar_select %p1239, 0, %s1238
                  %s1241 = smul.u32 %s1240, 256
                  %s1242 = smul.u32 %s1240, 256
                  %s1243 = scalar_lea.vmem %s1056, %s1241 [#allocation3]
                  %s1244 = scalar_lea.vmem %s1067, %s1242
                $region130: #{cnn_forward.3} parent=124 // loop_footer
                  %s1104 = sadd.s32 %s1102, 1
                $region131: #{cnn_forward.3} parent=124 // loop_footer_branch
                  %1101 = sbr.rel target = $region127
                $region132: #{cnn_forward.3} parent=124 // loop_exit
                  _
                %s1245 = sshrl.u32 %s1097, 5
                %s1246 = sand.u32 %s1097, 31
                %s1247 = smul.u32 %s1245, 32
                %s1248 = smul.u32 128, %s1247
                %s1249 = sshra.s32 %s1248, 4
                %s1250 = scalar_lea.vmem %s1056, %s1249 [#allocation3]
                %s1251 = smul.u32 128, %s1247
                %s1252 = sshra.s32 %s1251, 4
                %s1253 = scalar_lea.vmem %s1067, %s1252
                // While loop
                $region133: #{cnn_forward.3} parent=124 // loop_pre_header
                  _
                $region134: #{cnn_forward.3} parent=124 // loop_header
                  %s1257 = sphi 0, %s1259
                  %p1258 = scmp.ge.s32.totalorder %s1257, %s1246
                  %s1262 = sphi 0, %s1271
                  %s1263 = sphi %s1250, %s1274
                  %s1264 = sphi %s1253, %s1275
                $region135: #{cnn_forward.3} parent=124 // loop_header_branch
                  %1261 = sbr.rel (%p1258) target = $region139
                $region136: #{cnn_forward.3} parent=124 // loop_body
                  %v1265 = vld [vmem:[%s1263] sm:$0xff]
                  %1266 = vst [vmem:[%s1264] sm:$0xff] %v1265
                  %v1267 = vld [vmem:[%s1263 + $0x8] sm:$0xff]
                  %1268 = vst [vmem:[%s1264 + $0xc] sm:$0xff] %v1267
                  %s1269 = sadd.s32 1, %s1262
                  %p1270 = scmp.ge.s32.totalorder %s1269, %s1246
                  %s1271 = scalar_select %p1270, 0, %s1269
                  %s1272 = smul.u32 %s1271, 8
                  %s1273 = smul.u32 %s1271, 8
                  %s1274 = scalar_lea.vmem %s1250, %s1272 [#allocation3]
                  %s1275 = scalar_lea.vmem %s1253, %s1273
                $region137: #{cnn_forward.3} parent=124 // loop_footer
                  %s1259 = sadd.s32 %s1257, 1
                $region138: #{cnn_forward.3} parent=124 // loop_footer_branch
                  %1256 = sbr.rel target = $region134
                $region139: #{cnn_forward.3} parent=124 // loop_exit
                  _
              $region125: #{cnn_forward.3} parent=109 // pred_fallthru
                _
              %p1276 = pneg %p1093
              // Predicated region
              $region140: #{cnn_forward.3} parent=109 // pred_check
                _
              $region141: #{cnn_forward.3} parent=109 // pred_check_branch
                %1278 = sbr.rel (%p1093) target = $region143
              $region142: #{cnn_forward.3} parent=109 // pred_region
                %s1279 = sand.u32 %s1068, 7
                %s1280 = ssub.s32 %s1068, %s1279
                %s1281 = scalar_lea.vmem %s1056, %s1280 [#allocation3]
                %s1282 = ssub.s32 %s1068, %s1279
                %s1283 = scalar_lea.vmem %s1067, %s1282
                %s1284 = sshrl.u32 %s1068, 3
                %s1285 = sshrl.u32 %s1284, 5
                // While loop
                $region144: #{cnn_forward.3} parent=142 // loop_pre_header
                  _
                $region145: #{cnn_forward.3} parent=142 // loop_header
                  %s1289 = sphi 0, %s1291
                  %p1290 = scmp.ge.s32.totalorder %s1289, %s1285
                  %s1294 = sphi 0, %s1427
                  %s1295 = sphi %s1056, %s1430
                  %s1296 = sphi %s1067, %s1431
                $region146: #{cnn_forward.3} parent=142 // loop_header_branch
                  %1293 = sbr.rel (%p1290) target = $region150
                $region147: #{cnn_forward.3} parent=142 // loop_body
                  %v1297 = vld [vmem:[%s1295] sm:$0xff]
                  %1298 = vst [vmem:[%s1296] sm:$0xff] %v1297
                  %v1299 = vld [vmem:[%s1295 + $0x8] sm:$0xff]
                  %1300 = vst [vmem:[%s1296 + $0x8] sm:$0xff] %v1299
                  %v1301 = vld [vmem:[%s1295 + $0x10] sm:$0xff]
                  %1302 = vst [vmem:[%s1296 + $0x10] sm:$0xff] %v1301
                  %v1303 = vld [vmem:[%s1295 + $0x18] sm:$0xff]
                  %1304 = vst [vmem:[%s1296 + $0x18] sm:$0xff] %v1303
                  %v1305 = vld [vmem:[%s1295 + $0x20] sm:$0xff]
                  %1306 = vst [vmem:[%s1296 + $0x20] sm:$0xff] %v1305
                  %v1307 = vld [vmem:[%s1295 + $0x28] sm:$0xff]
                  %1308 = vst [vmem:[%s1296 + $0x28] sm:$0xff] %v1307
                  %v1309 = vld [vmem:[%s1295 + $0x30] sm:$0xff]
                  %1310 = vst [vmem:[%s1296 + $0x30] sm:$0xff] %v1309
                  %v1311 = vld [vmem:[%s1295 + $0x38] sm:$0xff]
                  %1312 = vst [vmem:[%s1296 + $0x38] sm:$0xff] %v1311
                  %v1313 = vld [vmem:[%s1295 + $0x40] sm:$0xff]
                  %1314 = vst [vmem:[%s1296 + $0x40] sm:$0xff] %v1313
                  %v1315 = vld [vmem:[%s1295 + $0x48] sm:$0xff]
                  %1316 = vst [vmem:[%s1296 + $0x48] sm:$0xff] %v1315
                  %v1317 = vld [vmem:[%s1295 + $0x50] sm:$0xff]
                  %1318 = vst [vmem:[%s1296 + $0x50] sm:$0xff] %v1317
                  %v1319 = vld [vmem:[%s1295 + $0x58] sm:$0xff]
                  %1320 = vst [vmem:[%s1296 + $0x58] sm:$0xff] %v1319
                  %v1321 = vld [vmem:[%s1295 + $0x60] sm:$0xff]
                  %1322 = vst [vmem:[%s1296 + $0x60] sm:$0xff] %v1321
                  %v1323 = vld [vmem:[%s1295 + $0x68] sm:$0xff]
                  %1324 = vst [vmem:[%s1296 + $0x68] sm:$0xff] %v1323
                  %v1325 = vld [vmem:[%s1295 + $0x70] sm:$0xff]
                  %1326 = vst [vmem:[%s1296 + $0x70] sm:$0xff] %v1325
                  %v1327 = vld [vmem:[%s1295 + $0x78] sm:$0xff]
                  %1328 = vst [vmem:[%s1296 + $0x78] sm:$0xff] %v1327
                  %v1329 = vld [vmem:[%s1295 + $0x80] sm:$0xff]
                  %1330 = vst [vmem:[%s1296 + $0x80] sm:$0xff] %v1329
                  %v1331 = vld [vmem:[%s1295 + $0x88] sm:$0xff]
                  %1332 = vst [vmem:[%s1296 + $0x88] sm:$0xff] %v1331
                  %v1333 = vld [vmem:[%s1295 + $0x90] sm:$0xff]
                  %1334 = vst [vmem:[%s1296 + $0x90] sm:$0xff] %v1333
                  %v1335 = vld [vmem:[%s1295 + $0x98] sm:$0xff]
                  %1336 = vst [vmem:[%s1296 + $0x98] sm:$0xff] %v1335
                  %v1337 = vld [vmem:[%s1295 + $0xa0] sm:$0xff]
                  %1338 = vst [vmem:[%s1296 + $0xa0] sm:$0xff] %v1337
                  %v1339 = vld [vmem:[%s1295 + $0xa8] sm:$0xff]
                  %1340 = vst [vmem:[%s1296 + $0xa8] sm:$0xff] %v1339
                  %v1341 = vld [vmem:[%s1295 + $0xb0] sm:$0xff]
                  %1342 = vst [vmem:[%s1296 + $0xb0] sm:$0xff] %v1341
                  %v1343 = vld [vmem:[%s1295 + $0xb8] sm:$0xff]
                  %1344 = vst [vmem:[%s1296 + $0xb8] sm:$0xff] %v1343
                  %v1345 = vld [vmem:[%s1295 + $0xc0] sm:$0xff]
                  %1346 = vst [vmem:[%s1296 + $0xc0] sm:$0xff] %v1345
                  %v1347 = vld [vmem:[%s1295 + $0xc8] sm:$0xff]
                  %1348 = vst [vmem:[%s1296 + $0xc8] sm:$0xff] %v1347
                  %v1349 = vld [vmem:[%s1295 + $0xd0] sm:$0xff]
                  %1350 = vst [vmem:[%s1296 + $0xd0] sm:$0xff] %v1349
                  %v1351 = vld [vmem:[%s1295 + $0xd8] sm:$0xff]
                  %1352 = vst [vmem:[%s1296 + $0xd8] sm:$0xff] %v1351
                  %v1353 = vld [vmem:[%s1295 + $0xe0] sm:$0xff]
                  %1354 = vst [vmem:[%s1296 + $0xe0] sm:$0xff] %v1353
                  %v1355 = vld [vmem:[%s1295 + $0xe8] sm:$0xff]
                  %1356 = vst [vmem:[%s1296 + $0xe8] sm:$0xff] %v1355
                  %v1357 = vld [vmem:[%s1295 + $0xf0] sm:$0xff]
                  %1358 = vst [vmem:[%s1296 + $0xf0] sm:$0xff] %v1357
                  %v1359 = vld [vmem:[%s1295 + $0xf8] sm:$0xff]
                  %1360 = vst [vmem:[%s1296 + $0xf8] sm:$0xff] %v1359
                  %v1361 = vld [vmem:[%s1295 + $0x8] sm:$0xff]
                  %1362 = vst [vmem:[%s1296 + $0xc] sm:$0xff] %v1361
                  %v1363 = vld [vmem:[%s1295 + $0x10] sm:$0xff]
                  %1364 = vst [vmem:[%s1296 + $0x14] sm:$0xff] %v1363
                  %v1365 = vld [vmem:[%s1295 + $0x18] sm:$0xff]
                  %1366 = vst [vmem:[%s1296 + $0x1c] sm:$0xff] %v1365
                  %v1367 = vld [vmem:[%s1295 + $0x20] sm:$0xff]
                  %1368 = vst [vmem:[%s1296 + $0x24] sm:$0xff] %v1367
                  %v1369 = vld [vmem:[%s1295 + $0x28] sm:$0xff]
                  %1370 = vst [vmem:[%s1296 + $0x2c] sm:$0xff] %v1369
                  %v1371 = vld [vmem:[%s1295 + $0x30] sm:$0xff]
                  %1372 = vst [vmem:[%s1296 + $0x34] sm:$0xff] %v1371
                  %v1373 = vld [vmem:[%s1295 + $0x38] sm:$0xff]
                  %1374 = vst [vmem:[%s1296 + $0x3c] sm:$0xff] %v1373
                  %v1375 = vld [vmem:[%s1295 + $0x40] sm:$0xff]
                  %1376 = vst [vmem:[%s1296 + $0x44] sm:$0xff] %v1375
                  %v1377 = vld [vmem:[%s1295 + $0x48] sm:$0xff]
                  %1378 = vst [vmem:[%s1296 + $0x4c] sm:$0xff] %v1377
                  %v1379 = vld [vmem:[%s1295 + $0x50] sm:$0xff]
                  %1380 = vst [vmem:[%s1296 + $0x54] sm:$0xff] %v1379
                  %v1381 = vld [vmem:[%s1295 + $0x58] sm:$0xff]
                  %1382 = vst [vmem:[%s1296 + $0x5c] sm:$0xff] %v1381
                  %v1383 = vld [vmem:[%s1295 + $0x60] sm:$0xff]
                  %1384 = vst [vmem:[%s1296 + $0x64] sm:$0xff] %v1383
                  %v1385 = vld [vmem:[%s1295 + $0x68] sm:$0xff]
                  %1386 = vst [vmem:[%s1296 + $0x6c] sm:$0xff] %v1385
                  %v1387 = vld [vmem:[%s1295 + $0x70] sm:$0xff]
                  %1388 = vst [vmem:[%s1296 + $0x74] sm:$0xff] %v1387
                  %v1389 = vld [vmem:[%s1295 + $0x78] sm:$0xff]
                  %1390 = vst [vmem:[%s1296 + $0x7c] sm:$0xff] %v1389
                  %v1391 = vld [vmem:[%s1295 + $0x80] sm:$0xff]
                  %1392 = vst [vmem:[%s1296 + $0x84] sm:$0xff] %v1391
                  %v1393 = vld [vmem:[%s1295 + $0x88] sm:$0xff]
                  %1394 = vst [vmem:[%s1296 + $0x8c] sm:$0xff] %v1393
                  %v1395 = vld [vmem:[%s1295 + $0x90] sm:$0xff]
                  %1396 = vst [vmem:[%s1296 + $0x94] sm:$0xff] %v1395
                  %v1397 = vld [vmem:[%s1295 + $0x98] sm:$0xff]
                  %1398 = vst [vmem:[%s1296 + $0x9c] sm:$0xff] %v1397
                  %v1399 = vld [vmem:[%s1295 + $0xa0] sm:$0xff]
                  %1400 = vst [vmem:[%s1296 + $0xa4] sm:$0xff] %v1399
                  %v1401 = vld [vmem:[%s1295 + $0xa8] sm:$0xff]
                  %1402 = vst [vmem:[%s1296 + $0xac] sm:$0xff] %v1401
                  %v1403 = vld [vmem:[%s1295 + $0xb0] sm:$0xff]
                  %1404 = vst [vmem:[%s1296 + $0xb4] sm:$0xff] %v1403
                  %v1405 = vld [vmem:[%s1295 + $0xb8] sm:$0xff]
                  %1406 = vst [vmem:[%s1296 + $0xbc] sm:$0xff] %v1405
                  %v1407 = vld [vmem:[%s1295 + $0xc0] sm:$0xff]
                  %1408 = vst [vmem:[%s1296 + $0xc4] sm:$0xff] %v1407
                  %v1409 = vld [vmem:[%s1295 + $0xc8] sm:$0xff]
                  %1410 = vst [vmem:[%s1296 + $0xcc] sm:$0xff] %v1409
                  %v1411 = vld [vmem:[%s1295 + $0xd0] sm:$0xff]
                  %1412 = vst [vmem:[%s1296 + $0xd4] sm:$0xff] %v1411
                  %v1413 = vld [vmem:[%s1295 + $0xd8] sm:$0xff]
                  %1414 = vst [vmem:[%s1296 + $0xdc] sm:$0xff] %v1413
                  %v1415 = vld [vmem:[%s1295 + $0xe0] sm:$0xff]
                  %1416 = vst [vmem:[%s1296 + $0xe4] sm:$0xff] %v1415
                  %v1417 = vld [vmem:[%s1295 + $0xe8] sm:$0xff]
                  %1418 = vst [vmem:[%s1296 + $0xec] sm:$0xff] %v1417
                  %v1419 = vld [vmem:[%s1295 + $0xf0] sm:$0xff]
                  %1420 = vst [vmem:[%s1296 + $0xf4] sm:$0xff] %v1419
                  %v1421 = vld [vmem:[%s1295 + $0xf8] sm:$0xff]
                  %1422 = vst [vmem:[%s1296 + $0xfc] sm:$0xff] %v1421
                  %v1423 = vld [vmem:[%s1295 + $0x100] sm:$0xff]
                  %1424 = vst [vmem:[%s1296 + $0x104] sm:$0xff] %v1423
                  %s1425 = sadd.s32 1, %s1294
                  %p1426 = scmp.ge.s32.totalorder %s1425, %s1285
                  %s1427 = scalar_select %p1426, 0, %s1425
                  %s1428 = smul.u32 %s1427, 256
                  %s1429 = smul.u32 %s1427, 256
                  %s1430 = scalar_lea.vmem %s1056, %s1428 [#allocation3]
                  %s1431 = scalar_lea.vmem %s1067, %s1429
                $region148: #{cnn_forward.3} parent=142 // loop_footer
                  %s1291 = sadd.s32 %s1289, 1
                $region149: #{cnn_forward.3} parent=142 // loop_footer_branch
                  %1288 = sbr.rel target = $region145
                $region150: #{cnn_forward.3} parent=142 // loop_exit
                  _
                %s1432 = sshrl.u32 %s1284, 5
                %s1433 = sand.u32 %s1284, 31
                %s1434 = smul.u32 %s1432, 32
                %s1435 = smul.u32 128, %s1434
                %s1436 = sshra.s32 %s1435, 4
                %s1437 = scalar_lea.vmem %s1056, %s1436 [#allocation3]
                %s1438 = smul.u32 128, %s1434
                %s1439 = sshra.s32 %s1438, 4
                %s1440 = scalar_lea.vmem %s1067, %s1439
                // While loop
                $region151: #{cnn_forward.3} parent=142 // loop_pre_header
                  _
                $region152: #{cnn_forward.3} parent=142 // loop_header
                  %s1444 = sphi 0, %s1446
                  %p1445 = scmp.ge.s32.totalorder %s1444, %s1433
                  %s1449 = sphi 0, %s1458
                  %s1450 = sphi %s1437, %s1461
                  %s1451 = sphi %s1440, %s1462
                $region153: #{cnn_forward.3} parent=142 // loop_header_branch
                  %1448 = sbr.rel (%p1445) target = $region157
                $region154: #{cnn_forward.3} parent=142 // loop_body
                  %v1452 = vld [vmem:[%s1450] sm:$0xff]
                  %1453 = vst [vmem:[%s1451] sm:$0xff] %v1452
                  %v1454 = vld [vmem:[%s1450 + $0x8] sm:$0xff]
                  %1455 = vst [vmem:[%s1451 + $0xc] sm:$0xff] %v1454
                  %s1456 = sadd.s32 1, %s1449
                  %p1457 = scmp.ge.s32.totalorder %s1456, %s1433
                  %s1458 = scalar_select %p1457, 0, %s1456
                  %s1459 = smul.u32 %s1458, 8
                  %s1460 = smul.u32 %s1458, 8
                  %s1461 = scalar_lea.vmem %s1437, %s1459 [#allocation3]
                  %s1462 = scalar_lea.vmem %s1440, %s1460
                $region155: #{cnn_forward.3} parent=142 // loop_footer
                  %s1446 = sadd.s32 %s1444, 1
                $region156: #{cnn_forward.3} parent=142 // loop_footer_branch
                  %1443 = sbr.rel target = $region152
                $region157: #{cnn_forward.3} parent=142 // loop_exit
                  _
                %s1463 = sshllo.u32 0, %s1279
                loop: start=0, step=1, limit=1
                $region158: #{cnn_forward.3} parent=142 // loop_pre_header
                  _
                $region159: #{cnn_forward.3} parent=142 // loop_header
                  %s1465 = sphi 0, %s1469
                  %p1466 = scmp.ge.s32.totalorder %s1465, 1
                  %s1470 = sphi %s1281, %s1281
                  %s1471 = sphi %s1283, %s1283
                $region160: #{cnn_forward.3} parent=142 // loop_header_branch
                  %1468 = sbr.rel (%p1466) target = $region164
                $region161: #{cnn_forward.3} parent=142 // loop_body
                  %v1472 = vld [vmem:[%s1470] sm:%s1463]
                  %1473 = vst [vmem:[%s1471] sm:%s1463] %v1472
                  %v1474 = vld [vmem:[%s1470 + $0x8] sm:%s1463]
                  %1475 = vst [vmem:[%s1471 + $0xc] sm:%s1463] %v1474
                $region162: #{cnn_forward.3} parent=142 // loop_footer
                  %s1469 = sadd.s32 1, %s1465
                $region163: #{cnn_forward.3} parent=142 // loop_footer_branch
                  %1464 = sbr.rel target = $region159
                $region164: #{cnn_forward.3} parent=142 // loop_exit
                  _
              $region143: #{cnn_forward.3} parent=109 // pred_fallthru
                _
            $region110: #{cnn_forward.3} parent=105 // pred_fallthru
              _
            // Predicated region
            $region111: #{cnn_forward.3} parent=105 // pred_check
              %p1076 = pneg %p1072
            $region112: #{cnn_forward.3} parent=105 // pred_check_branch
              %1078 = sbr.rel (%p1076) target = $region114
            $region113: #{cnn_forward.3} parent=105 // pred_region
              %s1079 = sshllo.u32 0, %s1068
              loop: start=0, step=1, limit=1
              $region115: #{cnn_forward.3} parent=113 // loop_pre_header
                _
              $region116: #{cnn_forward.3} parent=113 // loop_header
                %s1081 = sphi 0, %s1085
                %p1082 = scmp.ge.s32.totalorder %s1081, 1
                %s1086 = sphi %s1056, %s1056
                %s1087 = sphi %s1067, %s1067
              $region117: #{cnn_forward.3} parent=113 // loop_header_branch
                %1084 = sbr.rel (%p1082) target = $region121
              $region118: #{cnn_forward.3} parent=113 // loop_body
                %v1088 = vld [vmem:[%s1086] sm:%s1079]
                %1089 = vst [vmem:[%s1087] sm:%s1079] %v1088
                %v1090 = vld [vmem:[%s1086 + $0x8] sm:%s1079]
                %1091 = vst [vmem:[%s1087 + $0xc] sm:%s1079] %v1090
              $region119: #{cnn_forward.3} parent=113 // loop_footer
                %s1085 = sadd.s32 1, %s1081
              $region120: #{cnn_forward.3} parent=113 // loop_footer_branch
                %1080 = sbr.rel target = $region116
              $region121: #{cnn_forward.3} parent=113 // loop_exit
                _
            $region114: #{cnn_forward.3} parent=105 // pred_fallthru
              _
          $region106: #{cnn_forward.3} parent=101 // pred_fallthru
            _
          %1476 = vnop
        $region102: #{cnn_forward.3} parent=93 // pred_fallthru
          _
      $region94: #{cnn_forward.3} parent=5 // pred_fallthru
        _
      %p1477 = scmp.le.s32.totalorder 2, %s9
      // Predicated region
      $region165: #{cnn_forward.3} parent=5 // pred_check
        %p1478 = pneg %p1477
      $region166: #{cnn_forward.3} parent=5 // pred_check_branch
        %1480 = sbr.rel (%p1478) target = $region168
      $region167: #{cnn_forward.3} parent=5 // pred_region
        %s1481 = ssub.s32 %s9, 2
        // Predicated region
        $region169: #{cnn_forward.3} parent=167 // pred_check
          %p1482 = pneg %p106
        $region170: #{cnn_forward.3} parent=167 // pred_check_branch
          %1484 = sbr.rel (%p1482) target = $region172
        $region171: #{cnn_forward.3} parent=167 // pred_region
          %s1485 = sand.u32 %s91, 1
          %s1486 = sand.u32 %s91, 1
          %s1487 = smul.addr %s1486, 16
          %s1488 = scalar_lea.vmem [#allocation3], %s1487
        $region172: #{cnn_forward.3} parent=167 // pred_fallthru
          _
      $region168: #{cnn_forward.3} parent=5 // pred_fallthru
        _
    $region6: #{cnn_forward.3} parent=1 // loop_footer
      %s13 = sadd.s32 1, %s9
    $region7: #{cnn_forward.3} parent=1 // loop_footer_branch
      %8 = sbr.rel target = $region3
    $region8: #{cnn_forward.3} parent=1 // loop_exit
      _

// kernel: cnn_forward.4
$region0: #{cnn_forward.4}
  #allocation0 [shape = 'u32[]', space=smem, size = 0x4, offset = 0x4, fixed_abs, tag = 'smem constant byte address 0x4 - core index']
  #allocation1 [shape = 'u32[144,128]{1,0:T(1,128)}', space=vmem, size = 0x12000, scoped, tag = 'internal scratch']
  %s0 = inlined_call_operand.vmem [shape: bf16[4,250,32], index: 0, kind: input, shape index: {}]
  %s1 = inlined_call_operand.vmem [shape: bf16[20,250], index: 1, kind: input, shape index: {}]
  %s2 = inlined_call_operand.vmem [shape: f32[20,1], index: 2, kind: input, shape index: {}]
  %s3 = inlined_call_operand.vmem [shape: f32[20,1], index: 3, kind: input, shape index: {}]
  %s4 = inlined_call_operand.vmem [shape: f32[20,1], index: 4, kind: input, shape index: {}]
  %s5 = inlined_call_operand.vmem [shape: bf16[20,32], index: 5, kind: output, shape index: {}]
  %s6 = sld [smem:[#allocation0]]
  $region30: #{cnn_forward.4} parent=0
    _
  %s8 = ssub.s32 1, %s6
  %s9 = scalar_select 0, %s8, %s6
  // Predicated region
  $region2: #{cnn_forward.4} parent=0 // pred_check
    _
  $region3: #{cnn_forward.4} parent=0 // pred_check_branch
    %11 = sbr.rel (0) target = $region5
  $region4: #{cnn_forward.4} parent=0 // pred_region
    _
  $region5: #{cnn_forward.4} parent=0 // pred_fallthru
    _
  // Predicated region
  $region6: #{cnn_forward.4} parent=0 // pred_check
    _
  $region7: #{cnn_forward.4} parent=0 // pred_check_branch
    %13 = sbr.rel (0) target = $region9
  $region8: #{cnn_forward.4} parent=0 // pred_region
    _
  $region9: #{cnn_forward.4} parent=0 // pred_fallthru
    _
  // Predicated region
  $region10: #{cnn_forward.4} parent=0 // pred_check
    _
  $region11: #{cnn_forward.4} parent=0 // pred_check_branch
    %15 = sbr.rel (0) target = $region13
  $region12: #{cnn_forward.4} parent=0 // pred_region
    _
  $region13: #{cnn_forward.4} parent=0 // pred_fallthru
    _
  // Predicated region
  $region14: #{cnn_forward.4} parent=0 // pred_check
    _
  $region15: #{cnn_forward.4} parent=0 // pred_check_branch
    %17 = sbr.rel (0) target = $region17
  $region16: #{cnn_forward.4} parent=0 // pred_region
    _
  $region17: #{cnn_forward.4} parent=0 // pred_fallthru
    _
  // Predicated region
  $region18: #{cnn_forward.4} parent=0 // pred_check
    _
  $region19: #{cnn_forward.4} parent=0 // pred_check_branch
    %19 = sbr.rel (0) target = $region21
  $region20: #{cnn_forward.4} parent=0 // pred_region
    _
  $region21: #{cnn_forward.4} parent=0 // pred_fallthru
    _
  %v21 = vld [vmem:[%s1] sm:$0xff]
  %v22 = vld [vmem:[%s1 + $0x8] sm:$0xff]
  %v23 = vld [vmem:[%s1 + $0x10] sm:$0x33]
  %v24 = vld [vmem:[%s0] sm:$0xf]
  %v25 = vld [vmem:[%s0 + $0x4] sm:$0xf]
  %v26 = vld [vmem:[%s0 + $0x8] sm:$0xf]
  %v27 = vld [vmem:[%s0 + $0xc] sm:$0xf]
  %v28 = vld [vmem:[%s0 + $0x10] sm:$0xf]
  %v29 = vld [vmem:[%s0 + $0x14] sm:$0xf]
  %v30 = vld [vmem:[%s0 + $0x18] sm:$0xf]
  %v31 = vld [vmem:[%s0 + $0x1c] sm:$0xf]
  %v32 = vld [vmem:[%s0 + $0x20] sm:$0xf]
  %v33 = vld [vmem:[%s0 + $0x24] sm:$0xf]
  %v34 = vld [vmem:[%s0 + $0x28] sm:$0xf]
  %v35 = vld [vmem:[%s0 + $0x2c] sm:$0xf]
  %v36 = vld [vmem:[%s0 + $0x30] sm:$0xf]
  %v37 = vld [vmem:[%s0 + $0x34] sm:$0xf]
  %v38 = vld [vmem:[%s0 + $0x38] sm:$0xf]
  %v39 = vld [vmem:[%s0 + $0x3c] sm:$0xf]
  %v40 = vld [vmem:[%s0 + $0x40] sm:$0xf]
  %v41 = vld [vmem:[%s0 + $0x44] sm:$0xf]
  %v42 = vld [vmem:[%s0 + $0x48] sm:$0xf]
  %v43 = vld [vmem:[%s0 + $0x4c] sm:$0xf]
  %v44 = vld [vmem:[%s0 + $0x50] sm:$0xf]
  %v45 = vld [vmem:[%s0 + $0x54] sm:$0xf]
  %v46 = vld [vmem:[%s0 + $0x58] sm:$0xf]
  %v47 = vld [vmem:[%s0 + $0x5c] sm:$0xf]
  %v48 = vld [vmem:[%s0 + $0x60] sm:$0xf]
  %v49 = vld [vmem:[%s0 + $0x64] sm:$0xf]
  %v50 = vld [vmem:[%s0 + $0x68] sm:$0xf]
  %v51 = vld [vmem:[%s0 + $0x6c] sm:$0xf]
  %v52 = vld [vmem:[%s0 + $0x70] sm:$0xf]
  %v53 = vld [vmem:[%s0 + $0x74] sm:$0xf]
  %v54 = vld [vmem:[%s0 + $0x78] sm:$0xf]
  %v55 = vld [vmem:[%s0 + $0x7c] sm:$0x1]
  %v59 = vunpack.c.l.b16 %v21
  %v60 = vunpack.c.h.b16 %v21
  %v61 = vunpack.c.l.b16 %v22
  %v62 = vunpack.c.h.b16 %v22
  %v63 = vunpack.c.l.b16 %v23
  %v64 = vunpack.c.h.b16 %v23
  %v65 = vpack.c.b16 %v61, %v59
  %v66 = vpack.c.b16 %v62, %v60
  %v67 = vpack.c.b16 %v63, %v63
  %v68 = vpack.c.b16 %v64, %v64
  %v103 = vunpack.c.l.b16 %v24
  %v104 = vunpack.c.l.b16 %v25
  %v105 = vunpack.c.l.b16 %v26
  %v106 = vunpack.c.l.b16 %v27
  %v107 = vunpack.c.l.b16 %v28
  %v108 = vunpack.c.l.b16 %v29
  %v109 = vunpack.c.l.b16 %v30
  %v110 = vunpack.c.l.b16 %v31
  %v111 = vunpack.c.l.b16 %v32
  %v112 = vunpack.c.l.b16 %v33
  %v113 = vunpack.c.l.b16 %v34
  %v114 = vunpack.c.l.b16 %v35
  %v115 = vunpack.c.l.b16 %v36
  %v116 = vunpack.c.l.b16 %v37
  %v117 = vunpack.c.l.b16 %v38
  %v118 = vunpack.c.l.b16 %v39
  %v119 = vunpack.c.l.b16 %v40
  %v120 = vunpack.c.l.b16 %v41
  %v121 = vunpack.c.l.b16 %v42
  %v122 = vunpack.c.l.b16 %v43
  %v123 = vunpack.c.l.b16 %v44
  %v124 = vunpack.c.l.b16 %v45
  %v125 = vunpack.c.l.b16 %v46
  %v126 = vunpack.c.l.b16 %v47
  %v127 = vunpack.c.l.b16 %v48
  %v128 = vunpack.c.l.b16 %v49
  %v129 = vunpack.c.l.b16 %v50
  %v130 = vunpack.c.l.b16 %v51
  %v131 = vunpack.c.l.b16 %v52
  %v132 = vunpack.c.l.b16 %v53
  %v133 = vunpack.c.l.b16 %v54
  %v134 = vunpack.c.l.b16 %v55
  %v135 = vpack.c.b16 %v104, %v103
  %v136 = vpack.c.b16 %v106, %v105
  %v137 = vpack.c.b16 %v108, %v107
  %v138 = vpack.c.b16 %v110, %v109
  %v139 = vpack.c.b16 %v112, %v111
  %v140 = vpack.c.b16 %v114, %v113
  %v141 = vpack.c.b16 %v116, %v115
  %v142 = vpack.c.b16 %v118, %v117
  %v143 = vpack.c.b16 %v120, %v119
  %v144 = vpack.c.b16 %v122, %v121
  %v145 = vpack.c.b16 %v124, %v123
  %v146 = vpack.c.b16 %v126, %v125
  %v147 = vpack.c.b16 %v128, %v127
  %v148 = vpack.c.b16 %v130, %v129
  %v149 = vpack.c.b16 %v132, %v131
  %v150 = vpack.c.b16 %v134, %v133
  %vm166 = vcmask 998400
  %v168 = vsel %vm166, %v66, 0
  %v171 = vsel %vm166, %v68, 0
  %vm173 = vcmask 1044480
  %v175 = vsel %vm173, %v150, 0
  %177 = vmatprep.subr.bf16.mxu0 0
  %178 = vmatpush1.bf16.msra.mxu0 %v135
  %179 = vmatprep.subr.bf16.mxu0 0
  %180 = vmatpush1.bf16.msra.mxu0 %v136
  %181 = vmatprep.subr.bf16.mxu0 0
  %182 = vmatpush1.bf16.msra.mxu0 %v137
  %183 = vmatprep.subr.bf16.mxu0 0
  %184 = vmatpush1.bf16.msra.mxu0 %v138
  %185 = vmatprep.subr.bf16.mxu0 0
  %186 = vmatpush1.bf16.msra.mxu0 %v139
  %187 = vmatprep.subr.bf16.mxu0 0
  %188 = vmatpush1.bf16.msra.mxu0 %v140
  %189 = vmatprep.subr.bf16.mxu0 0
  %190 = vmatpush1.bf16.msra.mxu0 %v141
  %191 = vmatprep.subr.bf16.mxu0 0
  %192 = vmatpush1.bf16.msra.mxu0 %v142
  %193 = vmatprep.subr.bf16.mxu0 0
  %194 = vmatpush1.bf16.msra.mxu0 %v143
  %195 = vmatprep.subr.bf16.mxu0 0
  %196 = vmatpush1.bf16.msra.mxu0 %v144
  %197 = vmatprep.subr.bf16.mxu0 0
  %198 = vmatpush1.bf16.msra.mxu0 %v145
  %199 = vmatprep.subr.bf16.mxu0 0
  %200 = vmatpush1.bf16.msra.mxu0 %v146
  %201 = vmatprep.subr.bf16.mxu0 0
  %202 = vmatpush1.bf16.msra.mxu0 %v147
  %203 = vmatprep.subr.bf16.mxu0 0
  %204 = vmatpush1.bf16.msra.mxu0 %v148
  %205 = vmatprep.subr.bf16.mxu0 0
  %206 = vmatpush1.bf16.msra.mxu0 %v149
  %207 = vmatprep.subr.bf16.mxu0 0
  %208 = vmatpush1.bf16.msra.mxu0 %v175
  %209 = vmatprep.mubr.bf16.mxu0 %v168
  %210 = vmatmul.mubr.bf16.gmra.mrb[0].mxu0 %v65
  %v211 = vpop.f32.mrb[0].mxu0
  %v212 = vadd.f32 0.0, %v211
  %v213 = vpop.f32.mrb[0].mxu0
  %v214 = vpop.f32.mrb[0].mxu0
  %v215 = vadd.f32 0.0, %v214
  %v216 = vpop.f32.mrb[0].mxu0
  %217 = vmatprep.mubr.bf16.mxu0 %v171
  %218 = vmatmul.mubr.bf16.gmra.mrb[0].mxu0 %v67
  %v219 = vpop.f32.mrb[0].mxu0
  %v220 = vadd.f32 0.0, %v219
  %v221 = vpop.f32.mrb[0].mxu0
  %v222 = vpop.f32.mrb[0].mxu0
  %v223 = vpop.f32.mrb[0].mxu0
  %224 = vdwg.mxu0
  %s225 = scalar_lea.vmem %s0, 128
  %v226 = vld [vmem:[%s225] sm:$0xf]
  %v227 = vld [vmem:[%s225 + $0x4] sm:$0xf]
  %v228 = vld [vmem:[%s225 + $0x8] sm:$0xf]
  %v229 = vld [vmem:[%s225 + $0xc] sm:$0xf]
  %v230 = vld [vmem:[%s225 + $0x10] sm:$0xf]
  %v231 = vld [vmem:[%s225 + $0x14] sm:$0xf]
  %v232 = vld [vmem:[%s225 + $0x18] sm:$0xf]
  %v233 = vld [vmem:[%s225 + $0x1c] sm:$0xf]
  %v234 = vld [vmem:[%s225 + $0x20] sm:$0xf]
  %v235 = vld [vmem:[%s225 + $0x24] sm:$0xf]
  %v236 = vld [vmem:[%s225 + $0x28] sm:$0xf]
  %v237 = vld [vmem:[%s225 + $0x2c] sm:$0xf]
  %v238 = vld [vmem:[%s225 + $0x30] sm:$0xf]
  %v239 = vld [vmem:[%s225 + $0x34] sm:$0xf]
  %v240 = vld [vmem:[%s225 + $0x38] sm:$0xf]
  %v241 = vld [vmem:[%s225 + $0x3c] sm:$0xf]
  %v242 = vld [vmem:[%s225 + $0x40] sm:$0xf]
  %v243 = vld [vmem:[%s225 + $0x44] sm:$0xf]
  %v244 = vld [vmem:[%s225 + $0x48] sm:$0xf]
  %v245 = vld [vmem:[%s225 + $0x4c] sm:$0xf]
  %v246 = vld [vmem:[%s225 + $0x50] sm:$0xf]
  %v247 = vld [vmem:[%s225 + $0x54] sm:$0xf]
  %v248 = vld [vmem:[%s225 + $0x58] sm:$0xf]
  %v249 = vld [vmem:[%s225 + $0x5c] sm:$0xf]
  %v250 = vld [vmem:[%s225 + $0x60] sm:$0xf]
  %v251 = vld [vmem:[%s225 + $0x64] sm:$0xf]
  %v252 = vld [vmem:[%s225 + $0x68] sm:$0xf]
  %v253 = vld [vmem:[%s225 + $0x6c] sm:$0xf]
  %v254 = vld [vmem:[%s225 + $0x70] sm:$0xf]
  %v255 = vld [vmem:[%s225 + $0x74] sm:$0xf]
  %v256 = vld [vmem:[%s225 + $0x78] sm:$0xf]
  %v257 = vld [vmem:[%s225 + $0x7c] sm:$0x1]
  %v290 = vunpack.c.l.b16 %v226
  %v291 = vunpack.c.l.b16 %v227
  %v292 = vunpack.c.l.b16 %v228
  %v293 = vunpack.c.l.b16 %v229
  %v294 = vunpack.c.l.b16 %v230
  %v295 = vunpack.c.l.b16 %v231
  %v296 = vunpack.c.l.b16 %v232
  %v297 = vunpack.c.l.b16 %v233
  %v298 = vunpack.c.l.b16 %v234
  %v299 = vunpack.c.l.b16 %v235
  %v300 = vunpack.c.l.b16 %v236
  %v301 = vunpack.c.l.b16 %v237
  %v302 = vunpack.c.l.b16 %v238
  %v303 = vunpack.c.l.b16 %v239
  %v304 = vunpack.c.l.b16 %v240
  %v305 = vunpack.c.l.b16 %v241
  %v306 = vunpack.c.l.b16 %v242
  %v307 = vunpack.c.l.b16 %v243
  %v308 = vunpack.c.l.b16 %v244
  %v309 = vunpack.c.l.b16 %v245
  %v310 = vunpack.c.l.b16 %v246
  %v311 = vunpack.c.l.b16 %v247
  %v312 = vunpack.c.l.b16 %v248
  %v313 = vunpack.c.l.b16 %v249
  %v314 = vunpack.c.l.b16 %v250
  %v315 = vunpack.c.l.b16 %v251
  %v316 = vunpack.c.l.b16 %v252
  %v317 = vunpack.c.l.b16 %v253
  %v318 = vunpack.c.l.b16 %v254
  %v319 = vunpack.c.l.b16 %v255
  %v320 = vunpack.c.l.b16 %v256
  %v321 = vunpack.c.l.b16 %v257
  %v322 = vpack.c.b16 %v291, %v290
  %v323 = vpack.c.b16 %v293, %v292
  %v324 = vpack.c.b16 %v295, %v294
  %v325 = vpack.c.b16 %v297, %v296
  %v326 = vpack.c.b16 %v299, %v298
  %v327 = vpack.c.b16 %v301, %v300
  %v328 = vpack.c.b16 %v303, %v302
  %v329 = vpack.c.b16 %v305, %v304
  %v330 = vpack.c.b16 %v307, %v306
  %v331 = vpack.c.b16 %v309, %v308
  %v332 = vpack.c.b16 %v311, %v310
  %v333 = vpack.c.b16 %v313, %v312
  %v334 = vpack.c.b16 %v315, %v314
  %v335 = vpack.c.b16 %v317, %v316
  %v336 = vpack.c.b16 %v319, %v318
  %v337 = vpack.c.b16 %v321, %v320
  %v354 = vsel %vm173, %v337, 0
  %356 = vmatprep.subr.bf16.mxu0 0
  %357 = vmatpush1.bf16.msra.mxu0 %v322
  %358 = vmatprep.subr.bf16.mxu0 0
  %359 = vmatpush1.bf16.msra.mxu0 %v323
  %360 = vmatprep.subr.bf16.mxu0 0
  %361 = vmatpush1.bf16.msra.mxu0 %v324
  %362 = vmatprep.subr.bf16.mxu0 0
  %363 = vmatpush1.bf16.msra.mxu0 %v325
  %364 = vmatprep.subr.bf16.mxu0 0
  %365 = vmatpush1.bf16.msra.mxu0 %v326
  %366 = vmatprep.subr.bf16.mxu0 0
  %367 = vmatpush1.bf16.msra.mxu0 %v327
  %368 = vmatprep.subr.bf16.mxu0 0
  %369 = vmatpush1.bf16.msra.mxu0 %v328
  %370 = vmatprep.subr.bf16.mxu0 0
  %371 = vmatpush1.bf16.msra.mxu0 %v329
  %372 = vmatprep.subr.bf16.mxu0 0
  %373 = vmatpush1.bf16.msra.mxu0 %v330
  %374 = vmatprep.subr.bf16.mxu0 0
  %375 = vmatpush1.bf16.msra.mxu0 %v331
  %376 = vmatprep.subr.bf16.mxu0 0
  %377 = vmatpush1.bf16.msra.mxu0 %v332
  %378 = vmatprep.subr.bf16.mxu0 0
  %379 = vmatpush1.bf16.msra.mxu0 %v333
  %380 = vmatprep.subr.bf16.mxu0 0
  %381 = vmatpush1.bf16.msra.mxu0 %v334
  %382 = vmatprep.subr.bf16.mxu0 0
  %383 = vmatpush1.bf16.msra.mxu0 %v335
  %384 = vmatprep.subr.bf16.mxu0 0
  %385 = vmatpush1.bf16.msra.mxu0 %v336
  %386 = vmatprep.subr.bf16.mxu0 0
  %387 = vmatpush1.bf16.msra.mxu0 %v354
  %388 = vmatprep.mubr.bf16.mxu0 %v168
  %389 = vmatmul.mubr.bf16.gmra.mrb[0].mxu0 %v65
  %v390 = vpop.f32.mrb[0].mxu0
  %v391 = vadd.f32 0.0, %v390
  %v392 = vpop.f32.mrb[0].mxu0
  %v393 = vpop.f32.mrb[0].mxu0
  %v394 = vadd.f32 0.0, %v393
  %v395 = vpop.f32.mrb[0].mxu0
  %396 = vmatprep.mubr.bf16.mxu0 %v171
  %397 = vmatmul.mubr.bf16.gmra.mrb[0].mxu0 %v67
  %v398 = vpop.f32.mrb[0].mxu0
  %v399 = vadd.f32 0.0, %v398
  %v400 = vpop.f32.mrb[0].mxu0
  %v401 = vpop.f32.mrb[0].mxu0
  %v402 = vpop.f32.mrb[0].mxu0
  %403 = vdwg.mxu0
  %v404 = vmax.f32 %v212, %v391
  %v405 = vmax.f32 %v215, %v394
  %v406 = vmax.f32 %v220, %v399
  %s407 = scalar_lea.vmem %s0, 256
  %v408 = vld [vmem:[%s407] sm:$0xf]
  %v409 = vld [vmem:[%s407 + $0x4] sm:$0xf]
  %v410 = vld [vmem:[%s407 + $0x8] sm:$0xf]
  %v411 = vld [vmem:[%s407 + $0xc] sm:$0xf]
  %v412 = vld [vmem:[%s407 + $0x10] sm:$0xf]
  %v413 = vld [vmem:[%s407 + $0x14] sm:$0xf]
  %v414 = vld [vmem:[%s407 + $0x18] sm:$0xf]
  %v415 = vld [vmem:[%s407 + $0x1c] sm:$0xf]
  %v416 = vld [vmem:[%s407 + $0x20] sm:$0xf]
  %v417 = vld [vmem:[%s407 + $0x24] sm:$0xf]
  %v418 = vld [vmem:[%s407 + $0x28] sm:$0xf]
  %v419 = vld [vmem:[%s407 + $0x2c] sm:$0xf]
  %v420 = vld [vmem:[%s407 + $0x30] sm:$0xf]
  %v421 = vld [vmem:[%s407 + $0x34] sm:$0xf]
  %v422 = vld [vmem:[%s407 + $0x38] sm:$0xf]
  %v423 = vld [vmem:[%s407 + $0x3c] sm:$0xf]
  %v424 = vld [vmem:[%s407 + $0x40] sm:$0xf]
  %v425 = vld [vmem:[%s407 + $0x44] sm:$0xf]
  %v426 = vld [vmem:[%s407 + $0x48] sm:$0xf]
  %v427 = vld [vmem:[%s407 + $0x4c] sm:$0xf]
  %v428 = vld [vmem:[%s407 + $0x50] sm:$0xf]
  %v429 = vld [vmem:[%s407 + $0x54] sm:$0xf]
  %v430 = vld [vmem:[%s407 + $0x58] sm:$0xf]
  %v431 = vld [vmem:[%s407 + $0x5c] sm:$0xf]
  %v432 = vld [vmem:[%s407 + $0x60] sm:$0xf]
  %v433 = vld [vmem:[%s407 + $0x64] sm:$0xf]
  %v434 = vld [vmem:[%s407 + $0x68] sm:$0xf]
  %v435 = vld [vmem:[%s407 + $0x6c] sm:$0xf]
  %v436 = vld [vmem:[%s407 + $0x70] sm:$0xf]
  %v437 = vld [vmem:[%s407 + $0x74] sm:$0xf]
  %v438 = vld [vmem:[%s407 + $0x78] sm:$0xf]
  %v439 = vld [vmem:[%s407 + $0x7c] sm:$0x1]
  %v472 = vunpack.c.l.b16 %v408
  %v473 = vunpack.c.l.b16 %v409
  %v474 = vunpack.c.l.b16 %v410
  %v475 = vunpack.c.l.b16 %v411
  %v476 = vunpack.c.l.b16 %v412
  %v477 = vunpack.c.l.b16 %v413
  %v478 = vunpack.c.l.b16 %v414
  %v479 = vunpack.c.l.b16 %v415
  %v480 = vunpack.c.l.b16 %v416
  %v481 = vunpack.c.l.b16 %v417
  %v482 = vunpack.c.l.b16 %v418
  %v483 = vunpack.c.l.b16 %v419
  %v484 = vunpack.c.l.b16 %v420
  %v485 = vunpack.c.l.b16 %v421
  %v486 = vunpack.c.l.b16 %v422
  %v487 = vunpack.c.l.b16 %v423
  %v488 = vunpack.c.l.b16 %v424
  %v489 = vunpack.c.l.b16 %v425
  %v490 = vunpack.c.l.b16 %v426
  %v491 = vunpack.c.l.b16 %v427
  %v492 = vunpack.c.l.b16 %v428
  %v493 = vunpack.c.l.b16 %v429
  %v494 = vunpack.c.l.b16 %v430
  %v495 = vunpack.c.l.b16 %v431
  %v496 = vunpack.c.l.b16 %v432
  %v497 = vunpack.c.l.b16 %v433
  %v498 = vunpack.c.l.b16 %v434
  %v499 = vunpack.c.l.b16 %v435
  %v500 = vunpack.c.l.b16 %v436
  %v501 = vunpack.c.l.b16 %v437
  %v502 = vunpack.c.l.b16 %v438
  %v503 = vunpack.c.l.b16 %v439
  %v504 = vpack.c.b16 %v473, %v472
  %v505 = vpack.c.b16 %v475, %v474
  %v506 = vpack.c.b16 %v477, %v476
  %v507 = vpack.c.b16 %v479, %v478
  %v508 = vpack.c.b16 %v481, %v480
  %v509 = vpack.c.b16 %v483, %v482
  %v510 = vpack.c.b16 %v485, %v484
  %v511 = vpack.c.b16 %v487, %v486
  %v512 = vpack.c.b16 %v489, %v488
  %v513 = vpack.c.b16 %v491, %v490
  %v514 = vpack.c.b16 %v493, %v492
  %v515 = vpack.c.b16 %v495, %v494
  %v516 = vpack.c.b16 %v497, %v496
  %v517 = vpack.c.b16 %v499, %v498
  %v518 = vpack.c.b16 %v501, %v500
  %v519 = vpack.c.b16 %v503, %v502
  %v536 = vsel %vm173, %v519, 0
  %538 = vmatprep.subr.bf16.mxu0 0
  %539 = vmatpush1.bf16.msra.mxu0 %v504
  %540 = vmatprep.subr.bf16.mxu0 0
  %541 = vmatpush1.bf16.msra.mxu0 %v505
  %542 = vmatprep.subr.bf16.mxu0 0
  %543 = vmatpush1.bf16.msra.mxu0 %v506
  %544 = vmatprep.subr.bf16.mxu0 0
  %545 = vmatpush1.bf16.msra.mxu0 %v507
  %546 = vmatprep.subr.bf16.mxu0 0
  %547 = vmatpush1.bf16.msra.mxu0 %v508
  %548 = vmatprep.subr.bf16.mxu0 0
  %549 = vmatpush1.bf16.msra.mxu0 %v509
  %550 = vmatprep.subr.bf16.mxu0 0
  %551 = vmatpush1.bf16.msra.mxu0 %v510
  %552 = vmatprep.subr.bf16.mxu0 0
  %553 = vmatpush1.bf16.msra.mxu0 %v511
  %554 = vmatprep.subr.bf16.mxu0 0
  %555 = vmatpush1.bf16.msra.mxu0 %v512
  %556 = vmatprep.subr.bf16.mxu0 0
  %557 = vmatpush1.bf16.msra.mxu0 %v513
  %558 = vmatprep.subr.bf16.mxu0 0
  %559 = vmatpush1.bf16.msra.mxu0 %v514
  %560 = vmatprep.subr.bf16.mxu0 0
  %561 = vmatpush1.bf16.msra.mxu0 %v515
  %562 = vmatprep.subr.bf16.mxu0 0
  %563 = vmatpush1.bf16.msra.mxu0 %v516
  %564 = vmatprep.subr.bf16.mxu0 0
  %565 = vmatpush1.bf16.msra.mxu0 %v517
  %566 = vmatprep.subr.bf16.mxu0 0
  %567 = vmatpush1.bf16.msra.mxu0 %v518
  %568 = vmatprep.subr.bf16.mxu0 0
  %569 = vmatpush1.bf16.msra.mxu0 %v536
  %570 = vmatprep.mubr.bf16.mxu0 %v168
  %571 = vmatmul.mubr.bf16.gmra.mrb[0].mxu0 %v65
  %v572 = vpop.f32.mrb[0].mxu0
  %v573 = vadd.f32 0.0, %v572
  %v574 = vpop.f32.mrb[0].mxu0
  %v575 = vpop.f32.mrb[0].mxu0
  %v576 = vadd.f32 0.0, %v575
  %v577 = vpop.f32.mrb[0].mxu0
  %578 = vmatprep.mubr.bf16.mxu0 %v171
  %579 = vmatmul.mubr.bf16.gmra.mrb[0].mxu0 %v67
  %v580 = vpop.f32.mrb[0].mxu0
  %v581 = vadd.f32 0.0, %v580
  %v582 = vpop.f32.mrb[0].mxu0
  %v583 = vpop.f32.mrb[0].mxu0
  %v584 = vpop.f32.mrb[0].mxu0
  %585 = vdwg.mxu0
  %v586 = vmax.f32 %v404, %v573
  %v587 = vmax.f32 %v405, %v576
  %v588 = vmax.f32 %v406, %v581
  %s589 = scalar_lea.vmem %s0, 384
  %v590 = vld [vmem:[%s589] sm:$0xf]
  %v591 = vld [vmem:[%s589 + $0x4] sm:$0xf]
  %v592 = vld [vmem:[%s589 + $0x8] sm:$0xf]
  %v593 = vld [vmem:[%s589 + $0xc] sm:$0xf]
  %v594 = vld [vmem:[%s589 + $0x10] sm:$0xf]
  %v595 = vld [vmem:[%s589 + $0x14] sm:$0xf]
  %v596 = vld [vmem:[%s589 + $0x18] sm:$0xf]
  %v597 = vld [vmem:[%s589 + $0x1c] sm:$0xf]
  %v598 = vld [vmem:[%s589 + $0x20] sm:$0xf]
  %v599 = vld [vmem:[%s589 + $0x24] sm:$0xf]
  %v600 = vld [vmem:[%s589 + $0x28] sm:$0xf]
  %v601 = vld [vmem:[%s589 + $0x2c] sm:$0xf]
  %v602 = vld [vmem:[%s589 + $0x30] sm:$0xf]
  %v603 = vld [vmem:[%s589 + $0x34] sm:$0xf]
  %v604 = vld [vmem:[%s589 + $0x38] sm:$0xf]
  %v605 = vld [vmem:[%s589 + $0x3c] sm:$0xf]
  %v606 = vld [vmem:[%s589 + $0x40] sm:$0xf]
  %v607 = vld [vmem:[%s589 + $0x44] sm:$0xf]
  %v608 = vld [vmem:[%s589 + $0x48] sm:$0xf]
  %v609 = vld [vmem:[%s589 + $0x4c] sm:$0xf]
  %v610 = vld [vmem:[%s589 + $0x50] sm:$0xf]
  %v611 = vld [vmem:[%s589 + $0x54] sm:$0xf]
  %v612 = vld [vmem:[%s589 + $0x58] sm:$0xf]
  %v613 = vld [vmem:[%s589 + $0x5c] sm:$0xf]
  %v614 = vld [vmem:[%s589 + $0x60] sm:$0xf]
  %v615 = vld [vmem:[%s589 + $0x64] sm:$0xf]
  %v616 = vld [vmem:[%s589 + $0x68] sm:$0xf]
  %v617 = vld [vmem:[%s589 + $0x6c] sm:$0xf]
  %v618 = vld [vmem:[%s589 + $0x70] sm:$0xf]
  %v619 = vld [vmem:[%s589 + $0x74] sm:$0xf]
  %v620 = vld [vmem:[%s589 + $0x78] sm:$0xf]
  %v621 = vld [vmem:[%s589 + $0x7c] sm:$0x1]
  %v654 = vunpack.c.l.b16 %v590
  %v655 = vunpack.c.l.b16 %v591
  %v656 = vunpack.c.l.b16 %v592
  %v657 = vunpack.c.l.b16 %v593
  %v658 = vunpack.c.l.b16 %v594
  %v659 = vunpack.c.l.b16 %v595
  %v660 = vunpack.c.l.b16 %v596
  %v661 = vunpack.c.l.b16 %v597
  %v662 = vunpack.c.l.b16 %v598
  %v663 = vunpack.c.l.b16 %v599
  %v664 = vunpack.c.l.b16 %v600
  %v665 = vunpack.c.l.b16 %v601
  %v666 = vunpack.c.l.b16 %v602
  %v667 = vunpack.c.l.b16 %v603
  %v668 = vunpack.c.l.b16 %v604
  %v669 = vunpack.c.l.b16 %v605
  %v670 = vunpack.c.l.b16 %v606
  %v671 = vunpack.c.l.b16 %v607
  %v672 = vunpack.c.l.b16 %v608
  %v673 = vunpack.c.l.b16 %v609
  %v674 = vunpack.c.l.b16 %v610
  %v675 = vunpack.c.l.b16 %v611
  %v676 = vunpack.c.l.b16 %v612
  %v677 = vunpack.c.l.b16 %v613
  %v678 = vunpack.c.l.b16 %v614
  %v679 = vunpack.c.l.b16 %v615
  %v680 = vunpack.c.l.b16 %v616
  %v681 = vunpack.c.l.b16 %v617
  %v682 = vunpack.c.l.b16 %v618
  %v683 = vunpack.c.l.b16 %v619
  %v684 = vunpack.c.l.b16 %v620
  %v685 = vunpack.c.l.b16 %v621
  %v686 = vpack.c.b16 %v655, %v654
  %v687 = vpack.c.b16 %v657, %v656
  %v688 = vpack.c.b16 %v659, %v658
  %v689 = vpack.c.b16 %v661, %v660
  %v690 = vpack.c.b16 %v663, %v662
  %v691 = vpack.c.b16 %v665, %v664
  %v692 = vpack.c.b16 %v667, %v666
  %v693 = vpack.c.b16 %v669, %v668
  %v694 = vpack.c.b16 %v671, %v670
  %v695 = vpack.c.b16 %v673, %v672
  %v696 = vpack.c.b16 %v675, %v674
  %v697 = vpack.c.b16 %v677, %v676
  %v698 = vpack.c.b16 %v679, %v678
  %v699 = vpack.c.b16 %v681, %v680
  %v700 = vpack.c.b16 %v683, %v682
  %v701 = vpack.c.b16 %v685, %v684
  %v718 = vsel %vm173, %v701, 0
  %720 = vmatprep.subr.bf16.mxu0 0
  %721 = vmatpush1.bf16.msra.mxu0 %v686
  %722 = vmatprep.subr.bf16.mxu0 0
  %723 = vmatpush1.bf16.msra.mxu0 %v687
  %724 = vmatprep.subr.bf16.mxu0 0
  %725 = vmatpush1.bf16.msra.mxu0 %v688
  %726 = vmatprep.subr.bf16.mxu0 0
  %727 = vmatpush1.bf16.msra.mxu0 %v689
  %728 = vmatprep.subr.bf16.mxu0 0
  %729 = vmatpush1.bf16.msra.mxu0 %v690
  %730 = vmatprep.subr.bf16.mxu0 0
  %731 = vmatpush1.bf16.msra.mxu0 %v691
  %732 = vmatprep.subr.bf16.mxu0 0
  %733 = vmatpush1.bf16.msra.mxu0 %v692
  %734 = vmatprep.subr.bf16.mxu0 0
  %735 = vmatpush1.bf16.msra.mxu0 %v693
  %736 = vmatprep.subr.bf16.mxu0 0
  %737 = vmatpush1.bf16.msra.mxu0 %v694
  %738 = vmatprep.subr.bf16.mxu0 0
  %739 = vmatpush1.bf16.msra.mxu0 %v695
  %740 = vmatprep.subr.bf16.mxu0 0
  %741 = vmatpush1.bf16.msra.mxu0 %v696
  %742 = vmatprep.subr.bf16.mxu0 0
  %743 = vmatpush1.bf16.msra.mxu0 %v697
  %744 = vmatprep.subr.bf16.mxu0 0
  %745 = vmatpush1.bf16.msra.mxu0 %v698
  %746 = vmatprep.subr.bf16.mxu0 0
  %747 = vmatpush1.bf16.msra.mxu0 %v699
  %748 = vmatprep.subr.bf16.mxu0 0
  %749 = vmatpush1.bf16.msra.mxu0 %v700
  %750 = vmatprep.subr.bf16.mxu0 0
  %751 = vmatpush1.bf16.msra.mxu0 %v718
  %752 = vmatprep.mubr.bf16.mxu0 %v168
  %753 = vmatmul.mubr.bf16.gmra.mrb[0].mxu0 %v65
  %v754 = vpop.f32.mrb[0].mxu0
  %v755 = vadd.f32 0.0, %v754
  %v756 = vpop.f32.mrb[0].mxu0
  %v757 = vpop.f32.mrb[0].mxu0
  %v758 = vadd.f32 0.0, %v757
  %v759 = vpop.f32.mrb[0].mxu0
  %760 = vmatprep.mubr.bf16.mxu0 %v171
  %761 = vmatmul.mubr.bf16.gmra.mrb[0].mxu0 %v67
  %v762 = vpop.f32.mrb[0].mxu0
  %v763 = vadd.f32 0.0, %v762
  %v764 = vpop.f32.mrb[0].mxu0
  %v765 = vpop.f32.mrb[0].mxu0
  %v766 = vpop.f32.mrb[0].mxu0
  %767 = vdwg.mxu0
  %v768 = vmax.f32 %v586, %v755
  %v769 = vmax.f32 %v587, %v758
  %v770 = vmax.f32 %v588, %v763
  %v771 = vld [vmem:[%s2] sm:$0xff]
  %v772 = vld [vmem:[%s2 + $0x8] sm:$0xff]
  %v773 = vld [vmem:[%s2 + $0x10] sm:$0xf]
  %775 = vset.pattern.permute.xlu0 0
  %776 = vperm.xlu0 %775, %v771
  %v777 = vpop.permute.xlu0 %776
  %780 = vset.pattern.permute.xlu0 0
  %781 = vperm.xlu0 %780, %v772
  %v782 = vpop.permute.xlu0 %781
  %785 = vset.pattern.permute.xlu0 0
  %786 = vperm.xlu0 %785, %v773
  %v787 = vpop.permute.xlu0 %786
  %v789 = vadd.f32 %v768, %v777
  %v790 = vadd.f32 %v769, %v782
  %v791 = vadd.f32 %v770, %v787
  %v792 = vmax.f32 %v789, 0.0
  %v793 = vmax.f32 %v790, 0.0
  %v794 = vmax.f32 %v791, 0.0
  %v795 = vld [vmem:[%s3] sm:$0xff]
  %v796 = vld [vmem:[%s3 + $0x8] sm:$0xff]
  %v797 = vld [vmem:[%s3 + $0x10] sm:$0xf]
  %799 = vset.pattern.permute.xlu0 0
  %800 = vperm.xlu0 %799, %v795
  %v801 = vpop.permute.xlu0 %800
  %804 = vset.pattern.permute.xlu0 0
  %805 = vperm.xlu0 %804, %v796
  %v806 = vpop.permute.xlu0 %805
  %809 = vset.pattern.permute.xlu0 0
  %810 = vperm.xlu0 %809, %v797
  %v811 = vpop.permute.xlu0 %810
  %v813 = vmul.f32 %v792, %v801
  %v814 = vmul.f32 %v793, %v806
  %v815 = vmul.f32 %v794, %v811
  %v816 = vld [vmem:[%s4] sm:$0xff]
  %v817 = vld [vmem:[%s4 + $0x8] sm:$0xff]
  %v818 = vld [vmem:[%s4 + $0x10] sm:$0xf]
  %820 = vset.pattern.permute.xlu0 0
  %821 = vperm.xlu0 %820, %v816
  %v822 = vpop.permute.xlu0 %821
  %825 = vset.pattern.permute.xlu0 0
  %826 = vperm.xlu0 %825, %v817
  %v827 = vpop.permute.xlu0 %826
  %830 = vset.pattern.permute.xlu0 0
  %831 = vperm.xlu0 %830, %v818
  %v832 = vpop.permute.xlu0 %831
  %v834 = vadd.f32 %v813, %v822
  %v835 = vadd.f32 %v814, %v827
  %v836 = vadd.f32 %v815, %v832
  %v837 = vpack.c.bf16 %v835, %v834
  %v838 = vpack.c.bf16 %v836, %v836
  %v841 = vunpack.c.l.b16 %v837
  %v842 = vunpack.c.h.b16 %v837
  %v843 = vunpack.c.l.b16 %v838
  %v844 = vpack.c.b16 %v841, %v841
  %v845 = vpack.c.b16 %v842, %v842
  %v846 = vpack.c.b16 %v843, %v843
  %vm850 = vcmask 257024
  %851 = vst.msk [vmem:[%s5] sm:$0xf] %vm850, %v844
  %852 = vst.msk [vmem:[%s5 + $0x4] sm:$0xf] %vm850, %v845
  %vm853 = vcmask 254976
  %854 = vst.msk [vmem:[%s5 + $0x8] sm:$0x3] %vm853, %v846
  // Predicated region
  $region22: #{cnn_forward.4} parent=0 // pred_check
    _
  $region23: #{cnn_forward.4} parent=0 // pred_check_branch
    %856 = sbr.rel (0) target = $region25
  $region24: #{cnn_forward.4} parent=0 // pred_region
    _
  $region25: #{cnn_forward.4} parent=0 // pred_fallthru
    _
  // Predicated region
  $region26: #{cnn_forward.4} parent=0 // pred_check
    _
  $region27: #{cnn_forward.4} parent=0 // pred_check_branch
    %858 = sbr.rel (0) target = $region29
  $region28: #{cnn_forward.4} parent=0 // pred_region
    _
  $region29: #{cnn_forward.4} parent=0 // pred_fallthru
    _

// kernel: cnn_forward.5
$region0: #{cnn_forward.5}
  #allocation0 [shape = 'u32[]', space=smem, size = 0x4, offset = 0x4, fixed_abs, tag = 'smem constant byte address 0x4 - core index']
  #allocation1 [shape = 'u32[144,128]{1,0:T(1,128)}', space=vmem, size = 0x12000, scoped, tag = 'internal scratch']
  %s0 = inlined_call_operand.vmem [shape: bf16[2,320], index: 0, kind: input, shape index: {}]
  %s1 = inlined_call_operand.vmem [shape: bf16[320,50], index: 1, kind: input, shape index: {}]
  %s2 = inlined_call_operand.vmem [shape: f32[1,50], index: 2, kind: input, shape index: {}]
  %s3 = inlined_call_operand.vmem [shape: bf16[50,10], index: 3, kind: input, shape index: {}]
  %s4 = inlined_call_operand.vmem [shape: f32[1,10], index: 4, kind: input, shape index: {}]
  %s5 = inlined_call_operand.hbm [shape: f32[2,10], index: 5, kind: output, shape index: {}]
  %s6 = sld [smem:[#allocation0]]
  $region30: #{cnn_forward.5} parent=0
    _
  %s8 = ssub.s32 1, %s6
  %s9 = scalar_select 0, %s8, %s6
  $region1: #{cnn_forward.5} parent=0
    #allocation2 [shape = 'u8[1024]{0}', space=vmem, size = 0x400, scoped, tag = 'output window, operand 0, single buffered']
    #allocation3 [shape = 's32[1]{0}', space=sflag, size = 0x4, scoped, tag = 'scoped memory for cnn_forward.5']
    %10 = vsyncpa [#allocation3], 0
    // Predicated region
    $region2: #{cnn_forward.5} parent=1 // pred_check
      _
    $region3: #{cnn_forward.5} parent=1 // pred_check_branch
      %12 = sbr.rel (0) target = $region5
    $region4: #{cnn_forward.5} parent=1 // pred_region
      _
    $region5: #{cnn_forward.5} parent=1 // pred_fallthru
      _
    // Predicated region
    $region6: #{cnn_forward.5} parent=1 // pred_check
      _
    $region7: #{cnn_forward.5} parent=1 // pred_check_branch
      %14 = sbr.rel (0) target = $region9
    $region8: #{cnn_forward.5} parent=1 // pred_region
      _
    $region9: #{cnn_forward.5} parent=1 // pred_fallthru
      _
    // Predicated region
    $region10: #{cnn_forward.5} parent=1 // pred_check
      _
    $region11: #{cnn_forward.5} parent=1 // pred_check_branch
      %16 = sbr.rel (0) target = $region13
    $region12: #{cnn_forward.5} parent=1 // pred_region
      _
    $region13: #{cnn_forward.5} parent=1 // pred_fallthru
      _
    // Predicated region
    $region14: #{cnn_forward.5} parent=1 // pred_check
      _
    $region15: #{cnn_forward.5} parent=1 // pred_check_branch
      %18 = sbr.rel (0) target = $region17
    $region16: #{cnn_forward.5} parent=1 // pred_region
      _
    $region17: #{cnn_forward.5} parent=1 // pred_fallthru
      _
    // Predicated region
    $region18: #{cnn_forward.5} parent=1 // pred_check
      _
    $region19: #{cnn_forward.5} parent=1 // pred_check_branch
      %20 = sbr.rel (0) target = $region21
    $region20: #{cnn_forward.5} parent=1 // pred_region
      _
    $region21: #{cnn_forward.5} parent=1 // pred_fallthru
      _
    %v22 = vld [vmem:[%s0] sm:$0x7]
    %v23 = vld [vmem:[%s1] sm:$0xf]
    %v24 = vld [vmem:[%s1 + $0x4] sm:$0xf]
    %v25 = vld [vmem:[%s1 + $0x8] sm:$0xf]
    %v26 = vld [vmem:[%s1 + $0xc] sm:$0xf]
    %v27 = vld [vmem:[%s1 + $0x10] sm:$0xf]
    %v28 = vld [vmem:[%s1 + $0x14] sm:$0xf]
    %v29 = vld [vmem:[%s1 + $0x18] sm:$0xf]
    %v30 = vld [vmem:[%s1 + $0x1c] sm:$0xf]
    %v31 = vld [vmem:[%s1 + $0x20] sm:$0xf]
    %v32 = vld [vmem:[%s1 + $0x24] sm:$0xf]
    %v33 = vld [vmem:[%s1 + $0x28] sm:$0xf]
    %v34 = vld [vmem:[%s1 + $0x2c] sm:$0xf]
    %v35 = vld [vmem:[%s1 + $0x30] sm:$0xf]
    %v36 = vld [vmem:[%s1 + $0x34] sm:$0xf]
    %v37 = vld [vmem:[%s1 + $0x38] sm:$0xf]
    %v38 = vld [vmem:[%s1 + $0x3c] sm:$0xf]
    %v39 = vld [vmem:[%s1 + $0x40] sm:$0xf]
    %v40 = vld [vmem:[%s1 + $0x44] sm:$0xf]
    %v41 = vld [vmem:[%s1 + $0x48] sm:$0xf]
    %v42 = vld [vmem:[%s1 + $0x4c] sm:$0xf]
    %v43 = vld [vmem:[%s1 + $0x50] sm:$0xf]
    %v44 = vld [vmem:[%s1 + $0x54] sm:$0xf]
    %v45 = vld [vmem:[%s1 + $0x58] sm:$0xf]
    %v46 = vld [vmem:[%s1 + $0x5c] sm:$0xf]
    %v47 = vld [vmem:[%s1 + $0x60] sm:$0xf]
    %v48 = vld [vmem:[%s1 + $0x64] sm:$0xf]
    %v49 = vld [vmem:[%s1 + $0x68] sm:$0xf]
    %v50 = vld [vmem:[%s1 + $0x6c] sm:$0xf]
    %v51 = vld [vmem:[%s1 + $0x70] sm:$0xf]
    %v52 = vld [vmem:[%s1 + $0x74] sm:$0xf]
    %v53 = vld [vmem:[%s1 + $0x78] sm:$0xf]
    %v54 = vld [vmem:[%s1 + $0x7c] sm:$0xf]
    %v55 = vld [vmem:[%s1 + $0x80] sm:$0xf]
    %v56 = vld [vmem:[%s1 + $0x84] sm:$0xf]
    %v57 = vld [vmem:[%s1 + $0x88] sm:$0xf]
    %v58 = vld [vmem:[%s1 + $0x8c] sm:$0xf]
    %v59 = vld [vmem:[%s1 + $0x90] sm:$0xf]
    %v60 = vld [vmem:[%s1 + $0x94] sm:$0xf]
    %v61 = vld [vmem:[%s1 + $0x98] sm:$0xf]
    %v62 = vld [vmem:[%s1 + $0x9c] sm:$0xf]
    %v63 = vld [vmem:[%s2] sm:$0x1]
    %v65 = vlaneseq
    %v66 = vshrl.u32 %v65, 7
    %v67 = vsub.s32 0, %v66
    %v68 = vrot.slane %v63, %v67
    %v72 = vunpack.c.l.s4 1966171168
    %v73 = vunpack.c.0.s8 %v72
    %v74 = vlaneseq
    %v75 = vshrl.u32 %v74, 7
    %v76 = vsub.s32 %v73, %v75
    %v77 = vrot.slane %v22, %v76
    %v78 = vcombine.high %v77, %v77
    %v80 = vunpack.c.l.s4 1966171168
    %v81 = vunpack.c.0.s8 %v80
    %v82 = vlaneseq
    %v83 = vshrl.u32 %v82, 7
    %v84 = vsub.s32 %v81, %v83
    %v85 = vrot.slane %v77, %v84
    %v87 = vunpack.c.l.s4 1966171168
    %v88 = vunpack.c.0.s8 %v87
    %v89 = vlaneseq
    %v90 = vshrl.u32 %v89, 7
    %v91 = vsub.s32 %v88, %v90
    %v92 = vrot.slane %v78, %v91
    %v93 = vcombine.high %v85, %v85
    %v136 = vunpack.c.l.b16 %v23
    %v137 = vunpack.c.l.b16 %v24
    %v138 = vunpack.c.l.b16 %v25
    %v139 = vunpack.c.l.b16 %v26
    %v140 = vunpack.c.l.b16 %v27
    %v141 = vunpack.c.l.b16 %v28
    %v142 = vunpack.c.l.b16 %v29
    %v143 = vunpack.c.l.b16 %v30
    %v144 = vunpack.c.l.b16 %v31
    %v145 = vunpack.c.l.b16 %v32
    %v146 = vunpack.c.l.b16 %v33
    %v147 = vunpack.c.l.b16 %v34
    %v148 = vunpack.c.l.b16 %v35
    %v149 = vunpack.c.l.b16 %v36
    %v150 = vunpack.c.l.b16 %v37
    %v151 = vunpack.c.l.b16 %v38
    %v152 = vunpack.c.l.b16 %v39
    %v153 = vunpack.c.l.b16 %v40
    %v154 = vunpack.c.l.b16 %v41
    %v155 = vunpack.c.l.b16 %v42
    %v156 = vunpack.c.l.b16 %v43
    %v157 = vunpack.c.l.b16 %v44
    %v158 = vunpack.c.l.b16 %v45
    %v159 = vunpack.c.l.b16 %v46
    %v160 = vunpack.c.l.b16 %v47
    %v161 = vunpack.c.l.b16 %v48
    %v162 = vunpack.c.l.b16 %v49
    %v163 = vunpack.c.l.b16 %v50
    %v164 = vunpack.c.l.b16 %v51
    %v165 = vunpack.c.l.b16 %v52
    %v166 = vunpack.c.l.b16 %v53
    %v167 = vunpack.c.l.b16 %v54
    %v168 = vunpack.c.l.b16 %v55
    %v169 = vunpack.c.l.b16 %v56
    %v170 = vunpack.c.l.b16 %v57
    %v171 = vunpack.c.l.b16 %v58
    %v172 = vunpack.c.l.b16 %v59
    %v173 = vunpack.c.l.b16 %v60
    %v174 = vunpack.c.l.b16 %v61
    %v175 = vunpack.c.l.b16 %v62
    %v176 = vpack.c.b16 %v137, %v136
    %v177 = vpack.c.b16 %v139, %v138
    %v178 = vpack.c.b16 %v141, %v140
    %v179 = vpack.c.b16 %v143, %v142
    %v180 = vpack.c.b16 %v145, %v144
    %v181 = vpack.c.b16 %v147, %v146
    %v182 = vpack.c.b16 %v149, %v148
    %v183 = vpack.c.b16 %v151, %v150
    %v184 = vpack.c.b16 %v153, %v152
    %v185 = vpack.c.b16 %v155, %v154
    %v186 = vpack.c.b16 %v157, %v156
    %v187 = vpack.c.b16 %v159, %v158
    %v188 = vpack.c.b16 %v161, %v160
    %v189 = vpack.c.b16 %v163, %v162
    %v190 = vpack.c.b16 %v165, %v164
    %v191 = vpack.c.b16 %v167, %v166
    %v192 = vpack.c.b16 %v169, %v168
    %v193 = vpack.c.b16 %v171, %v170
    %v194 = vpack.c.b16 %v173, %v172
    %v195 = vpack.c.b16 %v175, %v174
    %vm216 = vcmask 523264
    %v218 = vsel %vm216, %v93, 0
    %220 = vmatprep.subr.bf16.mxu0 0
    %221 = vmatpush1.bf16.msra.mxu0 %v176
    %222 = vmatprep.subr.bf16.mxu0 0
    %223 = vmatpush1.bf16.msra.mxu0 %v177
    %224 = vmatprep.subr.bf16.mxu0 0
    %225 = vmatpush1.bf16.msra.mxu0 %v178
    %226 = vmatprep.subr.bf16.mxu0 0
    %227 = vmatpush1.bf16.msra.mxu0 %v179
    %228 = vmatprep.subr.bf16.mxu0 0
    %229 = vmatpush1.bf16.msra.mxu0 %v180
    %230 = vmatprep.subr.bf16.mxu0 0
    %231 = vmatpush1.bf16.msra.mxu0 %v181
    %232 = vmatprep.subr.bf16.mxu0 0
    %233 = vmatpush1.bf16.msra.mxu0 %v182
    %234 = vmatprep.subr.bf16.mxu0 0
    %235 = vmatpush1.bf16.msra.mxu0 %v183
    %236 = vmatprep.subr.bf16.mxu0 0
    %237 = vmatpush1.bf16.msra.mxu0 %v184
    %238 = vmatprep.subr.bf16.mxu0 0
    %239 = vmatpush1.bf16.msra.mxu0 %v185
    %240 = vmatprep.subr.bf16.mxu0 0
    %241 = vmatpush1.bf16.msra.mxu0 %v186
    %242 = vmatprep.subr.bf16.mxu0 0
    %243 = vmatpush1.bf16.msra.mxu0 %v187
    %244 = vmatprep.subr.bf16.mxu0 0
    %245 = vmatpush1.bf16.msra.mxu0 %v188
    %246 = vmatprep.subr.bf16.mxu0 0
    %247 = vmatpush1.bf16.msra.mxu0 %v189
    %248 = vmatprep.subr.bf16.mxu0 0
    %249 = vmatpush1.bf16.msra.mxu0 %v190
    %250 = vmatprep.subr.bf16.mxu0 0
    %251 = vmatpush1.bf16.msra.mxu0 %v191
    %252 = vmatprep.mubr.bf16.mxu0 %v92
    %253 = vmatmul.mubr.bf16.gmra.mrb[0].mxu0 %v85
    %v254 = vpop.f32.mrb[0].mxu0
    %v255 = vadd.f32 %v68, %v254
    %v256 = vpop.f32.mrb[0].mxu0
    %v257 = vpop.f32.mrb[0].mxu0
    %v258 = vpop.f32.mrb[0].mxu0
    %259 = vdwg.mxu0
    %260 = vmatprep.subr.bf16.mxu0 0
    %261 = vmatpush1.bf16.msra.mxu0 %v192
    %262 = vmatprep.subr.bf16.mxu0 0
    %263 = vmatpush1.bf16.msra.mxu0 %v193
    %264 = vmatprep.subr.bf16.mxu0 0
    %265 = vmatpush1.bf16.msra.mxu0 %v194
    %266 = vmatprep.subr.bf16.mxu0 0
    %267 = vmatpush1.bf16.msra.mxu0 %v195
    %268 = vmatprep.subr.bf16.mxu0 0
    %269 = vmatpush1.bf16.msra.mxu0 0
    %270 = vmatprep.subr.bf16.mxu0 0
    %271 = vmatpush1.bf16.msra.mxu0 0
    %272 = vmatprep.subr.bf16.mxu0 0
    %273 = vmatpush1.bf16.msra.mxu0 0
    %274 = vmatprep.subr.bf16.mxu0 0
    %275 = vmatpush1.bf16.msra.mxu0 0
    %276 = vmatprep.subr.bf16.mxu0 0
    %277 = vmatpush1.bf16.msra.mxu0 0
    %278 = vmatprep.subr.bf16.mxu0 0
    %279 = vmatpush1.bf16.msra.mxu0 0
    %280 = vmatprep.subr.bf16.mxu0 0
    %281 = vmatpush1.bf16.msra.mxu0 0
    %282 = vmatprep.subr.bf16.mxu0 0
    %283 = vmatpush1.bf16.msra.mxu0 0
    %284 = vmatprep.subr.bf16.mxu0 0
    %285 = vmatpush1.bf16.msra.mxu0 0
    %286 = vmatprep.subr.bf16.mxu0 0
    %287 = vmatpush1.bf16.msra.mxu0 0
    %288 = vmatprep.subr.bf16.mxu0 0
    %289 = vmatpush1.bf16.msra.mxu0 0
    %290 = vmatprep.subr.bf16.mxu0 0
    %291 = vmatpush1.bf16.msra.mxu0 0
    %292 = vmatprep.mubr.bf16.mxu0 0
    %293 = vmatmul.mubr.bf16.gmra.mrb[0].mxu0 %v218
    %v294 = vpop.f32.mrb[0].mxu0
    %v295 = vadd.f32 %v255, %v294
    %v296 = vpop.f32.mrb[0].mxu0
    %v297 = vpop.f32.mrb[0].mxu0
    %v298 = vpop.f32.mrb[0].mxu0
    %299 = vdwg.mxu0
    %v300 = vmax.f32 %v295, 0.0
    %v301 = vpack.c.bf16 %v300, %v300
    %v302 = vld [vmem:[%s3] sm:$0xf]
    %v303 = vld [vmem:[%s3 + $0x4] sm:$0xf]
    %v304 = vld [vmem:[%s3 + $0x8] sm:$0xf]
    %v305 = vld [vmem:[%s3 + $0xc] sm:$0xf]
    %v306 = vld [vmem:[%s3 + $0x10] sm:$0xf]
    %v307 = vld [vmem:[%s3 + $0x14] sm:$0xf]
    %v308 = vld [vmem:[%s3 + $0x18] sm:$0x1]
    %v309 = vld [vmem:[%s4] sm:$0x1]
    %v311 = vlaneseq
    %v312 = vshrl.u32 %v311, 7
    %v313 = vsub.s32 0, %v312
    %v314 = vrot.slane %v309, %v313
    %v323 = vunpack.c.l.b16 %v302
    %v324 = vunpack.c.l.b16 %v303
    %v325 = vunpack.c.l.b16 %v304
    %v326 = vunpack.c.l.b16 %v305
    %v327 = vunpack.c.l.b16 %v306
    %v328 = vunpack.c.l.b16 %v307
    %v329 = vunpack.c.l.b16 %v308
    %v330 = vpack.c.b16 %v324, %v323
    %v331 = vpack.c.b16 %v326, %v325
    %v332 = vpack.c.b16 %v328, %v327
    %v333 = vpack.c.b16 %v329, %v329
    %vm337 = vcmask 408576
    %v339 = vsel %vm337, %v301, 0
    %vm341 = vcmask 1040384
    %v343 = vsel %vm341, %v333, 0
    %345 = vmatprep.subr.bf16.mxu0 0
    %346 = vmatpush1.bf16.msra.mxu0 %v330
    %347 = vmatprep.subr.bf16.mxu0 0
    %348 = vmatpush1.bf16.msra.mxu0 %v331
    %349 = vmatprep.subr.bf16.mxu0 0
    %350 = vmatpush1.bf16.msra.mxu0 %v332
    %351 = vmatprep.subr.bf16.mxu0 0
    %352 = vmatpush1.bf16.msra.mxu0 %v343
    %353 = vmatprep.subr.bf16.mxu0 0
    %354 = vmatpush1.bf16.msra.mxu0 0
    %355 = vmatprep.subr.bf16.mxu0 0
    %356 = vmatpush1.bf16.msra.mxu0 0
    %357 = vmatprep.subr.bf16.mxu0 0
    %358 = vmatpush1.bf16.msra.mxu0 0
    %359 = vmatprep.subr.bf16.mxu0 0
    %360 = vmatpush1.bf16.msra.mxu0 0
    %361 = vmatprep.subr.bf16.mxu0 0
    %362 = vmatpush1.bf16.msra.mxu0 0
    %363 = vmatprep.subr.bf16.mxu0 0
    %364 = vmatpush1.bf16.msra.mxu0 0
    %365 = vmatprep.subr.bf16.mxu0 0
    %366 = vmatpush1.bf16.msra.mxu0 0
    %367 = vmatprep.subr.bf16.mxu0 0
    %368 = vmatpush1.bf16.msra.mxu0 0
    %369 = vmatprep.subr.bf16.mxu0 0
    %370 = vmatpush1.bf16.msra.mxu0 0
    %371 = vmatprep.subr.bf16.mxu0 0
    %372 = vmatpush1.bf16.msra.mxu0 0
    %373 = vmatprep.subr.bf16.mxu0 0
    %374 = vmatpush1.bf16.msra.mxu0 0
    %375 = vmatprep.subr.bf16.mxu0 0
    %376 = vmatpush1.bf16.msra.mxu0 0
    %377 = vmatprep.mubr.bf16.mxu0 0
    %378 = vmatmul.mubr.bf16.gmra.mrb[0].mxu0 %v339
    %v379 = vpop.f32.mrb[0].mxu0
    %v380 = vadd.f32 %v314, %v379
    %v381 = vpop.f32.mrb[0].mxu0
    %v382 = vpop.f32.mrb[0].mxu0
    %v383 = vpop.f32.mrb[0].mxu0
    %384 = vdwg.mxu0
    %vm385 = vcmask 74752
    %v386 = vsel %vm385, %v380, -inf
    %387 = vmax.xlane.f32.xlu0 %v386
    %v388 = vpop.xlane.xlu0 %387
    %v389 = vsub.f32 %v380, %v388
    %v390 = vmul.f32 %v389, 1.442695
    %v391 = vpow.pop %v390
    %v392 = vsel %vm385, %v391, 0.0
    %393 = vadd.xlane.f32.xlu0 %v392
    %v394 = vpop.xlane.xlu0 %393
    %v395 = vrcp.pop %v394
    %v396 = vmul.f32 %v391, %v395
    %397 = vst.msk [vmem:[#allocation2] sm:$0x3] %vm385, %v396
    // Predicated region
    $region22: #{cnn_forward.5} parent=1 // pred_check
      _
    $region23: #{cnn_forward.5} parent=1 // pred_check_branch
      %399 = sbr.rel (0) target = $region25
    $region24: #{cnn_forward.5} parent=1 // pred_region
      %s401 = ssub.s32 32, 32
      %402 = vsyncadd [#allocation3], %s401
      %s404 = sshll.u32 [#allocation2], 4
      %s405 = int_to_ptr.vmem [resolvable:$true] %s404
      %407 = dma.vmem_to_hbm [thread:$0]  %s405, 32, %s5, [#allocation3]
    $region25: #{cnn_forward.5} parent=1 // pred_fallthru
      _
    // Predicated region
    $region26: #{cnn_forward.5} parent=1 // pred_check
      _
    $region27: #{cnn_forward.5} parent=1 // pred_check_branch
      %409 = sbr.rel (0) target = $region29
    $region28: #{cnn_forward.5} parent=1 // pred_region
      %410 = dma.done [#allocation3], 32
    $region29: #{cnn_forward.5} parent=1 // pred_fallthru
      _
    %411 = vsyncpa [#allocation3], 1

</llo_original>
